<compile_context>
chip_gen: v7x
topology: tpu7x:2x2x1
jax: 0.10.0
libtpu: 0.0.40
codegen_flags: <defaults>
</compile_context>

<pallas_src>
import functools

import jax
import jax.numpy as jnp
from jax.experimental import pallas as pl
from jax.experimental.pallas import tpu as pltpu

BN_EPS = 1e-5
LANE = 128
_ACC_BUDGET_BYTES = 512 * 1024      # target size of an f32 matmul-result tile


def _round_up(x, m):
    return (x + m - 1) // m * m


@functools.lru_cache(maxsize=None)
def _vmem_limit_bytes():
    """Generation-aware scoped-VMEM budget (~102 MiB on v5e/v6e, ~51 MiB on v7x)."""
    try:
        info = pltpu.get_tpu_info()
        for name in ("vmem_capacity_bytes", "vmem_size_bytes", "vmem_bytes"):
            cap = getattr(info, name, None)
            if cap:
                return int(cap) * 4 // 5
    except Exception:
        pass
    return 48 * 1024 * 1024          # conservative fallback that fits every gen


def _pick_m_tile(m, k, c_out, itemsize,
                 candidates=(2048, 1024, 512, 256, 128, 64, 32, 16, 8)):
    """Largest M tile that divides M, keeps the f32 result tile within the
    accumulator budget and keeps double-buffered IO tiles well inside VMEM.
    Prefers >= 2 grid steps so the BlockSpec pipeline actually overlaps."""
    acc_cap = max(8, _ACC_BUDGET_BYTES // (4 * c_out))
    vmem_cap = max(8, (_vmem_limit_bytes() // 3) // max(2 * itemsize * (k + c_out), 1))
    cap = min(acc_cap, vmem_cap)
    for want_pipeline in (True, False):
        for c in candidates:
            if c > cap:
                continue
            if m % c == 0 and (m // c >= 2 or not want_pipeline):
                return c
    for c in candidates:                       # over-budget fallback
        if m % c == 0:
            return c
    return m  # TODO(synk): ragged M would need masked tail handling.


def _pick_row_tile(h_img, w_img, c_out):
    """Row tile (in image rows) for the 3x3 conv: divides H, keeps the f32
    accumulator within budget, prefers sublane-aligned tiles and >= 2 tiles."""
    max_rows = max(w_img, _ACC_BUDGET_BYTES // (4 * c_out))
    best = None
    for t in range(1, h_img + 1):
        if h_img % t or t * w_img > max_rows:
            continue
        if h_img // t >= 2 and (t * w_img) % 8 == 0:
            best = t
    if best is None:
        for t in range(1, h_img + 1):
            if h_img % t == 0 and t * w_img <= max_rows:
                best = t
    return best if best is not None else h_img


# ----------------------------------------------------------------------------
# Kernel A: [optional bn-affine + relu on the input] -> 1x1 conv (matmul)
#           -> raw output + per-tile partial BN statistics.
# ----------------------------------------------------------------------------
def _matmul_stats_kernel(*refs, has_affine):
    if has_affine:
        x_ref, aff_ref, w_ref, y_ref, stats_ref = refs
    else:
        x_ref, w_ref, y_ref, stats_ref = refs

    x = x_ref[...]                                            # (TM, K)
    if has_affine:
        aff = aff_ref[...]                                    # (2, K) f32
        x = jnp.maximum(x.astype(jnp.float32) * aff[0:1, :] + aff[1:2, :], 0.0)
    y = jnp.dot(x.astype(w_ref.dtype), w_ref[...],
                preferred_element_type=jnp.float32)           # (TM, C) on MXU
    y_ref[...] = y.astype(y_ref.dtype)

    s = jnp.sum(y, axis=0, keepdims=True)                     # (1, C)
    ss = jnp.sum(y * y, axis=0, keepdims=True)                # (1, C)
    stats_ref[...] = jnp.concatenate([s, ss], axis=0)         # (2, C) partials


def _conv1x1(x2d, w, aff, out_dtype):
    m, k = x2d.shape
    c = w.shape[1]
    tm = _pick_m_tile(m, k, c, jnp.dtype(out_dtype).itemsize)
    nt = m // tm
    has_affine = aff is not None
    kernel = functools.partial(_matmul_stats_kernel, has_affine=has_affine)

    in_specs = [pl.BlockSpec((tm, k), lambda i: (i, 0))]
    args = [x2d]
    if has_affine:
        in_specs.append(pl.BlockSpec((2, k), lambda i: (0, 0)))
        args.append(aff)
    # TODO(synk): pipeline_mode=pl.Buffered(1) would single-buffer this
    # constant weight block; left at the default for portability.
    in_specs.append(pl.BlockSpec((k, c), lambda i: (0, 0)))
    args.append(w)

    itemsize_out = jnp.dtype(out_dtype).itemsize
    cost = pl.CostEstimate(
        flops=2 * m * k * c,
        transcendentals=0,
        bytes_accessed=int(x2d.size * x2d.dtype.itemsize
                           + w.size * w.dtype.itemsize
                           + m * c * itemsize_out + nt * 2 * c * 4))

    y, stats = pl.pallas_call(
        kernel,
        grid_spec=pltpu.PrefetchScalarGridSpec(
            num_scalar_prefetch=0,
            grid=(nt,),
            in_specs=in_specs,
            out_specs=(pl.BlockSpec((tm, c), lambda i: (i, 0)),
                       pl.BlockSpec((None, 2, c), lambda i: (i, 0, 0)))),
        out_shape=(jax.ShapeDtypeStruct((m, c), out_dtype),
                   jax.ShapeDtypeStruct((nt, 2, c), jnp.float32)),
        compiler_params=pltpu.CompilerParams(
            dimension_semantics=("parallel",),
            vmem_limit_bytes=_vmem_limit_bytes()),
        cost_estimate=cost,
    )(*args)
    return y, stats


# ----------------------------------------------------------------------------
# Kernel B: bn1 affine + relu fused with the 3x3 conv (stride 1, pad 1).
# Per row-tile: stage a (TH+2)-row halo into VMEM, then 3 MXU matmuls with
# K = 3*C (the dy taps stacked along the contraction dim), edge masks applied
# to the side-tap outputs.
# ----------------------------------------------------------------------------
def _conv3x3_stats_kernel(y1_ref, aff_ref, w_ref, y2_ref, stats_ref, hal_ref,
                          *, th, ht, w_img, c):
    j = pl.program_id(1)
    rows = th * w_img
    aff = aff_ref[...]                                        # (2, C) f32
    zrow = jnp.zeros((w_img, c), hal_ref.dtype)

    # hal layout (flattened rows): [W guard][th+2 halo rows][W guard].
    def stage(dst_off, src_row0, nrows):
        a = y1_ref[pl.ds(src_row0 * w_img, nrows * w_img), :].astype(jnp.float32)
        a = jnp.maximum(a * aff[0:1, :] + aff[1:2, :], 0.0)
        hal_ref[pl.ds(dst_off, nrows * w_img), :] = a.astype(hal_ref.dtype)

    # Guard rows: only read by the masked corner taps; keep them deterministic.
    hal_ref[0:w_img, :] = zrow
    hal_ref[(th + 3) * w_img:(th + 4) * w_img, :] = zrow

    stage(2 * w_img, j * th, th)                              # this tile's rows

    @pl.when(j == 0)
    def _():
        hal_ref[w_img:2 * w_img, :] = zrow                    # top image padding

    @pl.when(j > 0)
    def _():
        stage(w_img, j * th - 1, 1)                           # top halo row

    @pl.when(j == ht - 1)
    def _():
        hal_ref[(th + 2) * w_img:(th + 3) * w_img, :] = zrow  # bottom image padding

    @pl.when(j < ht - 1)
    def _():
        stage((th + 2) * w_img, j * th + th, 1)               # bottom halo row

    # ---- 3x3 conv: one K = 3*C matmul per kx (dy taps folded) --------------
    def lhs(dx):                                              # (rows, 3C), static offsets
        return jnp.concatenate(
            [hal_ref[pl.ds((1 + dy) * w_img + dx - 1, rows), :] for dy in range(3)],
            axis=1)

    acc = jnp.dot(lhs(1), w_ref[1], preferred_element_type=jnp.float32)
    out_l = jnp.dot(lhs(0), w_ref[0], preferred_element_type=jnp.float32)
    out_r = jnp.dot(lhs(2), w_ref[2], preferred_element_type=jnp.float32)

    # Column-edge handling on the OUTPUTS (2 selects of (rows, C) instead of
    # 6 input-side selects).  Row wrap / guard garbage only lands in rows that
    # these masks discard.
    xcol = jax.lax.broadcasted_iota(jnp.int32, (rows, c), 0) % w_img
    zero = jnp.zeros((rows, c), jnp.float32)
    acc = acc + jnp.where(xcol >= 1, out_l, zero) \
              + jnp.where(xcol <= w_img - 2, out_r, zero)

    y2_ref[...] = acc.astype(y2_ref.dtype)
    s = jnp.sum(acc, axis=0, keepdims=True)
    ss = jnp.sum(acc * acc, axis=0, keepdims=True)
    stats_ref[...] = jnp.concatenate([s, ss], axis=0)


def _conv3x3(y1_img, aff, w3c, n, h_img, w_img, out_dtype):
    c = w3c.shape[-1]
    th = _pick_row_tile(h_img, w_img, c)
    ht = h_img // th
    kernel = functools.partial(_conv3x3_stats_kernel,
                               th=th, ht=ht, w_img=w_img, c=c)
    itemsize_out = jnp.dtype(out_dtype).itemsize
    cost = pl.CostEstimate(
        flops=2 * n * h_img * w_img * 9 * c * c,
        transcendentals=0,
        bytes_accessed=int(y1_img.size * y1_img.dtype.itemsize
                           + w3c.size * w3c.dtype.itemsize
                           + n * h_img * w_img * c * itemsize_out))

    y2, stats = pl.pallas_call(
        kernel,
        grid_spec=pltpu.PrefetchScalarGridSpec(
            num_scalar_prefetch=0,
            grid=(n, ht),
            in_specs=[
                pl.BlockSpec((None, h_img * w_img, c), lambda i, j: (i, 0, 0)),
                pl.BlockSpec((2, c), lambda i, j: (0, 0)),
                pl.BlockSpec((3, 3 * c, c), lambda i, j: (0, 0, 0)),
            ],
            out_specs=(
                pl.BlockSpec((None, th * w_img, c), lambda i, j: (i, j, 0)),
                pl.BlockSpec((None, None, 2, c), lambda i, j: (i, j, 0, 0)),
            ),
            scratch_shapes=[pltpu.VMEM(((th + 4) * w_img, c), y1_img.dtype)]),
        out_shape=(jax.ShapeDtypeStruct((n, h_img * w_img, c), out_dtype),
                   jax.ShapeDtypeStruct((n, ht, 2, c), jnp.float32)),
        compiler_params=pltpu.CompilerParams(
            dimension_semantics=("parallel", "parallel"),
            vmem_limit_bytes=_vmem_limit_bytes()),
        cost_estimate=cost,
    )(y1_img, aff, w3c)
    return y2, stats


# ----------------------------------------------------------------------------
# Kernel C: bn3 affine + residual add + relu (elementwise, tiled over M).
# ----------------------------------------------------------------------------
def _bn_residual_relu_kernel(y_ref, aff_ref, res_ref, o_ref):
    aff = aff_ref[...]
    y = y_ref[...].astype(jnp.float32) * aff[0:1, :] + aff[1:2, :]
    y = y + res_ref[...].astype(jnp.float32)
    o_ref[...] = jnp.maximum(y, 0.0).astype(o_ref.dtype)


def _bn_residual_relu(y3, aff, res, out_dtype):
    m, c = y3.shape
    tm = _pick_m_tile(m, c, c, jnp.dtype(out_dtype).itemsize)
    return pl.pallas_call(
        _bn_residual_relu_kernel,
        grid_spec=pltpu.PrefetchScalarGridSpec(
            num_scalar_prefetch=0,
            grid=(m // tm,),
            in_specs=[pl.BlockSpec((tm, c), lambda i: (i, 0)),
                      pl.BlockSpec((2, c), lambda i: (0, 0)),
                      pl.BlockSpec((tm, c), lambda i: (i, 0))],
            out_specs=pl.BlockSpec((tm, c), lambda i: (i, 0))),
        out_shape=jax.ShapeDtypeStruct((m, c), out_dtype),
        compiler_params=pltpu.CompilerParams(
            dimension_semantics=("parallel",),
            vmem_limit_bytes=_vmem_limit_bytes()),
    )(y3, aff, res)


# ----------------------------------------------------------------------------
# Glue: reduce per-tile partial stats into per-channel BN (scale, shift).
# (Runs inside the jit, so it fuses into a single tiny XLA op.)
# ----------------------------------------------------------------------------
def _bn_scale_shift(stats, count, gamma, beta):
    s = jnp.sum(stats.reshape(-1, 2, stats.shape[-1]).astype(jnp.float32), axis=0)
    mean = s[0] / count
    var = s[1] / count - mean * mean          # biased (training-mode) variance
    scale = gamma * jax.lax.rsqrt(var + BN_EPS)
    shift = beta - mean * scale
    return jnp.stack([scale, shift], axis=0)  # (2, Cpad) f32


# ----------------------------------------------------------------------------
# Bottleneck forward (stride=1, downsample=None => in_channels == 4*out_channels)
# ----------------------------------------------------------------------------
@functools.partial(jax.jit, static_argnames=("compute_dtype",))
def bottleneck_forward(x_nchw, w1_t, w2_t, w3_t, bn_params,
                       compute_dtype=jnp.bfloat16):
    n, cin, h_img, w_img = x_nchw.shape
    c = w1_t.shape[0]
    c4 = 4 * c
    assert cin == c4, "no-downsample Bottleneck requires in_channels == 4*out_channels"
    g1, b1, g2, b2, g3, b3 = bn_params

    cin_p = _round_up(cin, LANE)
    c_p = _round_up(c, LANE)
    c4_p = _round_up(c4, LANE)
    m = n * h_img * w_img

    # NCHW -> NHWC -> channel pad -> compute dtype -> (M, Cin_p).
    x = jnp.transpose(x_nchw, (0, 2, 3, 1))
    x = jnp.pad(x, ((0, 0), (0, 0), (0, 0), (0, cin_p - cin)))
    x2d = x.reshape(m, cin_p).astype(compute_dtype)

    # PyTorch conv weights (OIHW) -> padded matmul layouts.
    w1 = jnp.pad(jnp.transpose(w1_t[:, :, 0, 0], (1, 0)),
                 ((0, cin_p - cin), (0, c_p - c))).astype(compute_dtype)
    # 3x3 weights: kx-major, with the 3 ky taps stacked along the contraction
    # dim -> (3, 3*C_p, C_p), so conv2 runs as 3 matmuls with K = 3*C_p.
    w2 = jnp.pad(jnp.transpose(w2_t, (2, 3, 1, 0)),           # (kh, kw, cin, cout)
                 ((0, 0), (0, 0), (0, c_p - c), (0, c_p - c)))
    w2 = jnp.transpose(w2, (1, 0, 2, 3)).reshape(3, 3 * c_p, c_p).astype(compute_dtype)
    w3 = jnp.pad(jnp.transpose(w3_t[:, :, 0, 0], (1, 0)),
                 ((0, c_p - c), (0, c4_p - c4))).astype(compute_dtype)

    g1p = jnp.pad(g1.astype(jnp.float32), (0, c_p - c))
    b1p = jnp.pad(b1.astype(jnp.float32), (0, c_p - c))
    g2p = jnp.pad(g2.astype(jnp.float32), (0, c_p - c))
    b2p = jnp.pad(b2.astype(jnp.float32), (0, c_p - c))
    g3p = jnp.pad(g3.astype(jnp.float32), (0, c4_p - c4))
    b3p = jnp.pad(b3.astype(jnp.float32), (0, c4_p - c4))

    # conv1 (1x1) + BN1 batch statistics.
    y1, st1 = _conv1x1(x2d, w1, None, compute_dtype)
    aff1 = _bn_scale_shift(st1, m, g1p, b1p)

    # bn1 affine + relu fused into conv2 (3x3) + BN2 statistics.
    y2, st2 = _conv3x3(y1.reshape(n, h_img * w_img, c_p), aff1, w2,
                       n, h_img, w_img, compute_dtype)
    aff2 = _bn_scale_shift(st2, m, g2p, b2p)

    # bn2 affine + relu fused into conv3 (1x1) + BN3 statistics.
    y3, st3 = _conv1x1(y2.reshape(m, c_p), w3, aff2, compute_dtype)
    aff3 = _bn_scale_shift(st3, m, g3p, b3p)

    # bn3 affine + residual + relu (output stays in compute_dtype).
    out2d = _bn_residual_relu(y3, aff3, x2d, compute_dtype)   # (M, C4p)

    out = out2d.reshape(n, h_img, w_img, c4_p)[..., :c4]
    return jnp.transpose(out, (0, 3, 1, 2))                   # back to NCHW


# ----------------------------------------------------------------------------
# Pure-JAX reference (same semantics via lax conv) for the numeric check.
# ----------------------------------------------------------------------------
def bottleneck_reference(x, w1_t, w2_t, w3_t, bn_params):
    g1, b1, g2, b2, g3, b3 = bn_params

    def conv(x, w, pad):
        return jax.lax.conv_general_dilated(
            x, w, (1, 1), [(pad, pad), (pad, pad)],
            dimension_numbers=("NCHW", "OIHW", "NCHW"))

    def bn(y, g, b):
        mean = jnp.mean(y, axis=(0, 2, 3), keepdims=True)
        var = jnp.mean((y - mean) ** 2, axis=(0, 2, 3), keepdims=True)
        return (y - mean) * jax.lax.rsqrt(var + BN_EPS) * g.reshape(1, -1, 1, 1) \
            + b.reshape(1, -1, 1, 1)

    out = jax.nn.relu(bn(conv(x, w1_t, 0), g1, b1))
    out = jax.nn.relu(bn(conv(out, w2_t, 1), g2, b2))
    out = bn(conv(out, w3_t, 0), g3, b3)
    return jax.nn.relu(out + x)


if __name__ == "__main__":
    key = jax.random.PRNGKey(0)
    n, h_img, w_img = 2, 16, 16
    out_channels = 4
    in_channels = 4 * out_channels      # residual path requires Cin == 4*C

    k1, k2, k3, kbn, kx = jax.random.split(key, 5)
    w1_t = 0.1 * jax.random.normal(k1, (out_channels, in_channels, 1, 1), jnp.float32)
    w2_t = 0.1 * jax.random.normal(k2, (out_channels, out_channels, 3, 3), jnp.float32)
    w3_t = 0.1 * jax.random.normal(k3, (4 * out_channels, out_channels, 1, 1), jnp.float32)

    def bn_init(k, ch):
        kg, kb = jax.random.split(k)
        return (1.0 + 0.1 * jax.random.normal(kg, (ch,), jnp.float32),
                0.1 * jax.random.normal(kb, (ch,), jnp.float32))

    kb1, kb2, kb3 = jax.random.split(kbn, 3)
    g1, b1 = bn_init(kb1, out_channels)
    g2, b2 = bn_init(kb2, out_channels)
    g3, b3 = bn_init(kb3, 4 * out_channels)
    bn_params = (g1, b1, g2, b2, g3, b3)

    x_nchw = jax.random.normal(kx, (n, in_channels, h_img, w_img), jnp.float32)

    ref = jax.block_until_ready(
        bottleneck_reference(x_nchw, w1_t, w2_t, w3_t, bn_params))

    # f32 path: tight numerical check of the kernel structure.
    out_f32 = jax.block_until_ready(
        bottleneck_forward(x_nchw, w1_t, w2_t, w3_t, bn_params,
                           compute_dtype=jnp.float32))
    assert out_f32.shape == (n, in_channels, h_img, w_img)
    err32 = float(jnp.max(jnp.abs(out_f32 - ref)))
    assert err32 < 2e-3, f"f32 max abs err {err32}"

    # bf16 path (default: halves HBM traffic / doubles MXU throughput).
    out_bf16 = jax.block_until_ready(
        bottleneck_forward(x_nchw, w1_t, w2_t, w3_t, bn_params,
                           compute_dtype=jnp.bfloat16))
    errbf = float(jnp.max(jnp.abs(out_bf16 - ref)))
    assert errbf < 2.5e-1, f"bf16 max abs err {errbf}"

    print("KERNEL_OK")
</pallas_src>

<mosaic_0001>
module attributes {stable_mosaic.version = 11 : i64} {
  func.func @_matmul_stats_kernel(%arg0: i32, %arg1: memref<256x128xf32, #tpu.memory_space<vmem>>, %arg2: memref<128x128xf32, #tpu.memory_space<vmem>>, %arg3: memref<256x128xf32, #tpu.memory_space<vmem>>, %arg4: memref<1x2x128xf32, #tpu.memory_space<vmem>>) attributes {dimension_semantics = [#tpu.dimension_semantics<parallel>], iteration_bounds = array<i64: 2>, scalar_prefetch = 0 : i64, scratch_operands = 0 : i64, tpu.core_type = #tpu.core_type<tc>, window_params = [{transform_indices = @transform_0, window_bounds = array<i64: 256, 128>}, {pipeline_mode = #tpu.pipeline_mode<synchronous>, transform_indices = @transform_1, window_bounds = array<i64: 128, 128>}, {transform_indices = @transform_2, window_bounds = array<i64: 256, 128>}, {transform_indices = @transform_3, window_bounds = array<i64: 1, 2, 128>}]} {
    %c0 = arith.constant 0 : index
    %c0_0 = arith.constant 0 : index
    %0 = vector.load %arg1[%c0, %c0_0] : memref<256x128xf32, #tpu.memory_space<vmem>>, vector<256x128xf32>
    %c0_1 = arith.constant 0 : index
    %c0_2 = arith.constant 0 : index
    %1 = vector.load %arg2[%c0_1, %c0_2] : memref<128x128xf32, #tpu.memory_space<vmem>>, vector<128x128xf32>
    %cst = arith.constant dense<0.000000e+00> : vector<256x128xf32>
    %2 = tpu.matmul %0, %1, %cst {dimension_numbers = #tpu.dot_dimension_numbers<[1], [0], [0], [1], [0, 0, 1, 1], [], []>} : vector<256x128xf32>, vector<128x128xf32>, vector<256x128xf32> -> vector<256x128xf32>
    %c0_3 = arith.constant 0 : index
    %c0_4 = arith.constant 0 : index
    %3 = vector.load %arg3[%c0_3, %c0_4] : memref<256x128xf32, #tpu.memory_space<vmem>>, vector<256x128xf32>
    tpu.vector_store %arg3[%c0_3, %c0_4], %2 {strides = array<i32>} : memref<256x128xf32, #tpu.memory_space<vmem>>, vector<256x128xf32>,
    %cst_5 = arith.constant dense<0.000000e+00> : vector<128xf32>
    %4 = vector.multi_reduction <add>, %2, %cst_5 [0] : vector<256x128xf32> to vector<128xf32>
    %5 = vector.shape_cast %4 : vector<128xf32> to vector<1x128xf32>
    %6 = arith.mulf %2, %2 : vector<256x128xf32>
    %cst_6 = arith.constant dense<0.000000e+00> : vector<128xf32>
    %7 = vector.multi_reduction <add>, %6, %cst_6 [0] : vector<256x128xf32> to vector<128xf32>
    %8 = vector.shape_cast %7 : vector<128xf32> to vector<1x128xf32>
    %9 = tpu.concatenate %5, %8 in 0 : vector<1x128xf32>, vector<1x128xf32> -> vector<2x128xf32>
    %c0_7 = arith.constant 0 : index
    %c0_8 = arith.constant 0 : index
    %c0_9 = arith.constant 0 : index
    %10 = vector.load %arg4[%c0_7, %c0_8, %c0_9] : memref<1x2x128xf32, #tpu.memory_space<vmem>>, vector<1x2x128xf32>
    %11 = vector.shape_cast %10 : vector<1x2x128xf32> to vector<2x128xf32>
    %12 = vector.shape_cast %9 : vector<2x128xf32> to vector<1x2x128xf32>
    tpu.vector_store %arg4[%c0_7, %c0_8, %c0_9], %12 {strides = array<i32>} : memref<1x2x128xf32, #tpu.memory_space<vmem>>, vector<1x2x128xf32>,
    return
  }
  func.func @transform_0(%arg0: i32) -> (i32, i32) {
    %c0_i32 = arith.constant 0 : i32
    %c0_i32_0 = arith.constant 0 : i32
    return %arg0, %c0_i32 : i32, i32
  }
  func.func @transform_1(%arg0: i32) -> (i32, i32) {
    %c0_i32 = arith.constant 0 : i32
    %c0_i32_0 = arith.constant 0 : i32
    %c0_i32_1 = arith.constant 0 : i32
    return %c0_i32, %c0_i32_0 : i32, i32
  }
  func.func @transform_2(%arg0: i32) -> (i32, i32) {
    %c0_i32 = arith.constant 0 : i32
    %c0_i32_0 = arith.constant 0 : i32
    return %arg0, %c0_i32 : i32, i32
  }
  func.func @transform_3(%arg0: i32) -> (i32, i32, i32) {
    %c0_i32 = arith.constant 0 : i32
    %c0_i32_0 = arith.constant 0 : i32
    %c0_i32_1 = arith.constant 0 : i32
    return %arg0, %c0_i32, %c0_i32_0 : i32, i32, i32
  }
}

module attributes {stable_mosaic.version = 11 : i64} {
  func.func @_conv3x3_stats_kernel(%arg0: i32, %arg1: i32, %arg2: memref<1x256x128xf32, #tpu.memory_space<vmem>>, %arg3: memref<2x128xf32, #tpu.memory_space<vmem>>, %arg4: memref<3x384x128xf32, #tpu.memory_space<vmem>>, %arg5: memref<1x128x128xf32, #tpu.memory_space<vmem>>, %arg6: memref<1x1x2x128xf32, #tpu.memory_space<vmem>>, %arg7: memref<192x128xf32, #tpu.memory_space<vmem>>) attributes {dimension_semantics = [#tpu.dimension_semantics<parallel>, #tpu.dimension_semantics<parallel>], iteration_bounds = array<i64: 2, 2>, scalar_prefetch = 0 : i64, scratch_operands = 1 : i64, tpu.core_type = #tpu.core_type<tc>, window_params = [{transform_indices = @transform_0, window_bounds = array<i64: 1, 256, 128>}, {pipeline_mode = #tpu.pipeline_mode<synchronous>, transform_indices = @transform_1, window_bounds = array<i64: 2, 128>}, {pipeline_mode = #tpu.pipeline_mode<synchronous>, transform_indices = @transform_2, window_bounds = array<i64: 3, 384, 128>}, {transform_indices = @transform_3, window_bounds = array<i64: 1, 128, 128>}, {transform_indices = @transform_4, window_bounds = array<i64: 1, 1, 2, 128>}]} {
    %c0 = arith.constant 0 : index
    %c0_0 = arith.constant 0 : index
    %0 = vector.load %arg3[%c0, %c0_0] : memref<2x128xf32, #tpu.memory_space<vmem>>, vector<2x128xf32>
    %cst = arith.constant 0.000000e+00 : f32
    %1 = vector.broadcast %cst : f32 to vector<16x128xf32>
    %c0_1 = arith.constant 0 : index
    %c0_2 = arith.constant 0 : index
    %2 = vector.load %arg7[%c0_1, %c0_2] : memref<192x128xf32, #tpu.memory_space<vmem>>, vector<16x128xf32>
    tpu.vector_store %arg7[%c0_1, %c0_2], %1 {strides = array<i32>} : memref<192x128xf32, #tpu.memory_space<vmem>>, vector<16x128xf32>,
    %c176 = arith.constant 176 : index
    %c0_3 = arith.constant 0 : index
    %3 = vector.load %arg7[%c176, %c0_3] : memref<192x128xf32, #tpu.memory_space<vmem>>, vector<16x128xf32>
    tpu.vector_store %arg7[%c176, %c0_3], %1 {strides = array<i32>} : memref<192x128xf32, #tpu.memory_space<vmem>>, vector<16x128xf32>,
    %c8_i32 = arith.constant 8 : i32
    %4 = arith.muli %arg1, %c8_i32 : i32
    %c16_i32 = arith.constant 16 : i32
    %5 = arith.muli %4, %c16_i32 : i32
    %c0_4 = arith.constant 0 : index
    %6 = arith.index_cast %5 : i32 to index
    %c0_5 = arith.constant 0 : index
    %7 = vector.load %arg2[%c0_4, %6, %c0_5] : memref<1x256x128xf32, #tpu.memory_space<vmem>>, vector<1x128x128xf32>
    %8 = vector.shape_cast %7 : vector<1x128x128xf32> to vector<128x128xf32>
    %9 = vector.extract_strided_slice %0 {offsets = [0, 0], sizes = [1, 128], strides = [1, 1]} : vector<2x128xf32> to vector<1x128xf32>
    %10 = vector.broadcast %9 : vector<1x128xf32> to vector<128x128xf32>
    %11 = arith.mulf %8, %10 : vector<128x128xf32>
    %12 = vector.extract_strided_slice %0 {offsets = [1, 0], sizes = [1, 128], strides = [1, 1]} : vector<2x128xf32> to vector<1x128xf32>
    %13 = vector.broadcast %12 : vector<1x128xf32> to vector<128x128xf32>
    %14 = arith.addf %11, %13 : vector<128x128xf32>
    %cst_6 = arith.constant 0.000000e+00 : f32
    %15 = vector.broadcast %cst_6 : f32 to vector<128x128xf32>
    %16 = arith.maximumf %14, %15 : vector<128x128xf32>
    %c32 = arith.constant 32 : index
    %c0_7 = arith.constant 0 : index
    %17 = vector.load %arg7[%c32, %c0_7] : memref<192x128xf32, #tpu.memory_space<vmem>>, vector<128x128xf32>
    tpu.vector_store %arg7[%c32, %c0_7], %16 {strides = array<i32>} : memref<192x128xf32, #tpu.memory_space<vmem>>, vector<128x128xf32>,
    %c0_i32 = arith.constant 0 : i32
    %18 = arith.cmpi eq, %arg1, %c0_i32 : i32
    %19 = arith.extui %18 : i1 to i32
    %c0_i32_8 = arith.constant 0 : i32
    %20 = arith.cmpi ne, %19, %c0_i32_8 : i32
    scf.if %20 {
      %c16_51 = arith.constant 16 : index
      %c0_52 = arith.constant 0 : index
      %89 = vector.load %arg7[%c16_51, %c0_52] : memref<192x128xf32, #tpu.memory_space<vmem>>, vector<16x128xf32>
      tpu.vector_store %arg7[%c16_51, %c0_52], %1 {strides = array<i32>} : memref<192x128xf32, #tpu.memory_space<vmem>>, vector<16x128xf32>,
    } else {
    }
    %c0_i32_9 = arith.constant 0 : i32
    %21 = arith.cmpi sgt, %arg1, %c0_i32_9 : i32
    %22 = arith.extui %21 : i1 to i32
    %c0_i32_10 = arith.constant 0 : i32
    %23 = arith.cmpi ne, %22, %c0_i32_10 : i32
    scf.if %23 {
      %c8_i32_51 = arith.constant 8 : i32
      %89 = arith.muli %arg1, %c8_i32_51 : i32
      %c1_i32_52 = arith.constant 1 : i32
      %90 = arith.subi %89, %c1_i32_52 : i32
      %c16_i32_53 = arith.constant 16 : i32
      %91 = arith.muli %90, %c16_i32_53 : i32
      %c0_54 = arith.constant 0 : index
      %92 = arith.index_cast %91 : i32 to index
      %c0_55 = arith.constant 0 : index
      %93 = vector.load %arg2[%c0_54, %92, %c0_55] : memref<1x256x128xf32, #tpu.memory_space<vmem>>, vector<1x16x128xf32>
      %94 = vector.shape_cast %93 : vector<1x16x128xf32> to vector<16x128xf32>
      %95 = vector.extract_strided_slice %0 {offsets = [0, 0], sizes = [1, 128], strides = [1, 1]} : vector<2x128xf32> to vector<1x128xf32>
      %96 = vector.broadcast %95 : vector<1x128xf32> to vector<16x128xf32>
      %97 = arith.mulf %94, %96 : vector<16x128xf32>
      %98 = vector.extract_strided_slice %0 {offsets = [1, 0], sizes = [1, 128], strides = [1, 1]} : vector<2x128xf32> to vector<1x128xf32>
      %99 = vector.broadcast %98 : vector<1x128xf32> to vector<16x128xf32>
      %100 = arith.addf %97, %99 : vector<16x128xf32>
      %cst_56 = arith.constant 0.000000e+00 : f32
      %101 = vector.broadcast %cst_56 : f32 to vector<16x128xf32>
      %102 = arith.maximumf %100, %101 : vector<16x128xf32>
      %c16_57 = arith.constant 16 : index
      %c0_58 = arith.constant 0 : index
      %103 = vector.load %arg7[%c16_57, %c0_58] : memref<192x128xf32, #tpu.memory_space<vmem>>, vector<16x128xf32>
      tpu.vector_store %arg7[%c16_57, %c0_58], %102 {strides = array<i32>} : memref<192x128xf32, #tpu.memory_space<vmem>>, vector<16x128xf32>,
    } else {
    }
    %c1_i32 = arith.constant 1 : i32
    %24 = arith.cmpi eq, %arg1, %c1_i32 : i32
    %25 = arith.extui %24 : i1 to i32
    %c0_i32_11 = arith.constant 0 : i32
    %26 = arith.cmpi ne, %25, %c0_i32_11 : i32
    scf.if %26 {
      %c160 = arith.constant 160 : index
      %c0_51 = arith.constant 0 : index
      %89 = vector.load %arg7[%c160, %c0_51] : memref<192x128xf32, #tpu.memory_space<vmem>>, vector<16x128xf32>
      tpu.vector_store %arg7[%c160, %c0_51], %1 {strides = array<i32>} : memref<192x128xf32, #tpu.memory_space<vmem>>, vector<16x128xf32>,
    } else {
    }
    %c1_i32_12 = arith.constant 1 : i32
    %27 = arith.cmpi slt, %arg1, %c1_i32_12 : i32
    %28 = arith.extui %27 : i1 to i32
    %c0_i32_13 = arith.constant 0 : i32
    %29 = arith.cmpi ne, %28, %c0_i32_13 : i32
    scf.if %29 {
      %c8_i32_51 = arith.constant 8 : i32
      %89 = arith.muli %arg1, %c8_i32_51 : i32
      %c8_i32_52 = arith.constant 8 : i32
      %90 = arith.addi %89, %c8_i32_52 : i32
      %c16_i32_53 = arith.constant 16 : i32
      %91 = arith.muli %90, %c16_i32_53 : i32
      %c0_54 = arith.constant 0 : index
      %92 = arith.index_cast %91 : i32 to index
      %c0_55 = arith.constant 0 : index
      %93 = vector.load %arg2[%c0_54, %92, %c0_55] : memref<1x256x128xf32, #tpu.memory_space<vmem>>, vector<1x16x128xf32>
      %94 = vector.shape_cast %93 : vector<1x16x128xf32> to vector<16x128xf32>
      %95 = vector.extract_strided_slice %0 {offsets = [0, 0], sizes = [1, 128], strides = [1, 1]} : vector<2x128xf32> to vector<1x128xf32>
      %96 = vector.broadcast %95 : vector<1x128xf32> to vector<16x128xf32>
      %97 = arith.mulf %94, %96 : vector<16x128xf32>
      %98 = vector.extract_strided_slice %0 {offsets = [1, 0], sizes = [1, 128], strides = [1, 1]} : vector<2x128xf32> to vector<1x128xf32>
      %99 = vector.broadcast %98 : vector<1x128xf32> to vector<16x128xf32>
      %100 = arith.addf %97, %99 : vector<16x128xf32>
      %cst_56 = arith.constant 0.000000e+00 : f32
      %101 = vector.broadcast %cst_56 : f32 to vector<16x128xf32>
      %102 = arith.maximumf %100, %101 : vector<16x128xf32>
      %c160 = arith.constant 160 : index
      %c0_57 = arith.constant 0 : index
      %103 = vector.load %arg7[%c160, %c0_57] : memref<192x128xf32, #tpu.memory_space<vmem>>, vector<16x128xf32>
      tpu.vector_store %arg7[%c160, %c0_57], %102 {strides = array<i32>} : memref<192x128xf32, #tpu.memory_space<vmem>>, vector<16x128xf32>,
    } else {
    }
    %c16 = arith.constant 16 : index
    %c0_14 = arith.constant 0 : index
    %30 = vector.load %arg7[%c16, %c0_14] : memref<192x128xf32, #tpu.memory_space<vmem>>, vector<128x128xf32>
    %c32_15 = arith.constant 32 : index
    %c0_16 = arith.constant 0 : index
    %31 = vector.load %arg7[%c32_15, %c0_16] : memref<192x128xf32, #tpu.memory_space<vmem>>, vector<128x128xf32>
    %c48 = arith.constant 48 : index
    %c0_17 = arith.constant 0 : index
    %32 = vector.load %arg7[%c48, %c0_17] : memref<192x128xf32, #tpu.memory_space<vmem>>, vector<128x128xf32>
    %33 = tpu.concatenate %30, %31, %32 in 1 : vector<128x128xf32>, vector<128x128xf32>, vector<128x128xf32> -> vector<128x384xf32>
    %c1 = arith.constant 1 : index
    %c0_18 = arith.constant 0 : index
    %c0_19 = arith.constant 0 : index
    %34 = vector.load %arg4[%c1, %c0_18, %c0_19] : memref<3x384x128xf32, #tpu.memory_space<vmem>>, vector<1x384x128xf32>
    %35 = vector.shape_cast %34 : vector<1x384x128xf32> to vector<384x128xf32>
    %cst_20 = arith.constant dense<0.000000e+00> : vector<128x128xf32>
    %36 = tpu.matmul %33, %35, %cst_20 {dimension_numbers = #tpu.dot_dimension_numbers<[1], [0], [0], [1], [0, 0, 1, 1], [], []>} : vector<128x384xf32>, vector<384x128xf32>, vector<128x128xf32> -> vector<128x128xf32>
    %c15 = arith.constant 15 : index
    %c0_21 = arith.constant 0 : index
    %37 = vector.load %arg7[%c15, %c0_21] : memref<192x128xf32, #tpu.memory_space<vmem>>, vector<128x128xf32>
    %c31 = arith.constant 31 : index
    %c0_22 = arith.constant 0 : index
    %38 = vector.load %arg7[%c31, %c0_22] : memref<192x128xf32, #tpu.memory_space<vmem>>, vector<128x128xf32>
    %c47 = arith.constant 47 : index
    %c0_23 = arith.constant 0 : index
    %39 = vector.load %arg7[%c47, %c0_23] : memref<192x128xf32, #tpu.memory_space<vmem>>, vector<128x128xf32>
    %40 = tpu.concatenate %37, %38, %39 in 1 : vector<128x128xf32>, vector<128x128xf32>, vector<128x128xf32> -> vector<128x384xf32>
    %c0_24 = arith.constant 0 : index
    %c0_25 = arith.constant 0 : index
    %c0_26 = arith.constant 0 : index
    %41 = vector.load %arg4[%c0_24, %c0_25, %c0_26] : memref<3x384x128xf32, #tpu.memory_space<vmem>>, vector<1x384x128xf32>
    %42 = vector.shape_cast %41 : vector<1x384x128xf32> to vector<384x128xf32>
    %cst_27 = arith.constant dense<0.000000e+00> : vector<128x128xf32>
    %43 = tpu.matmul %40, %42, %cst_27 {dimension_numbers = #tpu.dot_dimension_numbers<[1], [0], [0], [1], [0, 0, 1, 1], [], []>} : vector<128x384xf32>, vector<384x128xf32>, vector<128x128xf32> -> vector<128x128xf32>
    %c17 = arith.constant 17 : index
    %c0_28 = arith.constant 0 : index
    %44 = vector.load %arg7[%c17, %c0_28] : memref<192x128xf32, #tpu.memory_space<vmem>>, vector<128x128xf32>
    %c33 = arith.constant 33 : index
    %c0_29 = arith.constant 0 : index
    %45 = vector.load %arg7[%c33, %c0_29] : memref<192x128xf32, #tpu.memory_space<vmem>>, vector<128x128xf32>
    %c49 = arith.constant 49 : index
    %c0_30 = arith.constant 0 : index
    %46 = vector.load %arg7[%c49, %c0_30] : memref<192x128xf32, #tpu.memory_space<vmem>>, vector<128x128xf32>
    %47 = tpu.concatenate %44, %45, %46 in 1 : vector<128x128xf32>, vector<128x128xf32>, vector<128x128xf32> -> vector<128x384xf32>
    %c2 = arith.constant 2 : index
    %c0_31 = arith.constant 0 : index
    %c0_32 = arith.constant 0 : index
    %48 = vector.load %arg4[%c2, %c0_31, %c0_32] : memref<3x384x128xf32, #tpu.memory_space<vmem>>, vector<1x384x128xf32>
    %49 = vector.shape_cast %48 : vector<1x384x128xf32> to vector<384x128xf32>
    %cst_33 = arith.constant dense<0.000000e+00> : vector<128x128xf32>
    %50 = tpu.matmul %47, %49, %cst_33 {dimension_numbers = #tpu.dot_dimension_numbers<[1], [0], [0], [1], [0, 0, 1, 1], [], []>} : vector<128x384xf32>, vector<384x128xf32>, vector<128x128xf32> -> vector<128x128xf32>
    %51 = tpu.iota {dimensions = array<i32: 0>} : vector<128x128xi32>
    %c16_i32_34 = arith.constant 16 : i32
    %c0_i32_35 = arith.constant 0 : i32
    %52 = arith.cmpi eq, %c16_i32_34, %c0_i32_35 : i32
    %c1_i32_36 = arith.constant 1 : i32
    %53 = arith.select %52, %c1_i32_36, %c16_i32_34 : i32
    %54 = vector.broadcast %53 : i32 to vector<128x128xi32>
    %55 = arith.remsi %51, %54 : vector<128x128xi32>
    %c0_i32_37 = arith.constant 0 : i32
    %56 = vector.broadcast %c0_i32_37 : i32 to vector<128x128xi32>
    %57 = arith.cmpi ne, %55, %56 : vector<128x128xi32>
    %c0_i32_38 = arith.constant 0 : i32
    %58 = vector.broadcast %c0_i32_38 : i32 to vector<128x128xi32>
    %59 = arith.cmpi slt, %55, %58 : vector<128x128xi32>
    %c0_i32_39 = arith.constant 0 : i32
    %60 = arith.cmpi slt, %53, %c0_i32_39 : i32
    %61 = vector.broadcast %60 : i1 to vector<128x128xi1>
    %62 = vector.broadcast %61 : vector<128x128xi1> to vector<128x128xi1>
    %63 = arith.xori %59, %62 : vector<128x128xi1>
    %64 = arith.andi %63, %57 : vector<128x128xi1>
    %65 = vector.broadcast %53 : i32 to vector<128x128xi32>
    %66 = arith.addi %55, %65 : vector<128x128xi32>
    %67 = arith.select %64, %66, %55 : vector<128x128xi1>, vector<128x128xi32>
    %cst_40 = arith.constant 0.000000e+00 : f32
    %68 = vector.broadcast %cst_40 : f32 to vector<128x128xf32>
    %c1_i32_41 = arith.constant 1 : i32
    %69 = vector.broadcast %c1_i32_41 : i32 to vector<128x128xi32>
    %70 = arith.cmpi sge, %67, %69 : vector<128x128xi32>
    %71 = arith.select %70, %43, %68 : vector<128x128xi1>, vector<128x128xf32>
    %72 = arith.addf %36, %71 : vector<128x128xf32>
    %c14_i32 = arith.constant 14 : i32
    %73 = vector.broadcast %c14_i32 : i32 to vector<128x128xi32>
    %74 = arith.cmpi sle, %67, %73 : vector<128x128xi32>
    %75 = arith.select %74, %50, %68 : vector<128x128xi1>, vector<128x128xf32>
    %76 = arith.addf %72, %75 : vector<128x128xf32>
    %c0_42 = arith.constant 0 : index
    %c0_43 = arith.constant 0 : index
    %c0_44 = arith.constant 0 : index
    %77 = vector.load %arg5[%c0_42, %c0_43, %c0_44] : memref<1x128x128xf32, #tpu.memory_space<vmem>>, vector<1x128x128xf32>
    %78 = vector.shape_cast %77 : vector<1x128x128xf32> to vector<128x128xf32>
    %79 = vector.shape_cast %76 : vector<128x128xf32> to vector<1x128x128xf32>
    tpu.vector_store %arg5[%c0_42, %c0_43, %c0_44], %79 {strides = array<i32>} : memref<1x128x128xf32, #tpu.memory_space<vmem>>, vector<1x128x128xf32>,
    %cst_45 = arith.constant dense<0.000000e+00> : vector<128xf32>
    %80 = vector.multi_reduction <add>, %76, %cst_45 [0] : vector<128x128xf32> to vector<128xf32>
    %81 = vector.shape_cast %80 : vector<128xf32> to vector<1x128xf32>
    %82 = arith.mulf %76, %76 : vector<128x128xf32>
    %cst_46 = arith.constant dense<0.000000e+00> : vector<128xf32>
    %83 = vector.multi_reduction <add>, %82, %cst_46 [0] : vector<128x128xf32> to vector<128xf32>
    %84 = vector.shape_cast %83 : vector<128xf32> to vector<1x128xf32>
    %85 = tpu.concatenate %81, %84 in 0 : vector<1x128xf32>, vector<1x128xf32> -> vector<2x128xf32>
    %c0_47 = arith.constant 0 : index
    %c0_48 = arith.constant 0 : index
    %c0_49 = arith.constant 0 : index
    %c0_50 = arith.constant 0 : index
    %86 = vector.load %arg6[%c0_47, %c0_48, %c0_49, %c0_50] : memref<1x1x2x128xf32, #tpu.memory_space<vmem>>, vector<1x1x2x128xf32>
    %87 = vector.shape_cast %86 : vector<1x1x2x128xf32> to vector<2x128xf32>
    %88 = vector.shape_cast %85 : vector<2x128xf32> to vector<1x1x2x128xf32>
    tpu.vector_store %arg6[%c0_47, %c0_48, %c0_49, %c0_50], %88 {strides = array<i32>} : memref<1x1x2x128xf32, #tpu.memory_space<vmem>>, vector<1x1x2x128xf32>,
    return
  }
  func.func @transform_0(%arg0: i32, %arg1: i32) -> (i32, i32, i32) {
    %c0_i32 = arith.constant 0 : i32
    %c0_i32_0 = arith.constant 0 : i32
    %c0_i32_1 = arith.constant 0 : i32
    return %arg0, %c0_i32, %c0_i32_0 : i32, i32, i32
  }
  func.func @transform_1(%arg0: i32, %arg1: i32) -> (i32, i32) {
    %c0_i32 = arith.constant 0 : i32
    %c0_i32_0 = arith.constant 0 : i32
    %c0_i32_1 = arith.constant 0 : i32
    return %c0_i32, %c0_i32_0 : i32, i32
  }
  func.func @transform_2(%arg0: i32, %arg1: i32) -> (i32, i32, i32) {
    %c0_i32 = arith.constant 0 : i32
    %c0_i32_0 = arith.constant 0 : i32
    %c0_i32_1 = arith.constant 0 : i32
    %c0_i32_2 = arith.constant 0 : i32
    return %c0_i32, %c0_i32_0, %c0_i32_1 : i32, i32, i32
  }
  func.func @transform_3(%arg0: i32, %arg1: i32) -> (i32, i32, i32) {
    %c0_i32 = arith.constant 0 : i32
    %c0_i32_0 = arith.constant 0 : i32
    return %arg0, %arg1, %c0_i32 : i32, i32, i32
  }
  func.func @transform_4(%arg0: i32, %arg1: i32) -> (i32, i32, i32, i32) {
    %c0_i32 = arith.constant 0 : i32
    %c0_i32_0 = arith.constant 0 : i32
    %c0_i32_1 = arith.constant 0 : i32
    return %arg0, %arg1, %c0_i32, %c0_i32_0 : i32, i32, i32, i32
  }
}

module attributes {stable_mosaic.version = 11 : i64} {
  func.func @_matmul_stats_kernel(%arg0: i32, %arg1: memref<256x128xf32, #tpu.memory_space<vmem>>, %arg2: memref<2x128xf32, #tpu.memory_space<vmem>>, %arg3: memref<128x128xf32, #tpu.memory_space<vmem>>, %arg4: memref<256x128xf32, #tpu.memory_space<vmem>>, %arg5: memref<1x2x128xf32, #tpu.memory_space<vmem>>) attributes {dimension_semantics = [#tpu.dimension_semantics<parallel>], iteration_bounds = array<i64: 2>, scalar_prefetch = 0 : i64, scratch_operands = 0 : i64, tpu.core_type = #tpu.core_type<tc>, window_params = [{transform_indices = @transform_0, window_bounds = array<i64: 256, 128>}, {pipeline_mode = #tpu.pipeline_mode<synchronous>, transform_indices = @transform_1, window_bounds = array<i64: 2, 128>}, {pipeline_mode = #tpu.pipeline_mode<synchronous>, transform_indices = @transform_2, window_bounds = array<i64: 128, 128>}, {transform_indices = @transform_3, window_bounds = array<i64: 256, 128>}, {transform_indices = @transform_4, window_bounds = array<i64: 1, 2, 128>}]} {
    %c0 = arith.constant 0 : index
    %c0_0 = arith.constant 0 : index
    %0 = vector.load %arg1[%c0, %c0_0] : memref<256x128xf32, #tpu.memory_space<vmem>>, vector<256x128xf32>
    %c0_1 = arith.constant 0 : index
    %c0_2 = arith.constant 0 : index
    %1 = vector.load %arg2[%c0_1, %c0_2] : memref<2x128xf32, #tpu.memory_space<vmem>>, vector<2x128xf32>
    %2 = vector.extract_strided_slice %1 {offsets = [0, 0], sizes = [1, 128], strides = [1, 1]} : vector<2x128xf32> to vector<1x128xf32>
    %3 = vector.broadcast %2 : vector<1x128xf32> to vector<256x128xf32>
    %4 = arith.mulf %0, %3 : vector<256x128xf32>
    %5 = vector.extract_strided_slice %1 {offsets = [1, 0], sizes = [1, 128], strides = [1, 1]} : vector<2x128xf32> to vector<1x128xf32>
    %6 = vector.broadcast %5 : vector<1x128xf32> to vector<256x128xf32>
    %7 = arith.addf %4, %6 : vector<256x128xf32>
    %cst = arith.constant 0.000000e+00 : f32
    %8 = vector.broadcast %cst : f32 to vector<256x128xf32>
    %9 = arith.maximumf %7, %8 : vector<256x128xf32>
    %c0_3 = arith.constant 0 : index
    %c0_4 = arith.constant 0 : index
    %10 = vector.load %arg3[%c0_3, %c0_4] : memref<128x128xf32, #tpu.memory_space<vmem>>, vector<128x128xf32>
    %cst_5 = arith.constant dense<0.000000e+00> : vector<256x128xf32>
    %11 = tpu.matmul %9, %10, %cst_5 {dimension_numbers = #tpu.dot_dimension_numbers<[1], [0], [0], [1], [0, 0, 1, 1], [], []>} : vector<256x128xf32>, vector<128x128xf32>, vector<256x128xf32> -> vector<256x128xf32>
    %c0_6 = arith.constant 0 : index
    %c0_7 = arith.constant 0 : index
    %12 = vector.load %arg4[%c0_6, %c0_7] : memref<256x128xf32, #tpu.memory_space<vmem>>, vector<256x128xf32>
    tpu.vector_store %arg4[%c0_6, %c0_7], %11 {strides = array<i32>} : memref<256x128xf32, #tpu.memory_space<vmem>>, vector<256x128xf32>,
    %cst_8 = arith.constant dense<0.000000e+00> : vector<128xf32>
    %13 = vector.multi_reduction <add>, %11, %cst_8 [0] : vector<256x128xf32> to vector<128xf32>
    %14 = vector.shape_cast %13 : vector<128xf32> to vector<1x128xf32>
    %15 = arith.mulf %11, %11 : vector<256x128xf32>
    %cst_9 = arith.constant dense<0.000000e+00> : vector<128xf32>
    %16 = vector.multi_reduction <add>, %15, %cst_9 [0] : vector<256x128xf32> to vector<128xf32>
    %17 = vector.shape_cast %16 : vector<128xf32> to vector<1x128xf32>
    %18 = tpu.concatenate %14, %17 in 0 : vector<1x128xf32>, vector<1x128xf32> -> vector<2x128xf32>
    %c0_10 = arith.constant 0 : index
    %c0_11 = arith.constant 0 : index
    %c0_12 = arith.constant 0 : index
    %19 = vector.load %arg5[%c0_10, %c0_11, %c0_12] : memref<1x2x128xf32, #tpu.memory_space<vmem>>, vector<1x2x128xf32>
    %20 = vector.shape_cast %19 : vector<1x2x128xf32> to vector<2x128xf32>
    %21 = vector.shape_cast %18 : vector<2x128xf32> to vector<1x2x128xf32>
    tpu.vector_store %arg5[%c0_10, %c0_11, %c0_12], %21 {strides = array<i32>} : memref<1x2x128xf32, #tpu.memory_space<vmem>>, vector<1x2x128xf32>,
    return
  }
  func.func @transform_0(%arg0: i32) -> (i32, i32) {
    %c0_i32 = arith.constant 0 : i32
    %c0_i32_0 = arith.constant 0 : i32
    return %arg0, %c0_i32 : i32, i32
  }
  func.func @transform_1(%arg0: i32) -> (i32, i32) {
    %c0_i32 = arith.constant 0 : i32
    %c0_i32_0 = arith.constant 0 : i32
    %c0_i32_1 = arith.constant 0 : i32
    return %c0_i32, %c0_i32_0 : i32, i32
  }
  func.func @transform_2(%arg0: i32) -> (i32, i32) {
    %c0_i32 = arith.constant 0 : i32
    %c0_i32_0 = arith.constant 0 : i32
    %c0_i32_1 = arith.constant 0 : i32
    return %c0_i32, %c0_i32_0 : i32, i32
  }
  func.func @transform_3(%arg0: i32) -> (i32, i32) {
    %c0_i32 = arith.constant 0 : i32
    %c0_i32_0 = arith.constant 0 : i32
    return %arg0, %c0_i32 : i32, i32
  }
  func.func @transform_4(%arg0: i32) -> (i32, i32, i32) {
    %c0_i32 = arith.constant 0 : i32
    %c0_i32_0 = arith.constant 0 : i32
    %c0_i32_1 = arith.constant 0 : i32
    return %arg0, %c0_i32, %c0_i32_0 : i32, i32, i32
  }
}

module attributes {stable_mosaic.version = 11 : i64} {
  func.func @_bn_residual_relu_kernel(%arg0: i32, %arg1: memref<256x128xf32, #tpu.memory_space<vmem>>, %arg2: memref<2x128xf32, #tpu.memory_space<vmem>>, %arg3: memref<256x128xf32, #tpu.memory_space<vmem>>, %arg4: memref<256x128xf32, #tpu.memory_space<vmem>>) attributes {dimension_semantics = [#tpu.dimension_semantics<parallel>], iteration_bounds = array<i64: 2>, scalar_prefetch = 0 : i64, scratch_operands = 0 : i64, tpu.core_type = #tpu.core_type<tc>, window_params = [{transform_indices = @transform_0, window_bounds = array<i64: 256, 128>}, {pipeline_mode = #tpu.pipeline_mode<synchronous>, transform_indices = @transform_1, window_bounds = array<i64: 2, 128>}, {transform_indices = @transform_2, window_bounds = array<i64: 256, 128>}, {transform_indices = @transform_3, window_bounds = array<i64: 256, 128>}]} {
    %c0 = arith.constant 0 : index
    %c0_0 = arith.constant 0 : index
    %0 = vector.load %arg2[%c0, %c0_0] : memref<2x128xf32, #tpu.memory_space<vmem>>, vector<2x128xf32>
    %c0_1 = arith.constant 0 : index
    %c0_2 = arith.constant 0 : index
    %1 = vector.load %arg1[%c0_1, %c0_2] : memref<256x128xf32, #tpu.memory_space<vmem>>, vector<256x128xf32>
    %2 = vector.extract_strided_slice %0 {offsets = [0, 0], sizes = [1, 128], strides = [1, 1]} : vector<2x128xf32> to vector<1x128xf32>
    %3 = vector.broadcast %2 : vector<1x128xf32> to vector<256x128xf32>
    %4 = arith.mulf %1, %3 : vector<256x128xf32>
    %5 = vector.extract_strided_slice %0 {offsets = [1, 0], sizes = [1, 128], strides = [1, 1]} : vector<2x128xf32> to vector<1x128xf32>
    %6 = vector.broadcast %5 : vector<1x128xf32> to vector<256x128xf32>
    %7 = arith.addf %4, %6 : vector<256x128xf32>
    %c0_3 = arith.constant 0 : index
    %c0_4 = arith.constant 0 : index
    %8 = vector.load %arg3[%c0_3, %c0_4] : memref<256x128xf32, #tpu.memory_space<vmem>>, vector<256x128xf32>
    %9 = arith.addf %7, %8 : vector<256x128xf32>
    %cst = arith.constant 0.000000e+00 : f32
    %10 = vector.broadcast %cst : f32 to vector<256x128xf32>
    %11 = arith.maximumf %9, %10 : vector<256x128xf32>
    %c0_5 = arith.constant 0 : index
    %c0_6 = arith.constant 0 : index
    %12 = vector.load %arg4[%c0_5, %c0_6] : memref<256x128xf32, #tpu.memory_space<vmem>>, vector<256x128xf32>
    tpu.vector_store %arg4[%c0_5, %c0_6], %11 {strides = array<i32>} : memref<256x128xf32, #tpu.memory_space<vmem>>, vector<256x128xf32>,
    return
  }
  func.func @transform_0(%arg0: i32) -> (i32, i32) {
    %c0_i32 = arith.constant 0 : i32
    %c0_i32_0 = arith.constant 0 : i32
    return %arg0, %c0_i32 : i32, i32
  }
  func.func @transform_1(%arg0: i32) -> (i32, i32) {
    %c0_i32 = arith.constant 0 : i32
    %c0_i32_0 = arith.constant 0 : i32
    %c0_i32_1 = arith.constant 0 : i32
    return %c0_i32, %c0_i32_0 : i32, i32
  }
  func.func @transform_2(%arg0: i32) -> (i32, i32) {
    %c0_i32 = arith.constant 0 : i32
    %c0_i32_0 = arith.constant 0 : i32
    return %arg0, %c0_i32 : i32, i32
  }
  func.func @transform_3(%arg0: i32) -> (i32, i32) {
    %c0_i32 = arith.constant 0 : i32
    %c0_i32_0 = arith.constant 0 : i32
    return %arg0, %c0_i32 : i32, i32
  }
}

</mosaic_0001>

<llo_original>
// kernel: bottleneck_forward.4
$region0: #{bottleneck_forward.4}
  #allocation0 [shape = 'u32[]', space=smem, size = 0x4, offset = 0x4, fixed_abs, tag = 'smem constant byte address 0x4 - core index']
  #allocation1 [shape = 'u32[144,128]{1,0:T(1,128)}', space=vmem, size = 0x12000, scoped, tag = 'internal scratch']
  %s0 = inlined_call_operand.vmem [shape: f32[512,128], index: 0, kind: input, shape index: {}]
  %s1 = inlined_call_operand.vmem [shape: f32[128,128], index: 1, kind: input, shape index: {}]
  %s2 = inlined_call_operand.vmem [shape: f32[512,128], index: 2, kind: output, shape index: {0}]
  %s3 = inlined_call_operand.vmem [shape: f32[2,2,128], index: 3, kind: output, shape index: {1}]
  %4 = xla_tuple %s2, %s3
  %s5 = sld [smem:[#allocation0]]
  $region49: #{bottleneck_forward.4} parent=0
    _
  %s7 = ssub.s32 1, %s5
  %s8 = scalar_select 0, %s7, %s5
  loop: start=0, step=1, limit=4
  $region2: #{bottleneck_forward.4} parent=0 // loop_pre_header
    _
  $region3: #{bottleneck_forward.4} parent=0 // loop_header
    %s10 = sphi 0, %s14
    %p11 = scmp.ge.s32.totalorder %s10, 4
    %s20 = sphi 0, %s22
    %s23 = sphi 0, %s20
    %s24 = sphi 0, %s23
    %s40 = sphi 0, %s24
    %s44 = sphi 0, %s44
    %s46 = sphi 0, %s44
    %s47 = sphi 0, %s46
    %s61 = sphi 0, %s47
    %s67 = sphi 0, %s69
    %s70 = sphi 0, %s67
    %s71 = sphi 0, %s70
    %s87 = sphi 0, %s71
    %s93 = sphi 0, %s95
    %s96 = sphi 0, %s93
    %s97 = sphi 0, %s96
    %s113 = sphi 0, %s97
  $region4: #{bottleneck_forward.4} parent=0 // loop_header_branch
    %13 = sbr.rel (%p11) target = $region8
  $region5: #{bottleneck_forward.4} parent=0 // loop_body
    %s15 = ssub.s32 %s10, 1
    %s16 = ssub.s32 %s10, 2
    %s17 = sadd.s32 %s10, 1
    %s18 = ssub.s32 %s10, %s17
    %p19 = scmp.eq.s32.totalorder %s18, 0
    %s21 = sadd.s32 %s20, 1
    %s22 = scalar_select %p19, %s20, %s21
    %p25 = pneg %p19
    %p26 = scmp.eq.s32.totalorder %s10, 1
    %p27 = por %p25, %p26
    %p28 = scmp.ne.s32.totalorder %s20, %s23
    %p29 = scmp.eq.s32.totalorder %s10, 0
    %p30 = por %p28, %p29
    %p31 = scmp.ne.s32.totalorder %s20, %s23
    %p32 = scmp.eq.s32.totalorder %s15, 1
    %p33 = por %p31, %p32
    %p34 = scmp.ne.s32.totalorder %s23, %s24
    %p35 = scmp.eq.s32.totalorder %s15, 0
    %p36 = por %p34, %p35
    %p37 = scmp.ne.s32.totalorder %s23, %s24
    %p38 = scmp.eq.s32.totalorder %s16, 1
    %p39 = por %p37, %p38
    %p41 = scmp.ne.s32.totalorder %s24, %s40
    %p42 = scmp.eq.s32.totalorder %s16, 0
    %p43 = por %p41, %p42
    %s45 = sadd.s32 %s44, 1
    %p48 = scmp.eq.s32.totalorder %s10, 1
    %p49 = scmp.ne.s32.totalorder %s44, %s46
    %p50 = scmp.eq.s32.totalorder %s10, 0
    %p51 = por %p49, %p50
    %p52 = scmp.ne.s32.totalorder %s44, %s46
    %p53 = scmp.eq.s32.totalorder %s15, 1
    %p54 = por %p52, %p53
    %p55 = scmp.ne.s32.totalorder %s46, %s47
    %p56 = scmp.eq.s32.totalorder %s15, 0
    %p57 = por %p55, %p56
    %p58 = scmp.ne.s32.totalorder %s46, %s47
    %p59 = scmp.eq.s32.totalorder %s16, 1
    %p60 = por %p58, %p59
    %p62 = scmp.ne.s32.totalorder %s47, %s61
    %p63 = scmp.eq.s32.totalorder %s16, 0
    %p64 = por %p62, %p63
    %s65 = ssub.s32 %s10, %s17
    %p66 = scmp.eq.s32.totalorder %s65, 0
    %s68 = sadd.s32 %s67, 1
    %s69 = scalar_select %p66, %s67, %s68
    %p72 = pneg %p66
    %p73 = scmp.eq.s32.totalorder %s10, 1
    %p74 = por %p72, %p73
    %p75 = scmp.ne.s32.totalorder %s67, %s70
    %p76 = scmp.eq.s32.totalorder %s10, 0
    %p77 = por %p75, %p76
    %p78 = scmp.ne.s32.totalorder %s67, %s70
    %p79 = scmp.eq.s32.totalorder %s15, 1
    %p80 = por %p78, %p79
    %p81 = scmp.ne.s32.totalorder %s70, %s71
    %p82 = scmp.eq.s32.totalorder %s15, 0
    %p83 = por %p81, %p82
    %p84 = scmp.ne.s32.totalorder %s70, %s71
    %p85 = scmp.eq.s32.totalorder %s16, 1
    %p86 = por %p84, %p85
    %p88 = scmp.ne.s32.totalorder %s71, %s87
    %p89 = scmp.eq.s32.totalorder %s16, 0
    %p90 = por %p88, %p89
    %s91 = ssub.s32 %s10, %s17
    %p92 = scmp.eq.s32.totalorder %s91, 0
    %s94 = sadd.s32 %s93, 1
    %s95 = scalar_select %p92, %s93, %s94
    %p98 = pneg %p92
    %p99 = scmp.eq.s32.totalorder %s10, 1
    %p100 = por %p98, %p99
    %p101 = scmp.ne.s32.totalorder %s93, %s96
    %p102 = scmp.eq.s32.totalorder %s10, 0
    %p103 = por %p101, %p102
    %p104 = scmp.ne.s32.totalorder %s93, %s96
    %p105 = scmp.eq.s32.totalorder %s15, 1
    %p106 = por %p104, %p105
    %p107 = scmp.ne.s32.totalorder %s96, %s97
    %p108 = scmp.eq.s32.totalorder %s15, 0
    %p109 = por %p107, %p108
    %p110 = scmp.ne.s32.totalorder %s96, %s97
    %p111 = scmp.eq.s32.totalorder %s16, 1
    %p112 = por %p110, %p111
    %p114 = scmp.ne.s32.totalorder %s97, %s113
    %p115 = scmp.eq.s32.totalorder %s16, 0
    %p116 = por %p114, %p115
    %p117 = scmp.le.s32.totalorder 1, %s10
    %p118 = scmp.lt.s32.totalorder %s10, 3
    %p119 = pnand %p117, %p118
    %p120 = pneg %p119
    // Predicated region
    $region9: #{bottleneck_forward.4} parent=5 // pred_check
      _
    $region10: #{bottleneck_forward.4} parent=5 // pred_check_branch
      %122 = sbr.rel (%p119) target = $region12
    $region11: #{bottleneck_forward.4} parent=5 // pred_region
      %s123 = ssub.s32 %s10, 1
      // Predicated region
      $region13: #{bottleneck_forward.4} parent=11 // pred_check
        %p124 = pneg %p57
      $region14: #{bottleneck_forward.4} parent=11 // pred_check_branch
        %126 = sbr.rel (%p124) target = $region16
      $region15: #{bottleneck_forward.4} parent=11 // pred_region
        _
      $region16: #{bottleneck_forward.4} parent=11 // pred_fallthru
        _
    $region12: #{bottleneck_forward.4} parent=5 // pred_fallthru
      _
    %p127 = scmp.lt.s32.totalorder %s10, 2
    // Predicated region
    $region17: #{bottleneck_forward.4} parent=5 // pred_check
      %p128 = pneg %p127
    $region18: #{bottleneck_forward.4} parent=5 // pred_check_branch
      %130 = sbr.rel (%p128) target = $region20
    $region19: #{bottleneck_forward.4} parent=5 // pred_region
      // Predicated region
      $region21: #{bottleneck_forward.4} parent=19 // pred_check
        %p131 = pneg %p30
      $region22: #{bottleneck_forward.4} parent=19 // pred_check_branch
        %133 = sbr.rel (%p131) target = $region24
      $region23: #{bottleneck_forward.4} parent=19 // pred_region
        %s134 = smul.u32 32, %s10
        %p135 = scmp.lt.s32.totalorder %s134, 63
        %s136 = scalar_select %p135, %s134, 63
        %s137 = smul.addr %s136, 8
        %s138 = scalar_lea.vmem %s0, %s137
        %s139 = smul.u32 32, %s10
      $region24: #{bottleneck_forward.4} parent=19 // pred_fallthru
        _
    $region20: #{bottleneck_forward.4} parent=5 // pred_fallthru
      _
    %p140 = scmp.le.s32.totalorder 1, %s10
    %p141 = scmp.lt.s32.totalorder %s10, 3
    %p142 = pnand %p140, %p141
    %p143 = pneg %p142
    // Predicated region
    $region25: #{bottleneck_forward.4} parent=5 // pred_check
      _
    $region26: #{bottleneck_forward.4} parent=5 // pred_check_branch
      %145 = sbr.rel (%p142) target = $region28
    $region27: #{bottleneck_forward.4} parent=5 // pred_region
      %s146 = ssub.s32 %s10, 1
      %s147 = smul.u32 32, %s15
      %p148 = scmp.lt.s32.totalorder %s147, 63
      %s149 = scalar_select %p148, %s147, 63
      %s150 = smul.addr %s149, 8
      %s151 = scalar_lea.vmem %s0, %s150
      %p152 = pneg %p36
      %p153 = pneg %p33
      %p154 = pneg %p57
      %p155 = pneg %p54
      %p156 = pneg %p83
      %p157 = pneg %p80
      %s158 = smul.u32 32, %s15
      %p159 = scmp.lt.s32.totalorder %s158, 63
      %s160 = scalar_select %p159, %s158, 63
      %s161 = smul.addr %s160, 8
      %s162 = scalar_lea.vmem %s2, %s161
      %p163 = pneg %p109
      %p164 = pneg %p106
      %p165 = scmp.lt.s32.totalorder %s15, 1
      %s166 = scalar_select %p165, %s15, 1
      %s167 = smul.addr %s166, 2
      %s168 = scalar_lea.vmem %s3, %s167
      %s169 = smul.u32 32, %s15
      %p170 = scmp.lt.s32.totalorder %s169, 63
      %s171 = scalar_select %p170, %s169, 63
      %s172 = smul.addr %s171, 8
      %s173 = scalar_lea.vmem %s0, %s172
      %s174 = smul.u32 32, %s15
      %s175 = smul.u32 32, %s15
      %p176 = scmp.lt.s32.totalorder %s175, 63
      %s177 = scalar_select %p176, %s175, 63
      %s178 = smul.addr %s177, 8
      %s179 = scalar_lea.vmem %s2, %s178
      %s180 = smul.u32 32, %s15
      %p181 = scmp.lt.s32.totalorder %s15, 1
      %s182 = scalar_select %p181, %s15, 1
      %s183 = smul.addr %s182, 2
      %s184 = scalar_lea.vmem %s3, %s183
      %v185 = vld [vmem:[%s173] sm:$0xff]
      %v186 = vld [vmem:[%s173 + $0x8] sm:$0xff]
      %v187 = vld [vmem:[%s173 + $0x10] sm:$0xff]
      %v188 = vld [vmem:[%s173 + $0x18] sm:$0xff]
      %v189 = vld [vmem:[%s173 + $0x20] sm:$0xff]
      %v190 = vld [vmem:[%s173 + $0x28] sm:$0xff]
      %v191 = vld [vmem:[%s173 + $0x30] sm:$0xff]
      %v192 = vld [vmem:[%s173 + $0x38] sm:$0xff]
      %v193 = vld [vmem:[%s173 + $0x40] sm:$0xff]
      %v194 = vld [vmem:[%s173 + $0x48] sm:$0xff]
      %v195 = vld [vmem:[%s173 + $0x50] sm:$0xff]
      %v196 = vld [vmem:[%s173 + $0x58] sm:$0xff]
      %v197 = vld [vmem:[%s173 + $0x60] sm:$0xff]
      %v198 = vld [vmem:[%s173 + $0x68] sm:$0xff]
      %v199 = vld [vmem:[%s173 + $0x70] sm:$0xff]
      %v200 = vld [vmem:[%s173 + $0x78] sm:$0xff]
      %v201 = vld [vmem:[%s173 + $0x80] sm:$0xff]
      %v202 = vld [vmem:[%s173 + $0x88] sm:$0xff]
      %v203 = vld [vmem:[%s173 + $0x90] sm:$0xff]
      %v204 = vld [vmem:[%s173 + $0x98] sm:$0xff]
      %v205 = vld [vmem:[%s173 + $0xa0] sm:$0xff]
      %v206 = vld [vmem:[%s173 + $0xa8] sm:$0xff]
      %v207 = vld [vmem:[%s173 + $0xb0] sm:$0xff]
      %v208 = vld [vmem:[%s173 + $0xb8] sm:$0xff]
      %v209 = vld [vmem:[%s173 + $0xc0] sm:$0xff]
      %v210 = vld [vmem:[%s173 + $0xc8] sm:$0xff]
      %v211 = vld [vmem:[%s173 + $0xd0] sm:$0xff]
      %v212 = vld [vmem:[%s173 + $0xd8] sm:$0xff]
      %v213 = vld [vmem:[%s173 + $0xe0] sm:$0xff]
      %v214 = vld [vmem:[%s173 + $0xe8] sm:$0xff]
      %v215 = vld [vmem:[%s173 + $0xf0] sm:$0xff]
      %v216 = vld [vmem:[%s173 + $0xf8] sm:$0xff]
      %v217 = vld [vmem:[%s1] sm:$0xff]
      %v218 = vld [vmem:[%s1 + $0x8] sm:$0xff]
      %v219 = vld [vmem:[%s1 + $0x10] sm:$0xff]
      %v220 = vld [vmem:[%s1 + $0x18] sm:$0xff]
      %v221 = vld [vmem:[%s1 + $0x20] sm:$0xff]
      %v222 = vld [vmem:[%s1 + $0x28] sm:$0xff]
      %v223 = vld [vmem:[%s1 + $0x30] sm:$0xff]
      %v224 = vld [vmem:[%s1 + $0x38] sm:$0xff]
      %v225 = vld [vmem:[%s1 + $0x40] sm:$0xff]
      %v226 = vld [vmem:[%s1 + $0x48] sm:$0xff]
      %v227 = vld [vmem:[%s1 + $0x50] sm:$0xff]
      %v228 = vld [vmem:[%s1 + $0x58] sm:$0xff]
      %v229 = vld [vmem:[%s1 + $0x60] sm:$0xff]
      %v230 = vld [vmem:[%s1 + $0x68] sm:$0xff]
      %v231 = vld [vmem:[%s1 + $0x70] sm:$0xff]
      %v232 = vld [vmem:[%s1 + $0x78] sm:$0xff]
      %233 = vmatprep.subr.mxu0 0.0
      %234 = vmatpush1.msra.mxu0 %v217
      %235 = vmatprep.subr.mxu0 0.0
      %236 = vmatpush1.msra.mxu0 %v218
      %237 = vmatprep.subr.mxu0 0.0
      %238 = vmatpush1.msra.mxu0 %v219
      %239 = vmatprep.subr.mxu0 0.0
      %240 = vmatpush1.msra.mxu0 %v220
      %241 = vmatprep.subr.mxu0 0.0
      %242 = vmatpush1.msra.mxu0 %v221
      %243 = vmatprep.subr.mxu0 0.0
      %244 = vmatpush1.msra.mxu0 %v222
      %245 = vmatprep.subr.mxu0 0.0
      %246 = vmatpush1.msra.mxu0 %v223
      %247 = vmatprep.subr.mxu0 0.0
      %248 = vmatpush1.msra.mxu0 %v224
      %249 = vmatprep.subr.mxu0 0.0
      %250 = vmatpush1.msra.mxu0 %v225
      %251 = vmatprep.subr.mxu0 0.0
      %252 = vmatpush1.msra.mxu0 %v226
      %253 = vmatprep.subr.mxu0 0.0
      %254 = vmatpush1.msra.mxu0 %v227
      %255 = vmatprep.subr.mxu0 0.0
      %256 = vmatpush1.msra.mxu0 %v228
      %257 = vmatprep.subr.mxu0 0.0
      %258 = vmatpush1.msra.mxu0 %v229
      %259 = vmatprep.subr.mxu0 0.0
      %260 = vmatpush1.msra.mxu0 %v230
      %261 = vmatprep.subr.mxu0 0.0
      %262 = vmatpush1.msra.mxu0 %v231
      %263 = vmatprep.subr.mxu0 0.0
      %264 = vmatpush1.msra.mxu0 %v232
      %265 = vmatprep.subr.mxu0 0.0
      %266 = vmatpush1.msra.mxu0 0.0
      %267 = vmatprep.subr.mxu0 0.0
      %268 = vmatpush1.msra.mxu0 0.0
      %269 = vmatprep.subr.mxu0 0.0
      %270 = vmatpush1.msra.mxu0 0.0
      %271 = vmatprep.subr.mxu0 0.0
      %272 = vmatpush1.msra.mxu0 0.0
      %273 = vmatprep.subr.mxu0 0.0
      %274 = vmatpush1.msra.mxu0 0.0
      %275 = vmatprep.subr.mxu0 0.0
      %276 = vmatpush1.msra.mxu0 0.0
      %277 = vmatprep.subr.mxu0 0.0
      %278 = vmatpush1.msra.mxu0 0.0
      %279 = vmatprep.subr.mxu0 0.0
      %280 = vmatpush1.msra.mxu0 0.0
      %281 = vmatprep.subr.mxu0 0.0
      %282 = vmatpush1.msra.mxu0 0.0
      %283 = vmatprep.subr.mxu0 0.0
      %284 = vmatpush1.msra.mxu0 0.0
      %285 = vmatprep.subr.mxu0 0.0
      %286 = vmatpush1.msra.mxu0 0.0
      %287 = vmatprep.subr.mxu0 0.0
      %288 = vmatpush1.msra.mxu0 0.0
      %289 = vmatprep.subr.mxu0 0.0
      %290 = vmatpush1.msra.mxu0 0.0
      %291 = vmatprep.subr.mxu0 0.0
      %292 = vmatpush1.msra.mxu0 0.0
      %293 = vmatprep.subr.mxu0 0.0
      %294 = vmatpush1.msra.mxu0 0.0
      %295 = vmatprep.subr.mxu0 0.0
      %296 = vmatpush1.msra.mxu0 0.0
      %297 = vmatprep.mubr.f32.mxu0 0.0
      %298 = vmatmul.mubr.f32.gmra.mrb[0].mxu0 %v185
      %v299 = vpop.f32.mrb[0].mxu0
      %v300 = vadd.f32 0.0, %v299
      %v301 = vpop.f32.mrb[0].mxu0
      %302 = vmatprep.mubr.f32.mxu0 0.0
      %303 = vmatmul.mubr.f32.gmra.mrb[0].mxu0 %v186
      %v304 = vpop.f32.mrb[0].mxu0
      %v305 = vadd.f32 0.0, %v304
      %v306 = vpop.f32.mrb[0].mxu0
      %307 = vmatprep.mubr.f32.mxu0 0.0
      %308 = vmatmul.mubr.f32.gmra.mrb[0].mxu0 %v187
      %v309 = vpop.f32.mrb[0].mxu0
      %v310 = vadd.f32 0.0, %v309
      %v311 = vpop.f32.mrb[0].mxu0
      %312 = vmatprep.mubr.f32.mxu0 0.0
      %313 = vmatmul.mubr.f32.gmra.mrb[0].mxu0 %v188
      %v314 = vpop.f32.mrb[0].mxu0
      %v315 = vadd.f32 0.0, %v314
      %v316 = vpop.f32.mrb[0].mxu0
      %317 = vmatprep.mubr.f32.mxu0 0.0
      %318 = vmatmul.mubr.f32.gmra.mrb[0].mxu0 %v189
      %v319 = vpop.f32.mrb[0].mxu0
      %v320 = vadd.f32 0.0, %v319
      %v321 = vpop.f32.mrb[0].mxu0
      %322 = vmatprep.mubr.f32.mxu0 0.0
      %323 = vmatmul.mubr.f32.gmra.mrb[0].mxu0 %v190
      %v324 = vpop.f32.mrb[0].mxu0
      %v325 = vadd.f32 0.0, %v324
      %v326 = vpop.f32.mrb[0].mxu0
      %327 = vmatprep.mubr.f32.mxu0 0.0
      %328 = vmatmul.mubr.f32.gmra.mrb[0].mxu0 %v191
      %v329 = vpop.f32.mrb[0].mxu0
      %v330 = vadd.f32 0.0, %v329
      %v331 = vpop.f32.mrb[0].mxu0
      %332 = vmatprep.mubr.f32.mxu0 0.0
      %333 = vmatmul.mubr.f32.gmra.mrb[0].mxu0 %v192
      %v334 = vpop.f32.mrb[0].mxu0
      %v335 = vadd.f32 0.0, %v334
      %v336 = vpop.f32.mrb[0].mxu0
      %337 = vmatprep.mubr.f32.mxu0 0.0
      %338 = vmatmul.mubr.f32.gmra.mrb[0].mxu0 %v193
      %v339 = vpop.f32.mrb[0].mxu0
      %v340 = vadd.f32 0.0, %v339
      %v341 = vpop.f32.mrb[0].mxu0
      %342 = vmatprep.mubr.f32.mxu0 0.0
      %343 = vmatmul.mubr.f32.gmra.mrb[0].mxu0 %v194
      %v344 = vpop.f32.mrb[0].mxu0
      %v345 = vadd.f32 0.0, %v344
      %v346 = vpop.f32.mrb[0].mxu0
      %347 = vmatprep.mubr.f32.mxu0 0.0
      %348 = vmatmul.mubr.f32.gmra.mrb[0].mxu0 %v195
      %v349 = vpop.f32.mrb[0].mxu0
      %v350 = vadd.f32 0.0, %v349
      %v351 = vpop.f32.mrb[0].mxu0
      %352 = vmatprep.mubr.f32.mxu0 0.0
      %353 = vmatmul.mubr.f32.gmra.mrb[0].mxu0 %v196
      %v354 = vpop.f32.mrb[0].mxu0
      %v355 = vadd.f32 0.0, %v354
      %v356 = vpop.f32.mrb[0].mxu0
      %357 = vmatprep.mubr.f32.mxu0 0.0
      %358 = vmatmul.mubr.f32.gmra.mrb[0].mxu0 %v197
      %v359 = vpop.f32.mrb[0].mxu0
      %v360 = vadd.f32 0.0, %v359
      %v361 = vpop.f32.mrb[0].mxu0
      %362 = vmatprep.mubr.f32.mxu0 0.0
      %363 = vmatmul.mubr.f32.gmra.mrb[0].mxu0 %v198
      %v364 = vpop.f32.mrb[0].mxu0
      %v365 = vadd.f32 0.0, %v364
      %v366 = vpop.f32.mrb[0].mxu0
      %367 = vmatprep.mubr.f32.mxu0 0.0
      %368 = vmatmul.mubr.f32.gmra.mrb[0].mxu0 %v199
      %v369 = vpop.f32.mrb[0].mxu0
      %v370 = vadd.f32 0.0, %v369
      %v371 = vpop.f32.mrb[0].mxu0
      %372 = vmatprep.mubr.f32.mxu0 0.0
      %373 = vmatmul.mubr.f32.gmra.mrb[0].mxu0 %v200
      %v374 = vpop.f32.mrb[0].mxu0
      %v375 = vadd.f32 0.0, %v374
      %v376 = vpop.f32.mrb[0].mxu0
      %377 = vmatprep.mubr.f32.mxu0 0.0
      %378 = vmatmul.mubr.f32.gmra.mrb[0].mxu0 %v201
      %v379 = vpop.f32.mrb[0].mxu0
      %v380 = vadd.f32 0.0, %v379
      %v381 = vpop.f32.mrb[0].mxu0
      %382 = vmatprep.mubr.f32.mxu0 0.0
      %383 = vmatmul.mubr.f32.gmra.mrb[0].mxu0 %v202
      %v384 = vpop.f32.mrb[0].mxu0
      %v385 = vadd.f32 0.0, %v384
      %v386 = vpop.f32.mrb[0].mxu0
      %387 = vmatprep.mubr.f32.mxu0 0.0
      %388 = vmatmul.mubr.f32.gmra.mrb[0].mxu0 %v203
      %v389 = vpop.f32.mrb[0].mxu0
      %v390 = vadd.f32 0.0, %v389
      %v391 = vpop.f32.mrb[0].mxu0
      %392 = vmatprep.mubr.f32.mxu0 0.0
      %393 = vmatmul.mubr.f32.gmra.mrb[0].mxu0 %v204
      %v394 = vpop.f32.mrb[0].mxu0
      %v395 = vadd.f32 0.0, %v394
      %v396 = vpop.f32.mrb[0].mxu0
      %397 = vmatprep.mubr.f32.mxu0 0.0
      %398 = vmatmul.mubr.f32.gmra.mrb[0].mxu0 %v205
      %v399 = vpop.f32.mrb[0].mxu0
      %v400 = vadd.f32 0.0, %v399
      %v401 = vpop.f32.mrb[0].mxu0
      %402 = vmatprep.mubr.f32.mxu0 0.0
      %403 = vmatmul.mubr.f32.gmra.mrb[0].mxu0 %v206
      %v404 = vpop.f32.mrb[0].mxu0
      %v405 = vadd.f32 0.0, %v404
      %v406 = vpop.f32.mrb[0].mxu0
      %407 = vmatprep.mubr.f32.mxu0 0.0
      %408 = vmatmul.mubr.f32.gmra.mrb[0].mxu0 %v207
      %v409 = vpop.f32.mrb[0].mxu0
      %v410 = vadd.f32 0.0, %v409
      %v411 = vpop.f32.mrb[0].mxu0
      %412 = vmatprep.mubr.f32.mxu0 0.0
      %413 = vmatmul.mubr.f32.gmra.mrb[0].mxu0 %v208
      %v414 = vpop.f32.mrb[0].mxu0
      %v415 = vadd.f32 0.0, %v414
      %v416 = vpop.f32.mrb[0].mxu0
      %417 = vmatprep.mubr.f32.mxu0 0.0
      %418 = vmatmul.mubr.f32.gmra.mrb[0].mxu0 %v209
      %v419 = vpop.f32.mrb[0].mxu0
      %v420 = vadd.f32 0.0, %v419
      %v421 = vpop.f32.mrb[0].mxu0
      %422 = vmatprep.mubr.f32.mxu0 0.0
      %423 = vmatmul.mubr.f32.gmra.mrb[0].mxu0 %v210
      %v424 = vpop.f32.mrb[0].mxu0
      %v425 = vadd.f32 0.0, %v424
      %v426 = vpop.f32.mrb[0].mxu0
      %427 = vmatprep.mubr.f32.mxu0 0.0
      %428 = vmatmul.mubr.f32.gmra.mrb[0].mxu0 %v211
      %v429 = vpop.f32.mrb[0].mxu0
      %v430 = vadd.f32 0.0, %v429
      %v431 = vpop.f32.mrb[0].mxu0
      %432 = vmatprep.mubr.f32.mxu0 0.0
      %433 = vmatmul.mubr.f32.gmra.mrb[0].mxu0 %v212
      %v434 = vpop.f32.mrb[0].mxu0
      %v435 = vadd.f32 0.0, %v434
      %v436 = vpop.f32.mrb[0].mxu0
      %437 = vmatprep.mubr.f32.mxu0 0.0
      %438 = vmatmul.mubr.f32.gmra.mrb[0].mxu0 %v213
      %v439 = vpop.f32.mrb[0].mxu0
      %v440 = vadd.f32 0.0, %v439
      %v441 = vpop.f32.mrb[0].mxu0
      %442 = vmatprep.mubr.f32.mxu0 0.0
      %443 = vmatmul.mubr.f32.gmra.mrb[0].mxu0 %v214
      %v444 = vpop.f32.mrb[0].mxu0
      %v445 = vadd.f32 0.0, %v444
      %v446 = vpop.f32.mrb[0].mxu0
      %447 = vmatprep.mubr.f32.mxu0 0.0
      %448 = vmatmul.mubr.f32.gmra.mrb[0].mxu0 %v215
      %v449 = vpop.f32.mrb[0].mxu0
      %v450 = vadd.f32 0.0, %v449
      %v451 = vpop.f32.mrb[0].mxu0
      %452 = vmatprep.mubr.f32.mxu0 0.0
      %453 = vmatmul.mubr.f32.gmra.mrb[0].mxu0 %v216
      %v454 = vpop.f32.mrb[0].mxu0
      %v455 = vadd.f32 0.0, %v454
      %v456 = vpop.f32.mrb[0].mxu0
      %457 = vdwg.mxu0
      %458 = vst [vmem:[%s179] sm:$0xff] %v300
      %459 = vst [vmem:[%s179 + $0x8] sm:$0xff] %v305
      %460 = vst [vmem:[%s179 + $0x10] sm:$0xff] %v310
      %461 = vst [vmem:[%s179 + $0x18] sm:$0xff] %v315
      %462 = vst [vmem:[%s179 + $0x20] sm:$0xff] %v320
      %463 = vst [vmem:[%s179 + $0x28] sm:$0xff] %v325
      %464 = vst [vmem:[%s179 + $0x30] sm:$0xff] %v330
      %465 = vst [vmem:[%s179 + $0x38] sm:$0xff] %v335
      %466 = vst [vmem:[%s179 + $0x40] sm:$0xff] %v340
      %467 = vst [vmem:[%s179 + $0x48] sm:$0xff] %v345
      %468 = vst [vmem:[%s179 + $0x50] sm:$0xff] %v350
      %469 = vst [vmem:[%s179 + $0x58] sm:$0xff] %v355
      %470 = vst [vmem:[%s179 + $0x60] sm:$0xff] %v360
      %471 = vst [vmem:[%s179 + $0x68] sm:$0xff] %v365
      %472 = vst [vmem:[%s179 + $0x70] sm:$0xff] %v370
      %473 = vst [vmem:[%s179 + $0x78] sm:$0xff] %v375
      %474 = vst [vmem:[%s179 + $0x80] sm:$0xff] %v380
      %475 = vst [vmem:[%s179 + $0x88] sm:$0xff] %v385
      %476 = vst [vmem:[%s179 + $0x90] sm:$0xff] %v390
      %477 = vst [vmem:[%s179 + $0x98] sm:$0xff] %v395
      %478 = vst [vmem:[%s179 + $0xa0] sm:$0xff] %v400
      %479 = vst [vmem:[%s179 + $0xa8] sm:$0xff] %v405
      %480 = vst [vmem:[%s179 + $0xb0] sm:$0xff] %v410
      %481 = vst [vmem:[%s179 + $0xb8] sm:$0xff] %v415
      %482 = vst [vmem:[%s179 + $0xc0] sm:$0xff] %v420
      %483 = vst [vmem:[%s179 + $0xc8] sm:$0xff] %v425
      %484 = vst [vmem:[%s179 + $0xd0] sm:$0xff] %v430
      %485 = vst [vmem:[%s179 + $0xd8] sm:$0xff] %v435
      %486 = vst [vmem:[%s179 + $0xe0] sm:$0xff] %v440
      %487 = vst [vmem:[%s179 + $0xe8] sm:$0xff] %v445
      %488 = vst [vmem:[%s179 + $0xf0] sm:$0xff] %v450
      %489 = vst [vmem:[%s179 + $0xf8] sm:$0xff] %v455
      %v490 = vadd.f32 %v300, %v305
      %v491 = vadd.f32 %v490, %v310
      %v492 = vadd.f32 %v491, %v315
      %v493 = vadd.f32 %v492, %v320
      %v494 = vadd.f32 %v493, %v325
      %v495 = vadd.f32 %v494, %v330
      %v496 = vadd.f32 %v495, %v335
      %v497 = vadd.f32 %v496, %v340
      %v498 = vadd.f32 %v497, %v345
      %v499 = vadd.f32 %v498, %v350
      %v500 = vadd.f32 %v499, %v355
      %v501 = vadd.f32 %v500, %v360
      %v502 = vadd.f32 %v501, %v365
      %v503 = vadd.f32 %v502, %v370
      %v504 = vadd.f32 %v503, %v375
      %v505 = vadd.f32 %v504, %v380
      %v506 = vadd.f32 %v505, %v385
      %v507 = vadd.f32 %v506, %v390
      %v508 = vadd.f32 %v507, %v395
      %v509 = vadd.f32 %v508, %v400
      %v510 = vadd.f32 %v509, %v405
      %v511 = vadd.f32 %v510, %v410
      %v512 = vadd.f32 %v511, %v415
      %v513 = vadd.f32 %v512, %v420
      %v514 = vadd.f32 %v513, %v425
      %v515 = vadd.f32 %v514, %v430
      %v516 = vadd.f32 %v515, %v435
      %v517 = vadd.f32 %v516, %v440
      %v518 = vadd.f32 %v517, %v445
      %v519 = vadd.f32 %v518, %v450
      %v520 = vadd.f32 %v519, %v455
      %v521 = vrot.slane %v520, 4
      %v522 = vadd.f32 %v520, %v521
      %v523 = vrot.slane %v522, 2
      %v524 = vadd.f32 %v522, %v523
      %v525 = vrot.slane %v524, 1
      %v526 = vadd.f32 %v524, %v525
      %v527 = vmul.f32 %v300, %v300
      %v528 = vmul.f32 %v305, %v305
      %v529 = vmul.f32 %v310, %v310
      %v530 = vmul.f32 %v315, %v315
      %v531 = vmul.f32 %v320, %v320
      %v532 = vmul.f32 %v325, %v325
      %v533 = vmul.f32 %v330, %v330
      %v534 = vmul.f32 %v335, %v335
      %v535 = vmul.f32 %v340, %v340
      %v536 = vmul.f32 %v345, %v345
      %v537 = vmul.f32 %v350, %v350
      %v538 = vmul.f32 %v355, %v355
      %v539 = vmul.f32 %v360, %v360
      %v540 = vmul.f32 %v365, %v365
      %v541 = vmul.f32 %v370, %v370
      %v542 = vmul.f32 %v375, %v375
      %v543 = vmul.f32 %v380, %v380
      %v544 = vmul.f32 %v385, %v385
      %v545 = vmul.f32 %v390, %v390
      %v546 = vmul.f32 %v395, %v395
      %v547 = vmul.f32 %v400, %v400
      %v548 = vmul.f32 %v405, %v405
      %v549 = vmul.f32 %v410, %v410
      %v550 = vmul.f32 %v415, %v415
      %v551 = vmul.f32 %v420, %v420
      %v552 = vmul.f32 %v425, %v425
      %v553 = vmul.f32 %v430, %v430
      %v554 = vmul.f32 %v435, %v435
      %v555 = vmul.f32 %v440, %v440
      %v556 = vmul.f32 %v445, %v445
      %v557 = vmul.f32 %v450, %v450
      %v558 = vmul.f32 %v455, %v455
      %v559 = vadd.f32 %v527, %v528
      %v560 = vadd.f32 %v559, %v529
      %v561 = vadd.f32 %v560, %v530
      %v562 = vadd.f32 %v561, %v531
      %v563 = vadd.f32 %v562, %v532
      %v564 = vadd.f32 %v563, %v533
      %v565 = vadd.f32 %v564, %v534
      %v566 = vadd.f32 %v565, %v535
      %v567 = vadd.f32 %v566, %v536
      %v568 = vadd.f32 %v567, %v537
      %v569 = vadd.f32 %v568, %v538
      %v570 = vadd.f32 %v569, %v539
      %v571 = vadd.f32 %v570, %v540
      %v572 = vadd.f32 %v571, %v541
      %v573 = vadd.f32 %v572, %v542
      %v574 = vadd.f32 %v573, %v543
      %v575 = vadd.f32 %v574, %v544
      %v576 = vadd.f32 %v575, %v545
      %v577 = vadd.f32 %v576, %v546
      %v578 = vadd.f32 %v577, %v547
      %v579 = vadd.f32 %v578, %v548
      %v580 = vadd.f32 %v579, %v549
      %v581 = vadd.f32 %v580, %v550
      %v582 = vadd.f32 %v581, %v551
      %v583 = vadd.f32 %v582, %v552
      %v584 = vadd.f32 %v583, %v553
      %v585 = vadd.f32 %v584, %v554
      %v586 = vadd.f32 %v585, %v555
      %v587 = vadd.f32 %v586, %v556
      %v588 = vadd.f32 %v587, %v557
      %v589 = vadd.f32 %v588, %v558
      %v590 = vrot.slane %v589, 4
      %v591 = vadd.f32 %v589, %v590
      %v592 = vrot.slane %v591, 2
      %v593 = vadd.f32 %v591, %v592
      %v594 = vrot.slane %v593, 1
      %v595 = vadd.f32 %v593, %v594
      %vm596 = vcmask 1040384
      %v597 = vsel %vm596, %v526, %v595
      %598 = vst [vmem:[%s184] sm:$0x3] %v597
      %s599 = smul.u32 32, %s15
      %p600 = scmp.lt.s32.totalorder %s599, 63
      %s601 = scalar_select %p600, %s599, 63
      %s602 = smul.addr %s601, 8
      %s603 = scalar_lea.vmem %s2, %s602
      %p604 = scmp.lt.s32.totalorder %s15, 1
      %s605 = scalar_select %p604, %s15, 1
      %s606 = smul.addr %s605, 2
      %s607 = scalar_lea.vmem %s3, %s606
      // Predicated region
      $region29: #{bottleneck_forward.4} parent=27 // pred_check
        %p608 = pneg %p80
      $region30: #{bottleneck_forward.4} parent=27 // pred_check_branch
        %610 = sbr.rel (%p608) target = $region32
      $region31: #{bottleneck_forward.4} parent=27 // pred_region
        %s611 = smul.u32 32, %s15
      $region32: #{bottleneck_forward.4} parent=27 // pred_fallthru
        _
      // Predicated region
      $region33: #{bottleneck_forward.4} parent=27 // pred_check
        %p612 = pneg %p106
      $region34: #{bottleneck_forward.4} parent=27 // pred_check_branch
        %614 = sbr.rel (%p612) target = $region36
      $region35: #{bottleneck_forward.4} parent=27 // pred_region
        _
      $region36: #{bottleneck_forward.4} parent=27 // pred_fallthru
        _
    $region28: #{bottleneck_forward.4} parent=5 // pred_fallthru
      _
    %p615 = scmp.le.s32.totalorder 2, %s10
    // Predicated region
    $region37: #{bottleneck_forward.4} parent=5 // pred_check
      %p616 = pneg %p615
    $region38: #{bottleneck_forward.4} parent=5 // pred_check_branch
      %618 = sbr.rel (%p616) target = $region40
    $region39: #{bottleneck_forward.4} parent=5 // pred_region
      %s619 = ssub.s32 %s10, 2
      // Predicated region
      $region41: #{bottleneck_forward.4} parent=39 // pred_check
        %p620 = pneg %p86
      $region42: #{bottleneck_forward.4} parent=39 // pred_check_branch
        %622 = sbr.rel (%p620) target = $region44
      $region43: #{bottleneck_forward.4} parent=39 // pred_region
        %s623 = smul.u32 32, %s16
        %p624 = scmp.lt.s32.totalorder %s623, 63
        %s625 = scalar_select %p624, %s623, 63
        %s626 = smul.addr %s625, 8
        %s627 = scalar_lea.vmem %s2, %s626
      $region44: #{bottleneck_forward.4} parent=39 // pred_fallthru
        _
      // Predicated region
      $region45: #{bottleneck_forward.4} parent=39 // pred_check
        %p628 = pneg %p112
      $region46: #{bottleneck_forward.4} parent=39 // pred_check_branch
        %630 = sbr.rel (%p628) target = $region48
      $region47: #{bottleneck_forward.4} parent=39 // pred_region
        %p631 = scmp.lt.s32.totalorder %s16, 1
        %s632 = scalar_select %p631, %s16, 1
        %s633 = smul.addr %s632, 2
        %s634 = scalar_lea.vmem %s3, %s633
      $region48: #{bottleneck_forward.4} parent=39 // pred_fallthru
        _
    $region40: #{bottleneck_forward.4} parent=5 // pred_fallthru
      _
  $region6: #{bottleneck_forward.4} parent=0 // loop_footer
    %s14 = sadd.s32 1, %s10
  $region7: #{bottleneck_forward.4} parent=0 // loop_footer_branch
    %9 = sbr.rel target = $region3
  $region8: #{bottleneck_forward.4} parent=0 // loop_exit
    _

// kernel: bottleneck_forward.7
$region0: #{bottleneck_forward.7}
  #allocation0 [shape = 'u32[]', space=smem, size = 0x4, offset = 0x4, fixed_abs, tag = 'smem constant byte address 0x4 - core index']
  #allocation1 [shape = 'u32[144,128]{1,0:T(1,128)}', space=vmem, size = 0x12000, scoped, tag = 'internal scratch']
  %s0 = inlined_call_operand.vmem [shape: f32[512,128], index: 0, kind: input, shape index: {}]
  %s1 = inlined_call_operand.vmem [shape: f32[2,128], index: 1, kind: input, shape index: {}]
  %s2 = inlined_call_operand.vmem [shape: f32[512,128], index: 2, kind: input, shape index: {}]
  %s3 = inlined_call_operand.vmem [shape: f32[512,128], index: 3, kind: output, shape index: {}]
  %s4 = sld [smem:[#allocation0]]
  $region45: #{bottleneck_forward.7} parent=0
    _
  %s6 = ssub.s32 1, %s4
  %s7 = scalar_select 0, %s6, %s4
  loop: start=0, step=1, limit=4
  $region2: #{bottleneck_forward.7} parent=0 // loop_pre_header
    _
  $region3: #{bottleneck_forward.7} parent=0 // loop_header
    %s9 = sphi 0, %s13
    %p10 = scmp.ge.s32.totalorder %s9, 4
    %s19 = sphi 0, %s21
    %s22 = sphi 0, %s19
    %s23 = sphi 0, %s22
    %s39 = sphi 0, %s23
    %s43 = sphi 0, %s43
    %s45 = sphi 0, %s43
    %s46 = sphi 0, %s45
    %s60 = sphi 0, %s46
    %s66 = sphi 0, %s68
    %s69 = sphi 0, %s66
    %s70 = sphi 0, %s69
    %s86 = sphi 0, %s70
    %s92 = sphi 0, %s94
    %s95 = sphi 0, %s92
    %s96 = sphi 0, %s95
    %s112 = sphi 0, %s96
  $region4: #{bottleneck_forward.7} parent=0 // loop_header_branch
    %12 = sbr.rel (%p10) target = $region8
  $region5: #{bottleneck_forward.7} parent=0 // loop_body
    %s14 = ssub.s32 %s9, 1
    %s15 = ssub.s32 %s9, 2
    %s16 = sadd.s32 %s9, 1
    %s17 = ssub.s32 %s9, %s16
    %p18 = scmp.eq.s32.totalorder %s17, 0
    %s20 = sadd.s32 %s19, 1
    %s21 = scalar_select %p18, %s19, %s20
    %p24 = pneg %p18
    %p25 = scmp.eq.s32.totalorder %s9, 1
    %p26 = por %p24, %p25
    %p27 = scmp.ne.s32.totalorder %s19, %s22
    %p28 = scmp.eq.s32.totalorder %s9, 0
    %p29 = por %p27, %p28
    %p30 = scmp.ne.s32.totalorder %s19, %s22
    %p31 = scmp.eq.s32.totalorder %s14, 1
    %p32 = por %p30, %p31
    %p33 = scmp.ne.s32.totalorder %s22, %s23
    %p34 = scmp.eq.s32.totalorder %s14, 0
    %p35 = por %p33, %p34
    %p36 = scmp.ne.s32.totalorder %s22, %s23
    %p37 = scmp.eq.s32.totalorder %s15, 1
    %p38 = por %p36, %p37
    %p40 = scmp.ne.s32.totalorder %s23, %s39
    %p41 = scmp.eq.s32.totalorder %s15, 0
    %p42 = por %p40, %p41
    %s44 = sadd.s32 %s43, 1
    %p47 = scmp.eq.s32.totalorder %s9, 1
    %p48 = scmp.ne.s32.totalorder %s43, %s45
    %p49 = scmp.eq.s32.totalorder %s9, 0
    %p50 = por %p48, %p49
    %p51 = scmp.ne.s32.totalorder %s43, %s45
    %p52 = scmp.eq.s32.totalorder %s14, 1
    %p53 = por %p51, %p52
    %p54 = scmp.ne.s32.totalorder %s45, %s46
    %p55 = scmp.eq.s32.totalorder %s14, 0
    %p56 = por %p54, %p55
    %p57 = scmp.ne.s32.totalorder %s45, %s46
    %p58 = scmp.eq.s32.totalorder %s15, 1
    %p59 = por %p57, %p58
    %p61 = scmp.ne.s32.totalorder %s46, %s60
    %p62 = scmp.eq.s32.totalorder %s15, 0
    %p63 = por %p61, %p62
    %s64 = ssub.s32 %s9, %s16
    %p65 = scmp.eq.s32.totalorder %s64, 0
    %s67 = sadd.s32 %s66, 1
    %s68 = scalar_select %p65, %s66, %s67
    %p71 = pneg %p65
    %p72 = scmp.eq.s32.totalorder %s9, 1
    %p73 = por %p71, %p72
    %p74 = scmp.ne.s32.totalorder %s66, %s69
    %p75 = scmp.eq.s32.totalorder %s9, 0
    %p76 = por %p74, %p75
    %p77 = scmp.ne.s32.totalorder %s66, %s69
    %p78 = scmp.eq.s32.totalorder %s14, 1
    %p79 = por %p77, %p78
    %p80 = scmp.ne.s32.totalorder %s69, %s70
    %p81 = scmp.eq.s32.totalorder %s14, 0
    %p82 = por %p80, %p81
    %p83 = scmp.ne.s32.totalorder %s69, %s70
    %p84 = scmp.eq.s32.totalorder %s15, 1
    %p85 = por %p83, %p84
    %p87 = scmp.ne.s32.totalorder %s70, %s86
    %p88 = scmp.eq.s32.totalorder %s15, 0
    %p89 = por %p87, %p88
    %s90 = ssub.s32 %s9, %s16
    %p91 = scmp.eq.s32.totalorder %s90, 0
    %s93 = sadd.s32 %s92, 1
    %s94 = scalar_select %p91, %s92, %s93
    %p97 = pneg %p91
    %p98 = scmp.eq.s32.totalorder %s9, 1
    %p99 = por %p97, %p98
    %p100 = scmp.ne.s32.totalorder %s92, %s95
    %p101 = scmp.eq.s32.totalorder %s9, 0
    %p102 = por %p100, %p101
    %p103 = scmp.ne.s32.totalorder %s92, %s95
    %p104 = scmp.eq.s32.totalorder %s14, 1
    %p105 = por %p103, %p104
    %p106 = scmp.ne.s32.totalorder %s95, %s96
    %p107 = scmp.eq.s32.totalorder %s14, 0
    %p108 = por %p106, %p107
    %p109 = scmp.ne.s32.totalorder %s95, %s96
    %p110 = scmp.eq.s32.totalorder %s15, 1
    %p111 = por %p109, %p110
    %p113 = scmp.ne.s32.totalorder %s96, %s112
    %p114 = scmp.eq.s32.totalorder %s15, 0
    %p115 = por %p113, %p114
    %p116 = scmp.le.s32.totalorder 1, %s9
    %p117 = scmp.lt.s32.totalorder %s9, 3
    %p118 = pnand %p116, %p117
    %p119 = pneg %p118
    // Predicated region
    $region9: #{bottleneck_forward.7} parent=5 // pred_check
      _
    $region10: #{bottleneck_forward.7} parent=5 // pred_check_branch
      %121 = sbr.rel (%p118) target = $region12
    $region11: #{bottleneck_forward.7} parent=5 // pred_region
      %s122 = ssub.s32 %s9, 1
      // Predicated region
      $region13: #{bottleneck_forward.7} parent=11 // pred_check
        %p123 = pneg %p56
      $region14: #{bottleneck_forward.7} parent=11 // pred_check_branch
        %125 = sbr.rel (%p123) target = $region16
      $region15: #{bottleneck_forward.7} parent=11 // pred_region
        _
      $region16: #{bottleneck_forward.7} parent=11 // pred_fallthru
        _
    $region12: #{bottleneck_forward.7} parent=5 // pred_fallthru
      _
    %p126 = scmp.lt.s32.totalorder %s9, 2
    // Predicated region
    $region17: #{bottleneck_forward.7} parent=5 // pred_check
      %p127 = pneg %p126
    $region18: #{bottleneck_forward.7} parent=5 // pred_check_branch
      %129 = sbr.rel (%p127) target = $region20
    $region19: #{bottleneck_forward.7} parent=5 // pred_region
      // Predicated region
      $region21: #{bottleneck_forward.7} parent=19 // pred_check
        %p130 = pneg %p29
      $region22: #{bottleneck_forward.7} parent=19 // pred_check_branch
        %132 = sbr.rel (%p130) target = $region24
      $region23: #{bottleneck_forward.7} parent=19 // pred_region
        %s133 = smul.u32 32, %s9
        %p134 = scmp.lt.s32.totalorder %s133, 63
        %s135 = scalar_select %p134, %s133, 63
        %s136 = smul.addr %s135, 8
        %s137 = scalar_lea.vmem %s0, %s136
        %s138 = smul.u32 32, %s9
      $region24: #{bottleneck_forward.7} parent=19 // pred_fallthru
        _
      // Predicated region
      $region25: #{bottleneck_forward.7} parent=19 // pred_check
        %p139 = pneg %p76
      $region26: #{bottleneck_forward.7} parent=19 // pred_check_branch
        %141 = sbr.rel (%p139) target = $region28
      $region27: #{bottleneck_forward.7} parent=19 // pred_region
        %s142 = smul.u32 32, %s9
        %p143 = scmp.lt.s32.totalorder %s142, 63
        %s144 = scalar_select %p143, %s142, 63
        %s145 = smul.addr %s144, 8
        %s146 = scalar_lea.vmem %s2, %s145
        %s147 = smul.u32 32, %s9
      $region28: #{bottleneck_forward.7} parent=19 // pred_fallthru
        _
    $region20: #{bottleneck_forward.7} parent=5 // pred_fallthru
      _
    %p148 = scmp.le.s32.totalorder 1, %s9
    %p149 = scmp.lt.s32.totalorder %s9, 3
    %p150 = pnand %p148, %p149
    %p151 = pneg %p150
    // Predicated region
    $region29: #{bottleneck_forward.7} parent=5 // pred_check
      _
    $region30: #{bottleneck_forward.7} parent=5 // pred_check_branch
      %153 = sbr.rel (%p150) target = $region32
    $region31: #{bottleneck_forward.7} parent=5 // pred_region
      %s154 = ssub.s32 %s9, 1
      %s155 = smul.u32 32, %s14
      %p156 = scmp.lt.s32.totalorder %s155, 63
      %s157 = scalar_select %p156, %s155, 63
      %s158 = smul.addr %s157, 8
      %s159 = scalar_lea.vmem %s0, %s158
      %p160 = pneg %p35
      %p161 = pneg %p32
      %p162 = pneg %p56
      %p163 = pneg %p53
      %s164 = smul.u32 32, %s14
      %p165 = scmp.lt.s32.totalorder %s164, 63
      %s166 = scalar_select %p165, %s164, 63
      %s167 = smul.addr %s166, 8
      %s168 = scalar_lea.vmem %s2, %s167
      %p169 = pneg %p82
      %p170 = pneg %p79
      %p171 = pneg %p108
      %p172 = pneg %p105
      %s173 = smul.u32 32, %s14
      %p174 = scmp.lt.s32.totalorder %s173, 63
      %s175 = scalar_select %p174, %s173, 63
      %s176 = smul.addr %s175, 8
      %s177 = scalar_lea.vmem %s3, %s176
      %s178 = smul.u32 32, %s14
      %p179 = scmp.lt.s32.totalorder %s178, 63
      %s180 = scalar_select %p179, %s178, 63
      %s181 = smul.addr %s180, 8
      %s182 = scalar_lea.vmem %s0, %s181
      %s183 = smul.u32 32, %s14
      %s184 = smul.u32 32, %s14
      %p185 = scmp.lt.s32.totalorder %s184, 63
      %s186 = scalar_select %p185, %s184, 63
      %s187 = smul.addr %s186, 8
      %s188 = scalar_lea.vmem %s2, %s187
      %s189 = smul.u32 32, %s14
      %s190 = smul.u32 32, %s14
      %p191 = scmp.lt.s32.totalorder %s190, 63
      %s192 = scalar_select %p191, %s190, 63
      %s193 = smul.addr %s192, 8
      %s194 = scalar_lea.vmem %s3, %s193
      %s195 = smul.u32 32, %s14
      %v196 = vld [vmem:[%s1] sm:$0x3]
      %v197 = vld [vmem:[%s182] sm:$0xff]
      %v198 = vld [vmem:[%s182 + $0x8] sm:$0xff]
      %v199 = vld [vmem:[%s182 + $0x10] sm:$0xff]
      %v200 = vld [vmem:[%s182 + $0x18] sm:$0xff]
      %v201 = vld [vmem:[%s182 + $0x20] sm:$0xff]
      %v202 = vld [vmem:[%s182 + $0x28] sm:$0xff]
      %v203 = vld [vmem:[%s182 + $0x30] sm:$0xff]
      %v204 = vld [vmem:[%s182 + $0x38] sm:$0xff]
      %v205 = vld [vmem:[%s182 + $0x40] sm:$0xff]
      %v206 = vld [vmem:[%s182 + $0x48] sm:$0xff]
      %v207 = vld [vmem:[%s182 + $0x50] sm:$0xff]
      %v208 = vld [vmem:[%s182 + $0x58] sm:$0xff]
      %v209 = vld [vmem:[%s182 + $0x60] sm:$0xff]
      %v210 = vld [vmem:[%s182 + $0x68] sm:$0xff]
      %v211 = vld [vmem:[%s182 + $0x70] sm:$0xff]
      %v212 = vld [vmem:[%s182 + $0x78] sm:$0xff]
      %v213 = vld [vmem:[%s182 + $0x80] sm:$0xff]
      %v214 = vld [vmem:[%s182 + $0x88] sm:$0xff]
      %v215 = vld [vmem:[%s182 + $0x90] sm:$0xff]
      %v216 = vld [vmem:[%s182 + $0x98] sm:$0xff]
      %v217 = vld [vmem:[%s182 + $0xa0] sm:$0xff]
      %v218 = vld [vmem:[%s182 + $0xa8] sm:$0xff]
      %v219 = vld [vmem:[%s182 + $0xb0] sm:$0xff]
      %v220 = vld [vmem:[%s182 + $0xb8] sm:$0xff]
      %v221 = vld [vmem:[%s182 + $0xc0] sm:$0xff]
      %v222 = vld [vmem:[%s182 + $0xc8] sm:$0xff]
      %v223 = vld [vmem:[%s182 + $0xd0] sm:$0xff]
      %v224 = vld [vmem:[%s182 + $0xd8] sm:$0xff]
      %v225 = vld [vmem:[%s182 + $0xe0] sm:$0xff]
      %v226 = vld [vmem:[%s182 + $0xe8] sm:$0xff]
      %v227 = vld [vmem:[%s182 + $0xf0] sm:$0xff]
      %v228 = vld [vmem:[%s182 + $0xf8] sm:$0xff]
      %v229 = vlaneseq
      %v230 = vshrl.u32 %v229, 7
      %v231 = vsub.s32 0, %v230
      %v232 = vrot.slane %v196, %v231
      %v233 = vmul.f32 %v197, %v232
      %v234 = vmul.f32 %v198, %v232
      %v235 = vmul.f32 %v199, %v232
      %v236 = vmul.f32 %v200, %v232
      %v237 = vmul.f32 %v201, %v232
      %v238 = vmul.f32 %v202, %v232
      %v239 = vmul.f32 %v203, %v232
      %v240 = vmul.f32 %v204, %v232
      %v241 = vmul.f32 %v205, %v232
      %v242 = vmul.f32 %v206, %v232
      %v243 = vmul.f32 %v207, %v232
      %v244 = vmul.f32 %v208, %v232
      %v245 = vmul.f32 %v209, %v232
      %v246 = vmul.f32 %v210, %v232
      %v247 = vmul.f32 %v211, %v232
      %v248 = vmul.f32 %v212, %v232
      %v249 = vmul.f32 %v213, %v232
      %v250 = vmul.f32 %v214, %v232
      %v251 = vmul.f32 %v215, %v232
      %v252 = vmul.f32 %v216, %v232
      %v253 = vmul.f32 %v217, %v232
      %v254 = vmul.f32 %v218, %v232
      %v255 = vmul.f32 %v219, %v232
      %v256 = vmul.f32 %v220, %v232
      %v257 = vmul.f32 %v221, %v232
      %v258 = vmul.f32 %v222, %v232
      %v259 = vmul.f32 %v223, %v232
      %v260 = vmul.f32 %v224, %v232
      %v261 = vmul.f32 %v225, %v232
      %v262 = vmul.f32 %v226, %v232
      %v263 = vmul.f32 %v227, %v232
      %v264 = vmul.f32 %v228, %v232
      %v265 = vlaneseq
      %v266 = vshrl.u32 %v265, 7
      %v267 = vsub.s32 1, %v266
      %v268 = vrot.slane %v196, %v267
      %v269 = vadd.f32 %v233, %v268
      %v270 = vadd.f32 %v234, %v268
      %v271 = vadd.f32 %v235, %v268
      %v272 = vadd.f32 %v236, %v268
      %v273 = vadd.f32 %v237, %v268
      %v274 = vadd.f32 %v238, %v268
      %v275 = vadd.f32 %v239, %v268
      %v276 = vadd.f32 %v240, %v268
      %v277 = vadd.f32 %v241, %v268
      %v278 = vadd.f32 %v242, %v268
      %v279 = vadd.f32 %v243, %v268
      %v280 = vadd.f32 %v244, %v268
      %v281 = vadd.f32 %v245, %v268
      %v282 = vadd.f32 %v246, %v268
      %v283 = vadd.f32 %v247, %v268
      %v284 = vadd.f32 %v248, %v268
      %v285 = vadd.f32 %v249, %v268
      %v286 = vadd.f32 %v250, %v268
      %v287 = vadd.f32 %v251, %v268
      %v288 = vadd.f32 %v252, %v268
      %v289 = vadd.f32 %v253, %v268
      %v290 = vadd.f32 %v254, %v268
      %v291 = vadd.f32 %v255, %v268
      %v292 = vadd.f32 %v256, %v268
      %v293 = vadd.f32 %v257, %v268
      %v294 = vadd.f32 %v258, %v268
      %v295 = vadd.f32 %v259, %v268
      %v296 = vadd.f32 %v260, %v268
      %v297 = vadd.f32 %v261, %v268
      %v298 = vadd.f32 %v262, %v268
      %v299 = vadd.f32 %v263, %v268
      %v300 = vadd.f32 %v264, %v268
      %v301 = vld [vmem:[%s188] sm:$0xff]
      %v302 = vld [vmem:[%s188 + $0x8] sm:$0xff]
      %v303 = vld [vmem:[%s188 + $0x10] sm:$0xff]
      %v304 = vld [vmem:[%s188 + $0x18] sm:$0xff]
      %v305 = vld [vmem:[%s188 + $0x20] sm:$0xff]
      %v306 = vld [vmem:[%s188 + $0x28] sm:$0xff]
      %v307 = vld [vmem:[%s188 + $0x30] sm:$0xff]
      %v308 = vld [vmem:[%s188 + $0x38] sm:$0xff]
      %v309 = vld [vmem:[%s188 + $0x40] sm:$0xff]
      %v310 = vld [vmem:[%s188 + $0x48] sm:$0xff]
      %v311 = vld [vmem:[%s188 + $0x50] sm:$0xff]
      %v312 = vld [vmem:[%s188 + $0x58] sm:$0xff]
      %v313 = vld [vmem:[%s188 + $0x60] sm:$0xff]
      %v314 = vld [vmem:[%s188 + $0x68] sm:$0xff]
      %v315 = vld [vmem:[%s188 + $0x70] sm:$0xff]
      %v316 = vld [vmem:[%s188 + $0x78] sm:$0xff]
      %v317 = vld [vmem:[%s188 + $0x80] sm:$0xff]
      %v318 = vld [vmem:[%s188 + $0x88] sm:$0xff]
      %v319 = vld [vmem:[%s188 + $0x90] sm:$0xff]
      %v320 = vld [vmem:[%s188 + $0x98] sm:$0xff]
      %v321 = vld [vmem:[%s188 + $0xa0] sm:$0xff]
      %v322 = vld [vmem:[%s188 + $0xa8] sm:$0xff]
      %v323 = vld [vmem:[%s188 + $0xb0] sm:$0xff]
      %v324 = vld [vmem:[%s188 + $0xb8] sm:$0xff]
      %v325 = vld [vmem:[%s188 + $0xc0] sm:$0xff]
      %v326 = vld [vmem:[%s188 + $0xc8] sm:$0xff]
      %v327 = vld [vmem:[%s188 + $0xd0] sm:$0xff]
      %v328 = vld [vmem:[%s188 + $0xd8] sm:$0xff]
      %v329 = vld [vmem:[%s188 + $0xe0] sm:$0xff]
      %v330 = vld [vmem:[%s188 + $0xe8] sm:$0xff]
      %v331 = vld [vmem:[%s188 + $0xf0] sm:$0xff]
      %v332 = vld [vmem:[%s188 + $0xf8] sm:$0xff]
      %v333 = vadd.f32 %v269, %v301
      %v334 = vadd.f32 %v270, %v302
      %v335 = vadd.f32 %v271, %v303
      %v336 = vadd.f32 %v272, %v304
      %v337 = vadd.f32 %v273, %v305
      %v338 = vadd.f32 %v274, %v306
      %v339 = vadd.f32 %v275, %v307
      %v340 = vadd.f32 %v276, %v308
      %v341 = vadd.f32 %v277, %v309
      %v342 = vadd.f32 %v278, %v310
      %v343 = vadd.f32 %v279, %v311
      %v344 = vadd.f32 %v280, %v312
      %v345 = vadd.f32 %v281, %v313
      %v346 = vadd.f32 %v282, %v314
      %v347 = vadd.f32 %v283, %v315
      %v348 = vadd.f32 %v284, %v316
      %v349 = vadd.f32 %v285, %v317
      %v350 = vadd.f32 %v286, %v318
      %v351 = vadd.f32 %v287, %v319
      %v352 = vadd.f32 %v288, %v320
      %v353 = vadd.f32 %v289, %v321
      %v354 = vadd.f32 %v290, %v322
      %v355 = vadd.f32 %v291, %v323
      %v356 = vadd.f32 %v292, %v324
      %v357 = vadd.f32 %v293, %v325
      %v358 = vadd.f32 %v294, %v326
      %v359 = vadd.f32 %v295, %v327
      %v360 = vadd.f32 %v296, %v328
      %v361 = vadd.f32 %v297, %v329
      %v362 = vadd.f32 %v298, %v330
      %v363 = vadd.f32 %v299, %v331
      %v364 = vadd.f32 %v300, %v332
      %v365 = vmax.f32 %v333, 0.0
      %v366 = vmax.f32 %v334, 0.0
      %v367 = vmax.f32 %v335, 0.0
      %v368 = vmax.f32 %v336, 0.0
      %v369 = vmax.f32 %v337, 0.0
      %v370 = vmax.f32 %v338, 0.0
      %v371 = vmax.f32 %v339, 0.0
      %v372 = vmax.f32 %v340, 0.0
      %v373 = vmax.f32 %v341, 0.0
      %v374 = vmax.f32 %v342, 0.0
      %v375 = vmax.f32 %v343, 0.0
      %v376 = vmax.f32 %v344, 0.0
      %v377 = vmax.f32 %v345, 0.0
      %v378 = vmax.f32 %v346, 0.0
      %v379 = vmax.f32 %v347, 0.0
      %v380 = vmax.f32 %v348, 0.0
      %v381 = vmax.f32 %v349, 0.0
      %v382 = vmax.f32 %v350, 0.0
      %v383 = vmax.f32 %v351, 0.0
      %v384 = vmax.f32 %v352, 0.0
      %v385 = vmax.f32 %v353, 0.0
      %v386 = vmax.f32 %v354, 0.0
      %v387 = vmax.f32 %v355, 0.0
      %v388 = vmax.f32 %v356, 0.0
      %v389 = vmax.f32 %v357, 0.0
      %v390 = vmax.f32 %v358, 0.0
      %v391 = vmax.f32 %v359, 0.0
      %v392 = vmax.f32 %v360, 0.0
      %v393 = vmax.f32 %v361, 0.0
      %v394 = vmax.f32 %v362, 0.0
      %v395 = vmax.f32 %v363, 0.0
      %v396 = vmax.f32 %v364, 0.0
      %397 = vst [vmem:[%s194] sm:$0xff] %v365
      %398 = vst [vmem:[%s194 + $0x8] sm:$0xff] %v366
      %399 = vst [vmem:[%s194 + $0x10] sm:$0xff] %v367
      %400 = vst [vmem:[%s194 + $0x18] sm:$0xff] %v368
      %401 = vst [vmem:[%s194 + $0x20] sm:$0xff] %v369
      %402 = vst [vmem:[%s194 + $0x28] sm:$0xff] %v370
      %403 = vst [vmem:[%s194 + $0x30] sm:$0xff] %v371
      %404 = vst [vmem:[%s194 + $0x38] sm:$0xff] %v372
      %405 = vst [vmem:[%s194 + $0x40] sm:$0xff] %v373
      %406 = vst [vmem:[%s194 + $0x48] sm:$0xff] %v374
      %407 = vst [vmem:[%s194 + $0x50] sm:$0xff] %v375
      %408 = vst [vmem:[%s194 + $0x58] sm:$0xff] %v376
      %409 = vst [vmem:[%s194 + $0x60] sm:$0xff] %v377
      %410 = vst [vmem:[%s194 + $0x68] sm:$0xff] %v378
      %411 = vst [vmem:[%s194 + $0x70] sm:$0xff] %v379
      %412 = vst [vmem:[%s194 + $0x78] sm:$0xff] %v380
      %413 = vst [vmem:[%s194 + $0x80] sm:$0xff] %v381
      %414 = vst [vmem:[%s194 + $0x88] sm:$0xff] %v382
      %415 = vst [vmem:[%s194 + $0x90] sm:$0xff] %v383
      %416 = vst [vmem:[%s194 + $0x98] sm:$0xff] %v384
      %417 = vst [vmem:[%s194 + $0xa0] sm:$0xff] %v385
      %418 = vst [vmem:[%s194 + $0xa8] sm:$0xff] %v386
      %419 = vst [vmem:[%s194 + $0xb0] sm:$0xff] %v387
      %420 = vst [vmem:[%s194 + $0xb8] sm:$0xff] %v388
      %421 = vst [vmem:[%s194 + $0xc0] sm:$0xff] %v389
      %422 = vst [vmem:[%s194 + $0xc8] sm:$0xff] %v390
      %423 = vst [vmem:[%s194 + $0xd0] sm:$0xff] %v391
      %424 = vst [vmem:[%s194 + $0xd8] sm:$0xff] %v392
      %425 = vst [vmem:[%s194 + $0xe0] sm:$0xff] %v393
      %426 = vst [vmem:[%s194 + $0xe8] sm:$0xff] %v394
      %427 = vst [vmem:[%s194 + $0xf0] sm:$0xff] %v395
      %428 = vst [vmem:[%s194 + $0xf8] sm:$0xff] %v396
      %s429 = smul.u32 32, %s14
      %p430 = scmp.lt.s32.totalorder %s429, 63
      %s431 = scalar_select %p430, %s429, 63
      %s432 = smul.addr %s431, 8
      %s433 = scalar_lea.vmem %s3, %s432
      // Predicated region
      $region33: #{bottleneck_forward.7} parent=31 // pred_check
        %p434 = pneg %p105
      $region34: #{bottleneck_forward.7} parent=31 // pred_check_branch
        %436 = sbr.rel (%p434) target = $region36
      $region35: #{bottleneck_forward.7} parent=31 // pred_region
        %s437 = smul.u32 32, %s14
      $region36: #{bottleneck_forward.7} parent=31 // pred_fallthru
        _
    $region32: #{bottleneck_forward.7} parent=5 // pred_fallthru
      _
    %p438 = scmp.le.s32.totalorder 2, %s9
    // Predicated region
    $region37: #{bottleneck_forward.7} parent=5 // pred_check
      %p439 = pneg %p438
    $region38: #{bottleneck_forward.7} parent=5 // pred_check_branch
      %441 = sbr.rel (%p439) target = $region40
    $region39: #{bottleneck_forward.7} parent=5 // pred_region
      %s442 = ssub.s32 %s9, 2
      // Predicated region
      $region41: #{bottleneck_forward.7} parent=39 // pred_check
        %p443 = pneg %p111
      $region42: #{bottleneck_forward.7} parent=39 // pred_check_branch
        %445 = sbr.rel (%p443) target = $region44
      $region43: #{bottleneck_forward.7} parent=39 // pred_region
        %s446 = smul.u32 32, %s15
        %p447 = scmp.lt.s32.totalorder %s446, 63
        %s448 = scalar_select %p447, %s446, 63
        %s449 = smul.addr %s448, 8
        %s450 = scalar_lea.vmem %s3, %s449
      $region44: #{bottleneck_forward.7} parent=39 // pred_fallthru
        _
    $region40: #{bottleneck_forward.7} parent=5 // pred_fallthru
      _
  $region6: #{bottleneck_forward.7} parent=0 // loop_footer
    %s13 = sadd.s32 1, %s9
  $region7: #{bottleneck_forward.7} parent=0 // loop_footer_branch
    %8 = sbr.rel target = $region3
  $region8: #{bottleneck_forward.7} parent=0 // loop_exit
    _

// kernel: bottleneck_forward.6
$region0: #{bottleneck_forward.6}
  #allocation0 [shape = 'u32[]', space=smem, size = 0x4, offset = 0x4, fixed_abs, tag = 'smem constant byte address 0x4 - core index']
  #allocation1 [shape = 'u32[144,128]{1,0:T(1,128)}', space=vmem, size = 0x12000, scoped, tag = 'internal scratch']
  %s0 = inlined_call_operand.vmem [shape: f32[512,128], index: 0, kind: input, shape index: {}]
  %s1 = inlined_call_operand.vmem [shape: f32[2,128], index: 1, kind: input, shape index: {}]
  %s2 = inlined_call_operand.vmem [shape: f32[128,128], index: 2, kind: input, shape index: {}]
  %s3 = inlined_call_operand.vmem [shape: f32[512,128], index: 3, kind: output, shape index: {0}]
  %s4 = inlined_call_operand.vmem [shape: f32[2,2,128], index: 4, kind: output, shape index: {1}]
  %5 = xla_tuple %s3, %s4
  %s6 = sld [smem:[#allocation0]]
  $region53: #{bottleneck_forward.6} parent=0
    _
  %s8 = ssub.s32 1, %s6
  %s9 = scalar_select 0, %s8, %s6
  loop: start=0, step=1, limit=4
  $region2: #{bottleneck_forward.6} parent=0 // loop_pre_header
    _
  $region3: #{bottleneck_forward.6} parent=0 // loop_header
    %s11 = sphi 0, %s15
    %p12 = scmp.ge.s32.totalorder %s11, 4
    %s21 = sphi 0, %s23
    %s24 = sphi 0, %s21
    %s25 = sphi 0, %s24
    %s41 = sphi 0, %s25
    %s45 = sphi 0, %s45
    %s47 = sphi 0, %s45
    %s48 = sphi 0, %s47
    %s62 = sphi 0, %s48
    %s66 = sphi 0, %s66
    %s68 = sphi 0, %s66
    %s69 = sphi 0, %s68
    %s83 = sphi 0, %s69
    %s89 = sphi 0, %s91
    %s92 = sphi 0, %s89
    %s93 = sphi 0, %s92
    %s109 = sphi 0, %s93
    %s115 = sphi 0, %s117
    %s118 = sphi 0, %s115
    %s119 = sphi 0, %s118
    %s135 = sphi 0, %s119
  $region4: #{bottleneck_forward.6} parent=0 // loop_header_branch
    %14 = sbr.rel (%p12) target = $region8
  $region5: #{bottleneck_forward.6} parent=0 // loop_body
    %s16 = ssub.s32 %s11, 1
    %s17 = ssub.s32 %s11, 2
    %s18 = sadd.s32 %s11, 1
    %s19 = ssub.s32 %s11, %s18
    %p20 = scmp.eq.s32.totalorder %s19, 0
    %s22 = sadd.s32 %s21, 1
    %s23 = scalar_select %p20, %s21, %s22
    %p26 = pneg %p20
    %p27 = scmp.eq.s32.totalorder %s11, 1
    %p28 = por %p26, %p27
    %p29 = scmp.ne.s32.totalorder %s21, %s24
    %p30 = scmp.eq.s32.totalorder %s11, 0
    %p31 = por %p29, %p30
    %p32 = scmp.ne.s32.totalorder %s21, %s24
    %p33 = scmp.eq.s32.totalorder %s16, 1
    %p34 = por %p32, %p33
    %p35 = scmp.ne.s32.totalorder %s24, %s25
    %p36 = scmp.eq.s32.totalorder %s16, 0
    %p37 = por %p35, %p36
    %p38 = scmp.ne.s32.totalorder %s24, %s25
    %p39 = scmp.eq.s32.totalorder %s17, 1
    %p40 = por %p38, %p39
    %p42 = scmp.ne.s32.totalorder %s25, %s41
    %p43 = scmp.eq.s32.totalorder %s17, 0
    %p44 = por %p42, %p43
    %s46 = sadd.s32 %s45, 1
    %p49 = scmp.eq.s32.totalorder %s11, 1
    %p50 = scmp.ne.s32.totalorder %s45, %s47
    %p51 = scmp.eq.s32.totalorder %s11, 0
    %p52 = por %p50, %p51
    %p53 = scmp.ne.s32.totalorder %s45, %s47
    %p54 = scmp.eq.s32.totalorder %s16, 1
    %p55 = por %p53, %p54
    %p56 = scmp.ne.s32.totalorder %s47, %s48
    %p57 = scmp.eq.s32.totalorder %s16, 0
    %p58 = por %p56, %p57
    %p59 = scmp.ne.s32.totalorder %s47, %s48
    %p60 = scmp.eq.s32.totalorder %s17, 1
    %p61 = por %p59, %p60
    %p63 = scmp.ne.s32.totalorder %s48, %s62
    %p64 = scmp.eq.s32.totalorder %s17, 0
    %p65 = por %p63, %p64
    %s67 = sadd.s32 %s66, 1
    %p70 = scmp.eq.s32.totalorder %s11, 1
    %p71 = scmp.ne.s32.totalorder %s66, %s68
    %p72 = scmp.eq.s32.totalorder %s11, 0
    %p73 = por %p71, %p72
    %p74 = scmp.ne.s32.totalorder %s66, %s68
    %p75 = scmp.eq.s32.totalorder %s16, 1
    %p76 = por %p74, %p75
    %p77 = scmp.ne.s32.totalorder %s68, %s69
    %p78 = scmp.eq.s32.totalorder %s16, 0
    %p79 = por %p77, %p78
    %p80 = scmp.ne.s32.totalorder %s68, %s69
    %p81 = scmp.eq.s32.totalorder %s17, 1
    %p82 = por %p80, %p81
    %p84 = scmp.ne.s32.totalorder %s69, %s83
    %p85 = scmp.eq.s32.totalorder %s17, 0
    %p86 = por %p84, %p85
    %s87 = ssub.s32 %s11, %s18
    %p88 = scmp.eq.s32.totalorder %s87, 0
    %s90 = sadd.s32 %s89, 1
    %s91 = scalar_select %p88, %s89, %s90
    %p94 = pneg %p88
    %p95 = scmp.eq.s32.totalorder %s11, 1
    %p96 = por %p94, %p95
    %p97 = scmp.ne.s32.totalorder %s89, %s92
    %p98 = scmp.eq.s32.totalorder %s11, 0
    %p99 = por %p97, %p98
    %p100 = scmp.ne.s32.totalorder %s89, %s92
    %p101 = scmp.eq.s32.totalorder %s16, 1
    %p102 = por %p100, %p101
    %p103 = scmp.ne.s32.totalorder %s92, %s93
    %p104 = scmp.eq.s32.totalorder %s16, 0
    %p105 = por %p103, %p104
    %p106 = scmp.ne.s32.totalorder %s92, %s93
    %p107 = scmp.eq.s32.totalorder %s17, 1
    %p108 = por %p106, %p107
    %p110 = scmp.ne.s32.totalorder %s93, %s109
    %p111 = scmp.eq.s32.totalorder %s17, 0
    %p112 = por %p110, %p111
    %s113 = ssub.s32 %s11, %s18
    %p114 = scmp.eq.s32.totalorder %s113, 0
    %s116 = sadd.s32 %s115, 1
    %s117 = scalar_select %p114, %s115, %s116
    %p120 = pneg %p114
    %p121 = scmp.eq.s32.totalorder %s11, 1
    %p122 = por %p120, %p121
    %p123 = scmp.ne.s32.totalorder %s115, %s118
    %p124 = scmp.eq.s32.totalorder %s11, 0
    %p125 = por %p123, %p124
    %p126 = scmp.ne.s32.totalorder %s115, %s118
    %p127 = scmp.eq.s32.totalorder %s16, 1
    %p128 = por %p126, %p127
    %p129 = scmp.ne.s32.totalorder %s118, %s119
    %p130 = scmp.eq.s32.totalorder %s16, 0
    %p131 = por %p129, %p130
    %p132 = scmp.ne.s32.totalorder %s118, %s119
    %p133 = scmp.eq.s32.totalorder %s17, 1
    %p134 = por %p132, %p133
    %p136 = scmp.ne.s32.totalorder %s119, %s135
    %p137 = scmp.eq.s32.totalorder %s17, 0
    %p138 = por %p136, %p137
    %p139 = scmp.le.s32.totalorder 1, %s11
    %p140 = scmp.lt.s32.totalorder %s11, 3
    %p141 = pnand %p139, %p140
    %p142 = pneg %p141
    // Predicated region
    $region9: #{bottleneck_forward.6} parent=5 // pred_check
      _
    $region10: #{bottleneck_forward.6} parent=5 // pred_check_branch
      %144 = sbr.rel (%p141) target = $region12
    $region11: #{bottleneck_forward.6} parent=5 // pred_region
      %s145 = ssub.s32 %s11, 1
      // Predicated region
      $region13: #{bottleneck_forward.6} parent=11 // pred_check
        %p146 = pneg %p58
      $region14: #{bottleneck_forward.6} parent=11 // pred_check_branch
        %148 = sbr.rel (%p146) target = $region16
      $region15: #{bottleneck_forward.6} parent=11 // pred_region
        _
      $region16: #{bottleneck_forward.6} parent=11 // pred_fallthru
        _
      // Predicated region
      $region17: #{bottleneck_forward.6} parent=11 // pred_check
        %p149 = pneg %p79
      $region18: #{bottleneck_forward.6} parent=11 // pred_check_branch
        %151 = sbr.rel (%p149) target = $region20
      $region19: #{bottleneck_forward.6} parent=11 // pred_region
        _
      $region20: #{bottleneck_forward.6} parent=11 // pred_fallthru
        _
    $region12: #{bottleneck_forward.6} parent=5 // pred_fallthru
      _
    %p152 = scmp.lt.s32.totalorder %s11, 2
    // Predicated region
    $region21: #{bottleneck_forward.6} parent=5 // pred_check
      %p153 = pneg %p152
    $region22: #{bottleneck_forward.6} parent=5 // pred_check_branch
      %155 = sbr.rel (%p153) target = $region24
    $region23: #{bottleneck_forward.6} parent=5 // pred_region
      // Predicated region
      $region25: #{bottleneck_forward.6} parent=23 // pred_check
        %p156 = pneg %p31
      $region26: #{bottleneck_forward.6} parent=23 // pred_check_branch
        %158 = sbr.rel (%p156) target = $region28
      $region27: #{bottleneck_forward.6} parent=23 // pred_region
        %s159 = smul.u32 32, %s11
        %p160 = scmp.lt.s32.totalorder %s159, 63
        %s161 = scalar_select %p160, %s159, 63
        %s162 = smul.addr %s161, 8
        %s163 = scalar_lea.vmem %s0, %s162
        %s164 = smul.u32 32, %s11
      $region28: #{bottleneck_forward.6} parent=23 // pred_fallthru
        _
    $region24: #{bottleneck_forward.6} parent=5 // pred_fallthru
      _
    %p165 = scmp.le.s32.totalorder 1, %s11
    %p166 = scmp.lt.s32.totalorder %s11, 3
    %p167 = pnand %p165, %p166
    %p168 = pneg %p167
    // Predicated region
    $region29: #{bottleneck_forward.6} parent=5 // pred_check
      _
    $region30: #{bottleneck_forward.6} parent=5 // pred_check_branch
      %170 = sbr.rel (%p167) target = $region32
    $region31: #{bottleneck_forward.6} parent=5 // pred_region
      %s171 = ssub.s32 %s11, 1
      %s172 = smul.u32 32, %s16
      %p173 = scmp.lt.s32.totalorder %s172, 63
      %s174 = scalar_select %p173, %s172, 63
      %s175 = smul.addr %s174, 8
      %s176 = scalar_lea.vmem %s0, %s175
      %p177 = pneg %p37
      %p178 = pneg %p34
      %p179 = pneg %p58
      %p180 = pneg %p55
      %p181 = pneg %p79
      %p182 = pneg %p76
      %p183 = pneg %p105
      %p184 = pneg %p102
      %s185 = smul.u32 32, %s16
      %p186 = scmp.lt.s32.totalorder %s185, 63
      %s187 = scalar_select %p186, %s185, 63
      %s188 = smul.addr %s187, 8
      %s189 = scalar_lea.vmem %s3, %s188
      %p190 = pneg %p131
      %p191 = pneg %p128
      %p192 = scmp.lt.s32.totalorder %s16, 1
      %s193 = scalar_select %p192, %s16, 1
      %s194 = smul.addr %s193, 2
      %s195 = scalar_lea.vmem %s4, %s194
      %s196 = smul.u32 32, %s16
      %p197 = scmp.lt.s32.totalorder %s196, 63
      %s198 = scalar_select %p197, %s196, 63
      %s199 = smul.addr %s198, 8
      %s200 = scalar_lea.vmem %s0, %s199
      %s201 = smul.u32 32, %s16
      %s202 = smul.u32 32, %s16
      %p203 = scmp.lt.s32.totalorder %s202, 63
      %s204 = scalar_select %p203, %s202, 63
      %s205 = smul.addr %s204, 8
      %s206 = scalar_lea.vmem %s3, %s205
      %s207 = smul.u32 32, %s16
      %p208 = scmp.lt.s32.totalorder %s16, 1
      %s209 = scalar_select %p208, %s16, 1
      %s210 = smul.addr %s209, 2
      %s211 = scalar_lea.vmem %s4, %s210
      %v212 = vld [vmem:[%s200] sm:$0xff]
      %v213 = vld [vmem:[%s200 + $0x8] sm:$0xff]
      %v214 = vld [vmem:[%s200 + $0x10] sm:$0xff]
      %v215 = vld [vmem:[%s200 + $0x18] sm:$0xff]
      %v216 = vld [vmem:[%s200 + $0x20] sm:$0xff]
      %v217 = vld [vmem:[%s200 + $0x28] sm:$0xff]
      %v218 = vld [vmem:[%s200 + $0x30] sm:$0xff]
      %v219 = vld [vmem:[%s200 + $0x38] sm:$0xff]
      %v220 = vld [vmem:[%s200 + $0x40] sm:$0xff]
      %v221 = vld [vmem:[%s200 + $0x48] sm:$0xff]
      %v222 = vld [vmem:[%s200 + $0x50] sm:$0xff]
      %v223 = vld [vmem:[%s200 + $0x58] sm:$0xff]
      %v224 = vld [vmem:[%s200 + $0x60] sm:$0xff]
      %v225 = vld [vmem:[%s200 + $0x68] sm:$0xff]
      %v226 = vld [vmem:[%s200 + $0x70] sm:$0xff]
      %v227 = vld [vmem:[%s200 + $0x78] sm:$0xff]
      %v228 = vld [vmem:[%s200 + $0x80] sm:$0xff]
      %v229 = vld [vmem:[%s200 + $0x88] sm:$0xff]
      %v230 = vld [vmem:[%s200 + $0x90] sm:$0xff]
      %v231 = vld [vmem:[%s200 + $0x98] sm:$0xff]
      %v232 = vld [vmem:[%s200 + $0xa0] sm:$0xff]
      %v233 = vld [vmem:[%s200 + $0xa8] sm:$0xff]
      %v234 = vld [vmem:[%s200 + $0xb0] sm:$0xff]
      %v235 = vld [vmem:[%s200 + $0xb8] sm:$0xff]
      %v236 = vld [vmem:[%s200 + $0xc0] sm:$0xff]
      %v237 = vld [vmem:[%s200 + $0xc8] sm:$0xff]
      %v238 = vld [vmem:[%s200 + $0xd0] sm:$0xff]
      %v239 = vld [vmem:[%s200 + $0xd8] sm:$0xff]
      %v240 = vld [vmem:[%s200 + $0xe0] sm:$0xff]
      %v241 = vld [vmem:[%s200 + $0xe8] sm:$0xff]
      %v242 = vld [vmem:[%s200 + $0xf0] sm:$0xff]
      %v243 = vld [vmem:[%s200 + $0xf8] sm:$0xff]
      %v244 = vld [vmem:[%s1] sm:$0x3]
      %v245 = vlaneseq
      %v246 = vshrl.u32 %v245, 7
      %v247 = vsub.s32 0, %v246
      %v248 = vrot.slane %v244, %v247
      %v249 = vmul.f32 %v212, %v248
      %v250 = vmul.f32 %v213, %v248
      %v251 = vmul.f32 %v214, %v248
      %v252 = vmul.f32 %v215, %v248
      %v253 = vmul.f32 %v216, %v248
      %v254 = vmul.f32 %v217, %v248
      %v255 = vmul.f32 %v218, %v248
      %v256 = vmul.f32 %v219, %v248
      %v257 = vmul.f32 %v220, %v248
      %v258 = vmul.f32 %v221, %v248
      %v259 = vmul.f32 %v222, %v248
      %v260 = vmul.f32 %v223, %v248
      %v261 = vmul.f32 %v224, %v248
      %v262 = vmul.f32 %v225, %v248
      %v263 = vmul.f32 %v226, %v248
      %v264 = vmul.f32 %v227, %v248
      %v265 = vmul.f32 %v228, %v248
      %v266 = vmul.f32 %v229, %v248
      %v267 = vmul.f32 %v230, %v248
      %v268 = vmul.f32 %v231, %v248
      %v269 = vmul.f32 %v232, %v248
      %v270 = vmul.f32 %v233, %v248
      %v271 = vmul.f32 %v234, %v248
      %v272 = vmul.f32 %v235, %v248
      %v273 = vmul.f32 %v236, %v248
      %v274 = vmul.f32 %v237, %v248
      %v275 = vmul.f32 %v238, %v248
      %v276 = vmul.f32 %v239, %v248
      %v277 = vmul.f32 %v240, %v248
      %v278 = vmul.f32 %v241, %v248
      %v279 = vmul.f32 %v242, %v248
      %v280 = vmul.f32 %v243, %v248
      %v281 = vlaneseq
      %v282 = vshrl.u32 %v281, 7
      %v283 = vsub.s32 1, %v282
      %v284 = vrot.slane %v244, %v283
      %v285 = vadd.f32 %v249, %v284
      %v286 = vadd.f32 %v250, %v284
      %v287 = vadd.f32 %v251, %v284
      %v288 = vadd.f32 %v252, %v284
      %v289 = vadd.f32 %v253, %v284
      %v290 = vadd.f32 %v254, %v284
      %v291 = vadd.f32 %v255, %v284
      %v292 = vadd.f32 %v256, %v284
      %v293 = vadd.f32 %v257, %v284
      %v294 = vadd.f32 %v258, %v284
      %v295 = vadd.f32 %v259, %v284
      %v296 = vadd.f32 %v260, %v284
      %v297 = vadd.f32 %v261, %v284
      %v298 = vadd.f32 %v262, %v284
      %v299 = vadd.f32 %v263, %v284
      %v300 = vadd.f32 %v264, %v284
      %v301 = vadd.f32 %v265, %v284
      %v302 = vadd.f32 %v266, %v284
      %v303 = vadd.f32 %v267, %v284
      %v304 = vadd.f32 %v268, %v284
      %v305 = vadd.f32 %v269, %v284
      %v306 = vadd.f32 %v270, %v284
      %v307 = vadd.f32 %v271, %v284
      %v308 = vadd.f32 %v272, %v284
      %v309 = vadd.f32 %v273, %v284
      %v310 = vadd.f32 %v274, %v284
      %v311 = vadd.f32 %v275, %v284
      %v312 = vadd.f32 %v276, %v284
      %v313 = vadd.f32 %v277, %v284
      %v314 = vadd.f32 %v278, %v284
      %v315 = vadd.f32 %v279, %v284
      %v316 = vadd.f32 %v280, %v284
      %v317 = vmax.f32 %v285, 0.0
      %v318 = vmax.f32 %v286, 0.0
      %v319 = vmax.f32 %v287, 0.0
      %v320 = vmax.f32 %v288, 0.0
      %v321 = vmax.f32 %v289, 0.0
      %v322 = vmax.f32 %v290, 0.0
      %v323 = vmax.f32 %v291, 0.0
      %v324 = vmax.f32 %v292, 0.0
      %v325 = vmax.f32 %v293, 0.0
      %v326 = vmax.f32 %v294, 0.0
      %v327 = vmax.f32 %v295, 0.0
      %v328 = vmax.f32 %v296, 0.0
      %v329 = vmax.f32 %v297, 0.0
      %v330 = vmax.f32 %v298, 0.0
      %v331 = vmax.f32 %v299, 0.0
      %v332 = vmax.f32 %v300, 0.0
      %v333 = vmax.f32 %v301, 0.0
      %v334 = vmax.f32 %v302, 0.0
      %v335 = vmax.f32 %v303, 0.0
      %v336 = vmax.f32 %v304, 0.0
      %v337 = vmax.f32 %v305, 0.0
      %v338 = vmax.f32 %v306, 0.0
      %v339 = vmax.f32 %v307, 0.0
      %v340 = vmax.f32 %v308, 0.0
      %v341 = vmax.f32 %v309, 0.0
      %v342 = vmax.f32 %v310, 0.0
      %v343 = vmax.f32 %v311, 0.0
      %v344 = vmax.f32 %v312, 0.0
      %v345 = vmax.f32 %v313, 0.0
      %v346 = vmax.f32 %v314, 0.0
      %v347 = vmax.f32 %v315, 0.0
      %v348 = vmax.f32 %v316, 0.0
      %v349 = vld [vmem:[%s2] sm:$0xff]
      %v350 = vld [vmem:[%s2 + $0x8] sm:$0xff]
      %v351 = vld [vmem:[%s2 + $0x10] sm:$0xff]
      %v352 = vld [vmem:[%s2 + $0x18] sm:$0xff]
      %v353 = vld [vmem:[%s2 + $0x20] sm:$0xff]
      %v354 = vld [vmem:[%s2 + $0x28] sm:$0xff]
      %v355 = vld [vmem:[%s2 + $0x30] sm:$0xff]
      %v356 = vld [vmem:[%s2 + $0x38] sm:$0xff]
      %v357 = vld [vmem:[%s2 + $0x40] sm:$0xff]
      %v358 = vld [vmem:[%s2 + $0x48] sm:$0xff]
      %v359 = vld [vmem:[%s2 + $0x50] sm:$0xff]
      %v360 = vld [vmem:[%s2 + $0x58] sm:$0xff]
      %v361 = vld [vmem:[%s2 + $0x60] sm:$0xff]
      %v362 = vld [vmem:[%s2 + $0x68] sm:$0xff]
      %v363 = vld [vmem:[%s2 + $0x70] sm:$0xff]
      %v364 = vld [vmem:[%s2 + $0x78] sm:$0xff]
      %365 = vmatprep.subr.mxu0 0.0
      %366 = vmatpush1.msra.mxu0 %v349
      %367 = vmatprep.subr.mxu0 0.0
      %368 = vmatpush1.msra.mxu0 %v350
      %369 = vmatprep.subr.mxu0 0.0
      %370 = vmatpush1.msra.mxu0 %v351
      %371 = vmatprep.subr.mxu0 0.0
      %372 = vmatpush1.msra.mxu0 %v352
      %373 = vmatprep.subr.mxu0 0.0
      %374 = vmatpush1.msra.mxu0 %v353
      %375 = vmatprep.subr.mxu0 0.0
      %376 = vmatpush1.msra.mxu0 %v354
      %377 = vmatprep.subr.mxu0 0.0
      %378 = vmatpush1.msra.mxu0 %v355
      %379 = vmatprep.subr.mxu0 0.0
      %380 = vmatpush1.msra.mxu0 %v356
      %381 = vmatprep.subr.mxu0 0.0
      %382 = vmatpush1.msra.mxu0 %v357
      %383 = vmatprep.subr.mxu0 0.0
      %384 = vmatpush1.msra.mxu0 %v358
      %385 = vmatprep.subr.mxu0 0.0
      %386 = vmatpush1.msra.mxu0 %v359
      %387 = vmatprep.subr.mxu0 0.0
      %388 = vmatpush1.msra.mxu0 %v360
      %389 = vmatprep.subr.mxu0 0.0
      %390 = vmatpush1.msra.mxu0 %v361
      %391 = vmatprep.subr.mxu0 0.0
      %392 = vmatpush1.msra.mxu0 %v362
      %393 = vmatprep.subr.mxu0 0.0
      %394 = vmatpush1.msra.mxu0 %v363
      %395 = vmatprep.subr.mxu0 0.0
      %396 = vmatpush1.msra.mxu0 %v364
      %397 = vmatprep.subr.mxu0 0.0
      %398 = vmatpush1.msra.mxu0 0.0
      %399 = vmatprep.subr.mxu0 0.0
      %400 = vmatpush1.msra.mxu0 0.0
      %401 = vmatprep.subr.mxu0 0.0
      %402 = vmatpush1.msra.mxu0 0.0
      %403 = vmatprep.subr.mxu0 0.0
      %404 = vmatpush1.msra.mxu0 0.0
      %405 = vmatprep.subr.mxu0 0.0
      %406 = vmatpush1.msra.mxu0 0.0
      %407 = vmatprep.subr.mxu0 0.0
      %408 = vmatpush1.msra.mxu0 0.0
      %409 = vmatprep.subr.mxu0 0.0
      %410 = vmatpush1.msra.mxu0 0.0
      %411 = vmatprep.subr.mxu0 0.0
      %412 = vmatpush1.msra.mxu0 0.0
      %413 = vmatprep.subr.mxu0 0.0
      %414 = vmatpush1.msra.mxu0 0.0
      %415 = vmatprep.subr.mxu0 0.0
      %416 = vmatpush1.msra.mxu0 0.0
      %417 = vmatprep.subr.mxu0 0.0
      %418 = vmatpush1.msra.mxu0 0.0
      %419 = vmatprep.subr.mxu0 0.0
      %420 = vmatpush1.msra.mxu0 0.0
      %421 = vmatprep.subr.mxu0 0.0
      %422 = vmatpush1.msra.mxu0 0.0
      %423 = vmatprep.subr.mxu0 0.0
      %424 = vmatpush1.msra.mxu0 0.0
      %425 = vmatprep.subr.mxu0 0.0
      %426 = vmatpush1.msra.mxu0 0.0
      %427 = vmatprep.subr.mxu0 0.0
      %428 = vmatpush1.msra.mxu0 0.0
      %429 = vmatprep.mubr.f32.mxu0 0.0
      %430 = vmatmul.mubr.f32.gmra.mrb[0].mxu0 %v317
      %v431 = vpop.f32.mrb[0].mxu0
      %v432 = vadd.f32 0.0, %v431
      %v433 = vpop.f32.mrb[0].mxu0
      %434 = vmatprep.mubr.f32.mxu0 0.0
      %435 = vmatmul.mubr.f32.gmra.mrb[0].mxu0 %v318
      %v436 = vpop.f32.mrb[0].mxu0
      %v437 = vadd.f32 0.0, %v436
      %v438 = vpop.f32.mrb[0].mxu0
      %439 = vmatprep.mubr.f32.mxu0 0.0
      %440 = vmatmul.mubr.f32.gmra.mrb[0].mxu0 %v319
      %v441 = vpop.f32.mrb[0].mxu0
      %v442 = vadd.f32 0.0, %v441
      %v443 = vpop.f32.mrb[0].mxu0
      %444 = vmatprep.mubr.f32.mxu0 0.0
      %445 = vmatmul.mubr.f32.gmra.mrb[0].mxu0 %v320
      %v446 = vpop.f32.mrb[0].mxu0
      %v447 = vadd.f32 0.0, %v446
      %v448 = vpop.f32.mrb[0].mxu0
      %449 = vmatprep.mubr.f32.mxu0 0.0
      %450 = vmatmul.mubr.f32.gmra.mrb[0].mxu0 %v321
      %v451 = vpop.f32.mrb[0].mxu0
      %v452 = vadd.f32 0.0, %v451
      %v453 = vpop.f32.mrb[0].mxu0
      %454 = vmatprep.mubr.f32.mxu0 0.0
      %455 = vmatmul.mubr.f32.gmra.mrb[0].mxu0 %v322
      %v456 = vpop.f32.mrb[0].mxu0
      %v457 = vadd.f32 0.0, %v456
      %v458 = vpop.f32.mrb[0].mxu0
      %459 = vmatprep.mubr.f32.mxu0 0.0
      %460 = vmatmul.mubr.f32.gmra.mrb[0].mxu0 %v323
      %v461 = vpop.f32.mrb[0].mxu0
      %v462 = vadd.f32 0.0, %v461
      %v463 = vpop.f32.mrb[0].mxu0
      %464 = vmatprep.mubr.f32.mxu0 0.0
      %465 = vmatmul.mubr.f32.gmra.mrb[0].mxu0 %v324
      %v466 = vpop.f32.mrb[0].mxu0
      %v467 = vadd.f32 0.0, %v466
      %v468 = vpop.f32.mrb[0].mxu0
      %469 = vmatprep.mubr.f32.mxu0 0.0
      %470 = vmatmul.mubr.f32.gmra.mrb[0].mxu0 %v325
      %v471 = vpop.f32.mrb[0].mxu0
      %v472 = vadd.f32 0.0, %v471
      %v473 = vpop.f32.mrb[0].mxu0
      %474 = vmatprep.mubr.f32.mxu0 0.0
      %475 = vmatmul.mubr.f32.gmra.mrb[0].mxu0 %v326
      %v476 = vpop.f32.mrb[0].mxu0
      %v477 = vadd.f32 0.0, %v476
      %v478 = vpop.f32.mrb[0].mxu0
      %479 = vmatprep.mubr.f32.mxu0 0.0
      %480 = vmatmul.mubr.f32.gmra.mrb[0].mxu0 %v327
      %v481 = vpop.f32.mrb[0].mxu0
      %v482 = vadd.f32 0.0, %v481
      %v483 = vpop.f32.mrb[0].mxu0
      %484 = vmatprep.mubr.f32.mxu0 0.0
      %485 = vmatmul.mubr.f32.gmra.mrb[0].mxu0 %v328
      %v486 = vpop.f32.mrb[0].mxu0
      %v487 = vadd.f32 0.0, %v486
      %v488 = vpop.f32.mrb[0].mxu0
      %489 = vmatprep.mubr.f32.mxu0 0.0
      %490 = vmatmul.mubr.f32.gmra.mrb[0].mxu0 %v329
      %v491 = vpop.f32.mrb[0].mxu0
      %v492 = vadd.f32 0.0, %v491
      %v493 = vpop.f32.mrb[0].mxu0
      %494 = vmatprep.mubr.f32.mxu0 0.0
      %495 = vmatmul.mubr.f32.gmra.mrb[0].mxu0 %v330
      %v496 = vpop.f32.mrb[0].mxu0
      %v497 = vadd.f32 0.0, %v496
      %v498 = vpop.f32.mrb[0].mxu0
      %499 = vmatprep.mubr.f32.mxu0 0.0
      %500 = vmatmul.mubr.f32.gmra.mrb[0].mxu0 %v331
      %v501 = vpop.f32.mrb[0].mxu0
      %v502 = vadd.f32 0.0, %v501
      %v503 = vpop.f32.mrb[0].mxu0
      %504 = vmatprep.mubr.f32.mxu0 0.0
      %505 = vmatmul.mubr.f32.gmra.mrb[0].mxu0 %v332
      %v506 = vpop.f32.mrb[0].mxu0
      %v507 = vadd.f32 0.0, %v506
      %v508 = vpop.f32.mrb[0].mxu0
      %509 = vmatprep.mubr.f32.mxu0 0.0
      %510 = vmatmul.mubr.f32.gmra.mrb[0].mxu0 %v333
      %v511 = vpop.f32.mrb[0].mxu0
      %v512 = vadd.f32 0.0, %v511
      %v513 = vpop.f32.mrb[0].mxu0
      %514 = vmatprep.mubr.f32.mxu0 0.0
      %515 = vmatmul.mubr.f32.gmra.mrb[0].mxu0 %v334
      %v516 = vpop.f32.mrb[0].mxu0
      %v517 = vadd.f32 0.0, %v516
      %v518 = vpop.f32.mrb[0].mxu0
      %519 = vmatprep.mubr.f32.mxu0 0.0
      %520 = vmatmul.mubr.f32.gmra.mrb[0].mxu0 %v335
      %v521 = vpop.f32.mrb[0].mxu0
      %v522 = vadd.f32 0.0, %v521
      %v523 = vpop.f32.mrb[0].mxu0
      %524 = vmatprep.mubr.f32.mxu0 0.0
      %525 = vmatmul.mubr.f32.gmra.mrb[0].mxu0 %v336
      %v526 = vpop.f32.mrb[0].mxu0
      %v527 = vadd.f32 0.0, %v526
      %v528 = vpop.f32.mrb[0].mxu0
      %529 = vmatprep.mubr.f32.mxu0 0.0
      %530 = vmatmul.mubr.f32.gmra.mrb[0].mxu0 %v337
      %v531 = vpop.f32.mrb[0].mxu0
      %v532 = vadd.f32 0.0, %v531
      %v533 = vpop.f32.mrb[0].mxu0
      %534 = vmatprep.mubr.f32.mxu0 0.0
      %535 = vmatmul.mubr.f32.gmra.mrb[0].mxu0 %v338
      %v536 = vpop.f32.mrb[0].mxu0
      %v537 = vadd.f32 0.0, %v536
      %v538 = vpop.f32.mrb[0].mxu0
      %539 = vmatprep.mubr.f32.mxu0 0.0
      %540 = vmatmul.mubr.f32.gmra.mrb[0].mxu0 %v339
      %v541 = vpop.f32.mrb[0].mxu0
      %v542 = vadd.f32 0.0, %v541
      %v543 = vpop.f32.mrb[0].mxu0
      %544 = vmatprep.mubr.f32.mxu0 0.0
      %545 = vmatmul.mubr.f32.gmra.mrb[0].mxu0 %v340
      %v546 = vpop.f32.mrb[0].mxu0
      %v547 = vadd.f32 0.0, %v546
      %v548 = vpop.f32.mrb[0].mxu0
      %549 = vmatprep.mubr.f32.mxu0 0.0
      %550 = vmatmul.mubr.f32.gmra.mrb[0].mxu0 %v341
      %v551 = vpop.f32.mrb[0].mxu0
      %v552 = vadd.f32 0.0, %v551
      %v553 = vpop.f32.mrb[0].mxu0
      %554 = vmatprep.mubr.f32.mxu0 0.0
      %555 = vmatmul.mubr.f32.gmra.mrb[0].mxu0 %v342
      %v556 = vpop.f32.mrb[0].mxu0
      %v557 = vadd.f32 0.0, %v556
      %v558 = vpop.f32.mrb[0].mxu0
      %559 = vmatprep.mubr.f32.mxu0 0.0
      %560 = vmatmul.mubr.f32.gmra.mrb[0].mxu0 %v343
      %v561 = vpop.f32.mrb[0].mxu0
      %v562 = vadd.f32 0.0, %v561
      %v563 = vpop.f32.mrb[0].mxu0
      %564 = vmatprep.mubr.f32.mxu0 0.0
      %565 = vmatmul.mubr.f32.gmra.mrb[0].mxu0 %v344
      %v566 = vpop.f32.mrb[0].mxu0
      %v567 = vadd.f32 0.0, %v566
      %v568 = vpop.f32.mrb[0].mxu0
      %569 = vmatprep.mubr.f32.mxu0 0.0
      %570 = vmatmul.mubr.f32.gmra.mrb[0].mxu0 %v345
      %v571 = vpop.f32.mrb[0].mxu0
      %v572 = vadd.f32 0.0, %v571
      %v573 = vpop.f32.mrb[0].mxu0
      %574 = vmatprep.mubr.f32.mxu0 0.0
      %575 = vmatmul.mubr.f32.gmra.mrb[0].mxu0 %v346
      %v576 = vpop.f32.mrb[0].mxu0
      %v577 = vadd.f32 0.0, %v576
      %v578 = vpop.f32.mrb[0].mxu0
      %579 = vmatprep.mubr.f32.mxu0 0.0
      %580 = vmatmul.mubr.f32.gmra.mrb[0].mxu0 %v347
      %v581 = vpop.f32.mrb[0].mxu0
      %v582 = vadd.f32 0.0, %v581
      %v583 = vpop.f32.mrb[0].mxu0
      %584 = vmatprep.mubr.f32.mxu0 0.0
      %585 = vmatmul.mubr.f32.gmra.mrb[0].mxu0 %v348
      %v586 = vpop.f32.mrb[0].mxu0
      %v587 = vadd.f32 0.0, %v586
      %v588 = vpop.f32.mrb[0].mxu0
      %589 = vdwg.mxu0
      %590 = vst [vmem:[%s206] sm:$0xff] %v432
      %591 = vst [vmem:[%s206 + $0x8] sm:$0xff] %v437
      %592 = vst [vmem:[%s206 + $0x10] sm:$0xff] %v442
      %593 = vst [vmem:[%s206 + $0x18] sm:$0xff] %v447
      %594 = vst [vmem:[%s206 + $0x20] sm:$0xff] %v452
      %595 = vst [vmem:[%s206 + $0x28] sm:$0xff] %v457
      %596 = vst [vmem:[%s206 + $0x30] sm:$0xff] %v462
      %597 = vst [vmem:[%s206 + $0x38] sm:$0xff] %v467
      %598 = vst [vmem:[%s206 + $0x40] sm:$0xff] %v472
      %599 = vst [vmem:[%s206 + $0x48] sm:$0xff] %v477
      %600 = vst [vmem:[%s206 + $0x50] sm:$0xff] %v482
      %601 = vst [vmem:[%s206 + $0x58] sm:$0xff] %v487
      %602 = vst [vmem:[%s206 + $0x60] sm:$0xff] %v492
      %603 = vst [vmem:[%s206 + $0x68] sm:$0xff] %v497
      %604 = vst [vmem:[%s206 + $0x70] sm:$0xff] %v502
      %605 = vst [vmem:[%s206 + $0x78] sm:$0xff] %v507
      %606 = vst [vmem:[%s206 + $0x80] sm:$0xff] %v512
      %607 = vst [vmem:[%s206 + $0x88] sm:$0xff] %v517
      %608 = vst [vmem:[%s206 + $0x90] sm:$0xff] %v522
      %609 = vst [vmem:[%s206 + $0x98] sm:$0xff] %v527
      %610 = vst [vmem:[%s206 + $0xa0] sm:$0xff] %v532
      %611 = vst [vmem:[%s206 + $0xa8] sm:$0xff] %v537
      %612 = vst [vmem:[%s206 + $0xb0] sm:$0xff] %v542
      %613 = vst [vmem:[%s206 + $0xb8] sm:$0xff] %v547
      %614 = vst [vmem:[%s206 + $0xc0] sm:$0xff] %v552
      %615 = vst [vmem:[%s206 + $0xc8] sm:$0xff] %v557
      %616 = vst [vmem:[%s206 + $0xd0] sm:$0xff] %v562
      %617 = vst [vmem:[%s206 + $0xd8] sm:$0xff] %v567
      %618 = vst [vmem:[%s206 + $0xe0] sm:$0xff] %v572
      %619 = vst [vmem:[%s206 + $0xe8] sm:$0xff] %v577
      %620 = vst [vmem:[%s206 + $0xf0] sm:$0xff] %v582
      %621 = vst [vmem:[%s206 + $0xf8] sm:$0xff] %v587
      %v622 = vadd.f32 %v432, %v437
      %v623 = vadd.f32 %v622, %v442
      %v624 = vadd.f32 %v623, %v447
      %v625 = vadd.f32 %v624, %v452
      %v626 = vadd.f32 %v625, %v457
      %v627 = vadd.f32 %v626, %v462
      %v628 = vadd.f32 %v627, %v467
      %v629 = vadd.f32 %v628, %v472
      %v630 = vadd.f32 %v629, %v477
      %v631 = vadd.f32 %v630, %v482
      %v632 = vadd.f32 %v631, %v487
      %v633 = vadd.f32 %v632, %v492
      %v634 = vadd.f32 %v633, %v497
      %v635 = vadd.f32 %v634, %v502
      %v636 = vadd.f32 %v635, %v507
      %v637 = vadd.f32 %v636, %v512
      %v638 = vadd.f32 %v637, %v517
      %v639 = vadd.f32 %v638, %v522
      %v640 = vadd.f32 %v639, %v527
      %v641 = vadd.f32 %v640, %v532
      %v642 = vadd.f32 %v641, %v537
      %v643 = vadd.f32 %v642, %v542
      %v644 = vadd.f32 %v643, %v547
      %v645 = vadd.f32 %v644, %v552
      %v646 = vadd.f32 %v645, %v557
      %v647 = vadd.f32 %v646, %v562
      %v648 = vadd.f32 %v647, %v567
      %v649 = vadd.f32 %v648, %v572
      %v650 = vadd.f32 %v649, %v577
      %v651 = vadd.f32 %v650, %v582
      %v652 = vadd.f32 %v651, %v587
      %v653 = vrot.slane %v652, 4
      %v654 = vadd.f32 %v652, %v653
      %v655 = vrot.slane %v654, 2
      %v656 = vadd.f32 %v654, %v655
      %v657 = vrot.slane %v656, 1
      %v658 = vadd.f32 %v656, %v657
      %v659 = vmul.f32 %v432, %v432
      %v660 = vmul.f32 %v437, %v437
      %v661 = vmul.f32 %v442, %v442
      %v662 = vmul.f32 %v447, %v447
      %v663 = vmul.f32 %v452, %v452
      %v664 = vmul.f32 %v457, %v457
      %v665 = vmul.f32 %v462, %v462
      %v666 = vmul.f32 %v467, %v467
      %v667 = vmul.f32 %v472, %v472
      %v668 = vmul.f32 %v477, %v477
      %v669 = vmul.f32 %v482, %v482
      %v670 = vmul.f32 %v487, %v487
      %v671 = vmul.f32 %v492, %v492
      %v672 = vmul.f32 %v497, %v497
      %v673 = vmul.f32 %v502, %v502
      %v674 = vmul.f32 %v507, %v507
      %v675 = vmul.f32 %v512, %v512
      %v676 = vmul.f32 %v517, %v517
      %v677 = vmul.f32 %v522, %v522
      %v678 = vmul.f32 %v527, %v527
      %v679 = vmul.f32 %v532, %v532
      %v680 = vmul.f32 %v537, %v537
      %v681 = vmul.f32 %v542, %v542
      %v682 = vmul.f32 %v547, %v547
      %v683 = vmul.f32 %v552, %v552
      %v684 = vmul.f32 %v557, %v557
      %v685 = vmul.f32 %v562, %v562
      %v686 = vmul.f32 %v567, %v567
      %v687 = vmul.f32 %v572, %v572
      %v688 = vmul.f32 %v577, %v577
      %v689 = vmul.f32 %v582, %v582
      %v690 = vmul.f32 %v587, %v587
      %v691 = vadd.f32 %v659, %v660
      %v692 = vadd.f32 %v691, %v661
      %v693 = vadd.f32 %v692, %v662
      %v694 = vadd.f32 %v693, %v663
      %v695 = vadd.f32 %v694, %v664
      %v696 = vadd.f32 %v695, %v665
      %v697 = vadd.f32 %v696, %v666
      %v698 = vadd.f32 %v697, %v667
      %v699 = vadd.f32 %v698, %v668
      %v700 = vadd.f32 %v699, %v669
      %v701 = vadd.f32 %v700, %v670
      %v702 = vadd.f32 %v701, %v671
      %v703 = vadd.f32 %v702, %v672
      %v704 = vadd.f32 %v703, %v673
      %v705 = vadd.f32 %v704, %v674
      %v706 = vadd.f32 %v705, %v675
      %v707 = vadd.f32 %v706, %v676
      %v708 = vadd.f32 %v707, %v677
      %v709 = vadd.f32 %v708, %v678
      %v710 = vadd.f32 %v709, %v679
      %v711 = vadd.f32 %v710, %v680
      %v712 = vadd.f32 %v711, %v681
      %v713 = vadd.f32 %v712, %v682
      %v714 = vadd.f32 %v713, %v683
      %v715 = vadd.f32 %v714, %v684
      %v716 = vadd.f32 %v715, %v685
      %v717 = vadd.f32 %v716, %v686
      %v718 = vadd.f32 %v717, %v687
      %v719 = vadd.f32 %v718, %v688
      %v720 = vadd.f32 %v719, %v689
      %v721 = vadd.f32 %v720, %v690
      %v722 = vrot.slane %v721, 4
      %v723 = vadd.f32 %v721, %v722
      %v724 = vrot.slane %v723, 2
      %v725 = vadd.f32 %v723, %v724
      %v726 = vrot.slane %v725, 1
      %v727 = vadd.f32 %v725, %v726
      %vm728 = vcmask 1040384
      %v729 = vsel %vm728, %v658, %v727
      %730 = vst [vmem:[%s211] sm:$0x3] %v729
      %s731 = smul.u32 32, %s16
      %p732 = scmp.lt.s32.totalorder %s731, 63
      %s733 = scalar_select %p732, %s731, 63
      %s734 = smul.addr %s733, 8
      %s735 = scalar_lea.vmem %s3, %s734
      %p736 = scmp.lt.s32.totalorder %s16, 1
      %s737 = scalar_select %p736, %s16, 1
      %s738 = smul.addr %s737, 2
      %s739 = scalar_lea.vmem %s4, %s738
      // Predicated region
      $region33: #{bottleneck_forward.6} parent=31 // pred_check
        %p740 = pneg %p102
      $region34: #{bottleneck_forward.6} parent=31 // pred_check_branch
        %742 = sbr.rel (%p740) target = $region36
      $region35: #{bottleneck_forward.6} parent=31 // pred_region
        %s743 = smul.u32 32, %s16
      $region36: #{bottleneck_forward.6} parent=31 // pred_fallthru
        _
      // Predicated region
      $region37: #{bottleneck_forward.6} parent=31 // pred_check
        %p744 = pneg %p128
      $region38: #{bottleneck_forward.6} parent=31 // pred_check_branch
        %746 = sbr.rel (%p744) target = $region40
      $region39: #{bottleneck_forward.6} parent=31 // pred_region
        _
      $region40: #{bottleneck_forward.6} parent=31 // pred_fallthru
        _
    $region32: #{bottleneck_forward.6} parent=5 // pred_fallthru
      _
    %p747 = scmp.le.s32.totalorder 2, %s11
    // Predicated region
    $region41: #{bottleneck_forward.6} parent=5 // pred_check
      %p748 = pneg %p747
    $region42: #{bottleneck_forward.6} parent=5 // pred_check_branch
      %750 = sbr.rel (%p748) target = $region44
    $region43: #{bottleneck_forward.6} parent=5 // pred_region
      %s751 = ssub.s32 %s11, 2
      // Predicated region
      $region45: #{bottleneck_forward.6} parent=43 // pred_check
        %p752 = pneg %p108
      $region46: #{bottleneck_forward.6} parent=43 // pred_check_branch
        %754 = sbr.rel (%p752) target = $region48
      $region47: #{bottleneck_forward.6} parent=43 // pred_region
        %s755 = smul.u32 32, %s17
        %p756 = scmp.lt.s32.totalorder %s755, 63
        %s757 = scalar_select %p756, %s755, 63
        %s758 = smul.addr %s757, 8
        %s759 = scalar_lea.vmem %s3, %s758
      $region48: #{bottleneck_forward.6} parent=43 // pred_fallthru
        _
      // Predicated region
      $region49: #{bottleneck_forward.6} parent=43 // pred_check
        %p760 = pneg %p134
      $region50: #{bottleneck_forward.6} parent=43 // pred_check_branch
        %762 = sbr.rel (%p760) target = $region52
      $region51: #{bottleneck_forward.6} parent=43 // pred_region
        %p763 = scmp.lt.s32.totalorder %s17, 1
        %s764 = scalar_select %p763, %s17, 1
        %s765 = smul.addr %s764, 2
        %s766 = scalar_lea.vmem %s4, %s765
      $region52: #{bottleneck_forward.6} parent=43 // pred_fallthru
        _
    $region44: #{bottleneck_forward.6} parent=5 // pred_fallthru
      _
  $region6: #{bottleneck_forward.6} parent=0 // loop_footer
    %s15 = sadd.s32 1, %s11
  $region7: #{bottleneck_forward.6} parent=0 // loop_footer_branch
    %10 = sbr.rel target = $region3
  $region8: #{bottleneck_forward.6} parent=0 // loop_exit
    _

// kernel: bottleneck_forward.5
$region0: #{bottleneck_forward.5}
  #allocation0 [shape = 'u32[]', space=smem, size = 0x4, offset = 0x4, fixed_abs, tag = 'smem constant byte address 0x4 - core index']
  #allocation1 [shape = 'u32[144,128]{1,0:T(1,128)}', space=vmem, size = 0x12000, scoped, tag = 'internal scratch']
  #allocation2 [shape = 'f32[192,128]{1,0:T(8,128)}', space=vmem, size = 0x18000, scoped, tag = 'scratch operand']
  %s0 = inlined_call_operand.vmem [shape: f32[2,256,128], index: 0, kind: input, shape index: {}]
  %s1 = inlined_call_operand.vmem [shape: f32[2,128], index: 1, kind: input, shape index: {}]
  %s2 = inlined_call_operand.vmem [shape: f32[3,384,128], index: 2, kind: input, shape index: {}]
  %s3 = inlined_call_operand.vmem [shape: f32[2,256,128], index: 3, kind: output, shape index: {0}]
  %s4 = inlined_call_operand.vmem [shape: f32[2,2,2,128], index: 4, kind: output, shape index: {1}]
  %5 = xla_tuple %s3, %s4
  %s6 = sld [smem:[#allocation0]]
  $region69: #{bottleneck_forward.5} parent=0
    _
  %s8 = ssub.s32 1, %s6
  %s9 = scalar_select 0, %s8, %s6
  loop: start=0, step=1, limit=6
  $region2: #{bottleneck_forward.5} parent=0 // loop_pre_header
    _
  $region3: #{bottleneck_forward.5} parent=0 // loop_header
    %s11 = sphi 0, %s15
    %p12 = scmp.ge.s32.totalorder %s11, 6
    %s18 = sphi 0, %s30
    %s19 = sphi 0, %s26
    %s20 = sphi 0, %s18
    %s21 = sphi 0, %s19
    %s22 = sphi 0, %s20
    %s23 = sphi 0, %s21
    %s33 = sphi 0, %s35
    %s36 = sphi 0, %s33
    %s37 = sphi 0, %s36
    %s53 = sphi 0, %s37
    %s57 = sphi 0, %s57
    %s59 = sphi 0, %s57
    %s60 = sphi 0, %s59
    %s74 = sphi 0, %s60
    %s78 = sphi 0, %s78
    %s80 = sphi 0, %s78
    %s81 = sphi 0, %s80
    %s95 = sphi 0, %s81
    %s103 = sphi 0, %s105
    %s106 = sphi 0, %s103
    %s107 = sphi 0, %s106
    %s123 = sphi 0, %s107
    %s131 = sphi 0, %s133
    %s134 = sphi 0, %s131
    %s135 = sphi 0, %s134
    %s151 = sphi 0, %s135
  $region4: #{bottleneck_forward.5} parent=0 // loop_header_branch
    %14 = sbr.rel (%p12) target = $region8
  $region5: #{bottleneck_forward.5} parent=0 // loop_body
    %s16 = ssub.s32 %s11, 1
    %s17 = ssub.s32 %s11, 2
    %s24 = sadd.s32 1, %s19
    %p25 = scmp.ge.s32.totalorder %s24, 2
    %s26 = scalar_select %p25, 0, %s24
    %s27 = sadd.s32 1, %s18
    %s28 = scalar_select %p25, %s27, %s18
    %p29 = scmp.ge.s32.totalorder %s28, 2
    %s30 = scalar_select %p29, 0, %s28
    %s31 = ssub.s32 %s18, %s30
    %p32 = scmp.eq.s32.totalorder %s31, 0
    %s34 = sadd.s32 %s33, 1
    %s35 = scalar_select %p32, %s33, %s34
    %p38 = pneg %p32
    %p39 = scmp.eq.s32.totalorder %s11, 3
    %p40 = por %p38, %p39
    %p41 = scmp.ne.s32.totalorder %s33, %s36
    %p42 = scmp.eq.s32.totalorder %s11, 0
    %p43 = por %p41, %p42
    %p44 = scmp.ne.s32.totalorder %s33, %s36
    %p45 = scmp.eq.s32.totalorder %s16, 3
    %p46 = por %p44, %p45
    %p47 = scmp.ne.s32.totalorder %s36, %s37
    %p48 = scmp.eq.s32.totalorder %s16, 0
    %p49 = por %p47, %p48
    %p50 = scmp.ne.s32.totalorder %s36, %s37
    %p51 = scmp.eq.s32.totalorder %s17, 3
    %p52 = por %p50, %p51
    %p54 = scmp.ne.s32.totalorder %s37, %s53
    %p55 = scmp.eq.s32.totalorder %s17, 0
    %p56 = por %p54, %p55
    %s58 = sadd.s32 %s57, 1
    %p61 = scmp.eq.s32.totalorder %s11, 3
    %p62 = scmp.ne.s32.totalorder %s57, %s59
    %p63 = scmp.eq.s32.totalorder %s11, 0
    %p64 = por %p62, %p63
    %p65 = scmp.ne.s32.totalorder %s57, %s59
    %p66 = scmp.eq.s32.totalorder %s16, 3
    %p67 = por %p65, %p66
    %p68 = scmp.ne.s32.totalorder %s59, %s60
    %p69 = scmp.eq.s32.totalorder %s16, 0
    %p70 = por %p68, %p69
    %p71 = scmp.ne.s32.totalorder %s59, %s60
    %p72 = scmp.eq.s32.totalorder %s17, 3
    %p73 = por %p71, %p72
    %p75 = scmp.ne.s32.totalorder %s60, %s74
    %p76 = scmp.eq.s32.totalorder %s17, 0
    %p77 = por %p75, %p76
    %s79 = sadd.s32 %s78, 1
    %p82 = scmp.eq.s32.totalorder %s11, 3
    %p83 = scmp.ne.s32.totalorder %s78, %s80
    %p84 = scmp.eq.s32.totalorder %s11, 0
    %p85 = por %p83, %p84
    %p86 = scmp.ne.s32.totalorder %s78, %s80
    %p87 = scmp.eq.s32.totalorder %s16, 3
    %p88 = por %p86, %p87
    %p89 = scmp.ne.s32.totalorder %s80, %s81
    %p90 = scmp.eq.s32.totalorder %s16, 0
    %p91 = por %p89, %p90
    %p92 = scmp.ne.s32.totalorder %s80, %s81
    %p93 = scmp.eq.s32.totalorder %s17, 3
    %p94 = por %p92, %p93
    %p96 = scmp.ne.s32.totalorder %s81, %s95
    %p97 = scmp.eq.s32.totalorder %s17, 0
    %p98 = por %p96, %p97
    %s99 = ssub.s32 %s18, %s30
    %s100 = ssub.s32 %s19, %s26
    %s101 = sor.u32 %s99, %s100
    %p102 = scmp.eq.s32.totalorder %s101, 0
    %s104 = sadd.s32 %s103, 1
    %s105 = scalar_select %p102, %s103, %s104
    %p108 = pneg %p102
    %p109 = scmp.eq.s32.totalorder %s11, 3
    %p110 = por %p108, %p109
    %p111 = scmp.ne.s32.totalorder %s103, %s106
    %p112 = scmp.eq.s32.totalorder %s11, 0
    %p113 = por %p111, %p112
    %p114 = scmp.ne.s32.totalorder %s103, %s106
    %p115 = scmp.eq.s32.totalorder %s16, 3
    %p116 = por %p114, %p115
    %p117 = scmp.ne.s32.totalorder %s106, %s107
    %p118 = scmp.eq.s32.totalorder %s16, 0
    %p119 = por %p117, %p118
    %p120 = scmp.ne.s32.totalorder %s106, %s107
    %p121 = scmp.eq.s32.totalorder %s17, 3
    %p122 = por %p120, %p121
    %p124 = scmp.ne.s32.totalorder %s107, %s123
    %p125 = scmp.eq.s32.totalorder %s17, 0
    %p126 = por %p124, %p125
    %s127 = ssub.s32 %s18, %s30
    %s128 = ssub.s32 %s19, %s26
    %s129 = sor.u32 %s127, %s128
    %p130 = scmp.eq.s32.totalorder %s129, 0
    %s132 = sadd.s32 %s131, 1
    %s133 = scalar_select %p130, %s131, %s132
    %p136 = pneg %p130
    %p137 = scmp.eq.s32.totalorder %s11, 3
    %p138 = por %p136, %p137
    %p139 = scmp.ne.s32.totalorder %s131, %s134
    %p140 = scmp.eq.s32.totalorder %s11, 0
    %p141 = por %p139, %p140
    %p142 = scmp.ne.s32.totalorder %s131, %s134
    %p143 = scmp.eq.s32.totalorder %s16, 3
    %p144 = por %p142, %p143
    %p145 = scmp.ne.s32.totalorder %s134, %s135
    %p146 = scmp.eq.s32.totalorder %s16, 0
    %p147 = por %p145, %p146
    %p148 = scmp.ne.s32.totalorder %s134, %s135
    %p149 = scmp.eq.s32.totalorder %s17, 3
    %p150 = por %p148, %p149
    %p152 = scmp.ne.s32.totalorder %s135, %s151
    %p153 = scmp.eq.s32.totalorder %s17, 0
    %p154 = por %p152, %p153
    %p155 = scmp.le.s32.totalorder 1, %s11
    %p156 = scmp.lt.s32.totalorder %s11, 5
    %p157 = pnand %p155, %p156
    %p158 = pneg %p157
    // Predicated region
    $region9: #{bottleneck_forward.5} parent=5 // pred_check
      _
    $region10: #{bottleneck_forward.5} parent=5 // pred_check_branch
      %160 = sbr.rel (%p157) target = $region12
    $region11: #{bottleneck_forward.5} parent=5 // pred_region
      %s161 = ssub.s32 %s11, 1
      // Predicated region
      $region13: #{bottleneck_forward.5} parent=11 // pred_check
        %p162 = pneg %p70
      $region14: #{bottleneck_forward.5} parent=11 // pred_check_branch
        %164 = sbr.rel (%p162) target = $region16
      $region15: #{bottleneck_forward.5} parent=11 // pred_region
        _
      $region16: #{bottleneck_forward.5} parent=11 // pred_fallthru
        _
      // Predicated region
      $region17: #{bottleneck_forward.5} parent=11 // pred_check
        %p165 = pneg %p91
      $region18: #{bottleneck_forward.5} parent=11 // pred_check_branch
        %167 = sbr.rel (%p165) target = $region20
      $region19: #{bottleneck_forward.5} parent=11 // pred_region
        _
      $region20: #{bottleneck_forward.5} parent=11 // pred_fallthru
        _
    $region12: #{bottleneck_forward.5} parent=5 // pred_fallthru
      _
    %p168 = scmp.lt.s32.totalorder %s11, 4
    // Predicated region
    $region21: #{bottleneck_forward.5} parent=5 // pred_check
      %p169 = pneg %p168
    $region22: #{bottleneck_forward.5} parent=5 // pred_check_branch
      %171 = sbr.rel (%p169) target = $region24
    $region23: #{bottleneck_forward.5} parent=5 // pred_region
      // Predicated region
      $region25: #{bottleneck_forward.5} parent=23 // pred_check
        %p172 = pneg %p43
      $region26: #{bottleneck_forward.5} parent=23 // pred_check_branch
        %174 = sbr.rel (%p172) target = $region28
      $region27: #{bottleneck_forward.5} parent=23 // pred_region
        %p175 = scmp.lt.s32.totalorder %s18, 1
        %s176 = scalar_select %p175, %s18, 1
        %s177 = smul.addr %s176, 32
        %s178 = smul.addr %s177, 8
        %s179 = scalar_lea.vmem %s0, %s178
      $region28: #{bottleneck_forward.5} parent=23 // pred_fallthru
        _
    $region24: #{bottleneck_forward.5} parent=5 // pred_fallthru
      _
    %p180 = scmp.le.s32.totalorder 1, %s11
    %p181 = scmp.lt.s32.totalorder %s11, 5
    %p182 = pnand %p180, %p181
    %p183 = pneg %p182
    // Predicated region
    $region29: #{bottleneck_forward.5} parent=5 // pred_check
      _
    $region30: #{bottleneck_forward.5} parent=5 // pred_check_branch
      %185 = sbr.rel (%p182) target = $region32
    $region31: #{bottleneck_forward.5} parent=5 // pred_region
      %s186 = ssub.s32 %s11, 1
      %p187 = scmp.lt.s32.totalorder %s20, 1
      %s188 = scalar_select %p187, %s20, 1
      %s189 = smul.addr %s188, 32
      %s190 = smul.addr %s189, 8
      %s191 = scalar_lea.vmem %s0, %s190
      %p192 = pneg %p49
      %p193 = pneg %p46
      %p194 = pneg %p70
      %p195 = pneg %p67
      %p196 = pneg %p91
      %p197 = pneg %p88
      %p198 = pneg %p119
      %p199 = pneg %p116
      %s200 = smul.u32 16, %s21
      %p201 = scmp.lt.s32.totalorder %s20, 1
      %s202 = scalar_select %p201, %s20, 1
      %p203 = scmp.lt.s32.totalorder %s200, 31
      %s204 = scalar_select %p203, %s200, 31
      %s205 = smul.addr %s202, 32
      %s206 = sadd.s32 %s204, %s205
      %s207 = smul.addr %s206, 8
      %s208 = scalar_lea.vmem %s3, %s207
      %p209 = pneg %p147
      %p210 = pneg %p144
      %p211 = scmp.lt.s32.totalorder %s20, 1
      %s212 = scalar_select %p211, %s20, 1
      %p213 = scmp.lt.s32.totalorder %s21, 1
      %s214 = scalar_select %p213, %s21, 1
      %s215 = smul.addr %s212, 2
      %s216 = sadd.s32 %s214, %s215
      %s217 = smul.addr %s216, 2
      %s218 = scalar_lea.vmem %s4, %s217
      %p219 = scmp.lt.s32.totalorder %s20, 1
      %s220 = scalar_select %p219, %s20, 1
      %s221 = smul.addr %s220, 32
      %s222 = smul.addr %s221, 8
      %s223 = scalar_lea.vmem %s0, %s222
      %s224 = smul.u32 16, %s21
      %p225 = scmp.lt.s32.totalorder %s20, 1
      %s226 = scalar_select %p225, %s20, 1
      %p227 = scmp.lt.s32.totalorder %s224, 31
      %s228 = scalar_select %p227, %s224, 31
      %s229 = smul.addr %s226, 32
      %s230 = sadd.s32 %s228, %s229
      %s231 = smul.addr %s230, 8
      %s232 = scalar_lea.vmem %s3, %s231
      %s233 = smul.u32 16, %s21
      %p234 = scmp.lt.s32.totalorder %s20, 1
      %s235 = scalar_select %p234, %s20, 1
      %p236 = scmp.lt.s32.totalorder %s21, 1
      %s237 = scalar_select %p236, %s21, 1
      %s238 = smul.addr %s235, 2
      %s239 = sadd.s32 %s237, %s238
      %s240 = smul.addr %s239, 2
      %s241 = scalar_lea.vmem %s4, %s240
      %v242 = vld [vmem:[%s1] sm:$0x3]
      %243 = vst [vmem:[#allocation2] sm:$0xff] 0.0
      %244 = vst [vmem:[#allocation2 + $0x8] sm:$0xff] 0.0
      %245 = vst [vmem:[#allocation2 + $0xb0] sm:$0xff] 0.0
      %246 = vst [vmem:[#allocation2 + $0xb8] sm:$0xff] 0.0
      %s247 = smul.u32 %s21, 128
      %s248 = scalar_lea.vmem %s223, %s247
      %v249 = vld [vmem:[%s248] sm:$0xff]
      %v250 = vld [vmem:[%s248 + $0x8] sm:$0xff]
      %v251 = vld [vmem:[%s248 + $0x10] sm:$0xff]
      %v252 = vld [vmem:[%s248 + $0x18] sm:$0xff]
      %v253 = vld [vmem:[%s248 + $0x20] sm:$0xff]
      %v254 = vld [vmem:[%s248 + $0x28] sm:$0xff]
      %v255 = vld [vmem:[%s248 + $0x30] sm:$0xff]
      %v256 = vld [vmem:[%s248 + $0x38] sm:$0xff]
      %v257 = vld [vmem:[%s248 + $0x40] sm:$0xff]
      %v258 = vld [vmem:[%s248 + $0x48] sm:$0xff]
      %v259 = vld [vmem:[%s248 + $0x50] sm:$0xff]
      %v260 = vld [vmem:[%s248 + $0x58] sm:$0xff]
      %v261 = vld [vmem:[%s248 + $0x60] sm:$0xff]
      %v262 = vld [vmem:[%s248 + $0x68] sm:$0xff]
      %v263 = vld [vmem:[%s248 + $0x70] sm:$0xff]
      %v264 = vld [vmem:[%s248 + $0x78] sm:$0xff]
      %v265 = vlaneseq
      %v266 = vshrl.u32 %v265, 7
      %v267 = vsub.s32 0, %v266
      %v268 = vrot.slane %v242, %v267
      %v269 = vmul.f32 %v249, %v268
      %v270 = vmul.f32 %v250, %v268
      %v271 = vmul.f32 %v251, %v268
      %v272 = vmul.f32 %v252, %v268
      %v273 = vmul.f32 %v253, %v268
      %v274 = vmul.f32 %v254, %v268
      %v275 = vmul.f32 %v255, %v268
      %v276 = vmul.f32 %v256, %v268
      %v277 = vmul.f32 %v257, %v268
      %v278 = vmul.f32 %v258, %v268
      %v279 = vmul.f32 %v259, %v268
      %v280 = vmul.f32 %v260, %v268
      %v281 = vmul.f32 %v261, %v268
      %v282 = vmul.f32 %v262, %v268
      %v283 = vmul.f32 %v263, %v268
      %v284 = vmul.f32 %v264, %v268
      %v285 = vlaneseq
      %v286 = vshrl.u32 %v285, 7
      %v287 = vsub.s32 1, %v286
      %v288 = vrot.slane %v242, %v287
      %v289 = vadd.f32 %v269, %v288
      %v290 = vadd.f32 %v270, %v288
      %v291 = vadd.f32 %v271, %v288
      %v292 = vadd.f32 %v272, %v288
      %v293 = vadd.f32 %v273, %v288
      %v294 = vadd.f32 %v274, %v288
      %v295 = vadd.f32 %v275, %v288
      %v296 = vadd.f32 %v276, %v288
      %v297 = vadd.f32 %v277, %v288
      %v298 = vadd.f32 %v278, %v288
      %v299 = vadd.f32 %v279, %v288
      %v300 = vadd.f32 %v280, %v288
      %v301 = vadd.f32 %v281, %v288
      %v302 = vadd.f32 %v282, %v288
      %v303 = vadd.f32 %v283, %v288
      %v304 = vadd.f32 %v284, %v288
      %v305 = vmax.f32 %v289, 0.0
      %v306 = vmax.f32 %v290, 0.0
      %v307 = vmax.f32 %v291, 0.0
      %v308 = vmax.f32 %v292, 0.0
      %v309 = vmax.f32 %v293, 0.0
      %v310 = vmax.f32 %v294, 0.0
      %v311 = vmax.f32 %v295, 0.0
      %v312 = vmax.f32 %v296, 0.0
      %v313 = vmax.f32 %v297, 0.0
      %v314 = vmax.f32 %v298, 0.0
      %v315 = vmax.f32 %v299, 0.0
      %v316 = vmax.f32 %v300, 0.0
      %v317 = vmax.f32 %v301, 0.0
      %v318 = vmax.f32 %v302, 0.0
      %v319 = vmax.f32 %v303, 0.0
      %v320 = vmax.f32 %v304, 0.0
      %321 = vst [vmem:[#allocation2 + $0x20] sm:$0xff] %v305
      %322 = vst [vmem:[#allocation2 + $0x28] sm:$0xff] %v306
      %323 = vst [vmem:[#allocation2 + $0x30] sm:$0xff] %v307
      %324 = vst [vmem:[#allocation2 + $0x38] sm:$0xff] %v308
      %325 = vst [vmem:[#allocation2 + $0x40] sm:$0xff] %v309
      %326 = vst [vmem:[#allocation2 + $0x48] sm:$0xff] %v310
      %327 = vst [vmem:[#allocation2 + $0x50] sm:$0xff] %v311
      %328 = vst [vmem:[#allocation2 + $0x58] sm:$0xff] %v312
      %329 = vst [vmem:[#allocation2 + $0x60] sm:$0xff] %v313
      %330 = vst [vmem:[#allocation2 + $0x68] sm:$0xff] %v314
      %331 = vst [vmem:[#allocation2 + $0x70] sm:$0xff] %v315
      %332 = vst [vmem:[#allocation2 + $0x78] sm:$0xff] %v316
      %333 = vst [vmem:[#allocation2 + $0x80] sm:$0xff] %v317
      %334 = vst [vmem:[#allocation2 + $0x88] sm:$0xff] %v318
      %335 = vst [vmem:[#allocation2 + $0x90] sm:$0xff] %v319
      %336 = vst [vmem:[#allocation2 + $0x98] sm:$0xff] %v320
      %p337 = scmp.eq.s32.totalorder %s21, 0
      // Predicated region
      $region33: #{bottleneck_forward.5} parent=31 // pred_check
        %p338 = pneg %p337
      $region34: #{bottleneck_forward.5} parent=31 // pred_check_branch
        %340 = sbr.rel (%p338) target = $region36
      $region35: #{bottleneck_forward.5} parent=31 // pred_region
        %341 = vst [vmem:[#allocation2 + $0x10] sm:$0xff] 0.0
        %342 = vst [vmem:[#allocation2 + $0x18] sm:$0xff] 0.0
      $region36: #{bottleneck_forward.5} parent=31 // pred_fallthru
        _
      %p343 = scmp.gt.s32.totalorder %s21, 0
      // Predicated region
      $region37: #{bottleneck_forward.5} parent=31 // pred_check
        %p344 = pneg %p343
      $region38: #{bottleneck_forward.5} parent=31 // pred_check_branch
        %346 = sbr.rel (%p344) target = $region40
      $region39: #{bottleneck_forward.5} parent=31 // pred_region
        %s347 = smul.u32 %s21, 8
        %s348 = ssub.s32 %s347, 1
        %s349 = smul.u32 %s348, 16
        %s350 = scalar_lea.vmem %s223, %s349
        %v351 = vld [vmem:[%s350] sm:$0xff]
        %v352 = vld [vmem:[%s350 + $0x8] sm:$0xff]
        %v353 = vmul.f32 %v351, %v268
        %v354 = vmul.f32 %v352, %v268
        %v355 = vadd.f32 %v353, %v288
        %v356 = vadd.f32 %v354, %v288
        %v357 = vmax.f32 %v355, 0.0
        %v358 = vmax.f32 %v356, 0.0
        %359 = vst [vmem:[#allocation2 + $0x10] sm:$0xff] %v357
        %360 = vst [vmem:[#allocation2 + $0x18] sm:$0xff] %v358
      $region40: #{bottleneck_forward.5} parent=31 // pred_fallthru
        _
      %p361 = scmp.eq.s32.totalorder %s21, 1
      // Predicated region
      $region41: #{bottleneck_forward.5} parent=31 // pred_check
        %p362 = pneg %p361
      $region42: #{bottleneck_forward.5} parent=31 // pred_check_branch
        %364 = sbr.rel (%p362) target = $region44
      $region43: #{bottleneck_forward.5} parent=31 // pred_region
        %365 = vst [vmem:[#allocation2 + $0xa0] sm:$0xff] 0.0
        %366 = vst [vmem:[#allocation2 + $0xa8] sm:$0xff] 0.0
      $region44: #{bottleneck_forward.5} parent=31 // pred_fallthru
        _
      %p367 = scmp.lt.s32.totalorder %s21, 1
      // Predicated region
      $region45: #{bottleneck_forward.5} parent=31 // pred_check
        %p368 = pneg %p367
      $region46: #{bottleneck_forward.5} parent=31 // pred_check_branch
        %370 = sbr.rel (%p368) target = $region48
      $region47: #{bottleneck_forward.5} parent=31 // pred_region
        %s371 = smul.u32 %s21, 8
        %s372 = sadd.s32 %s371, 8
        %s373 = smul.u32 %s372, 16
        %s374 = scalar_lea.vmem %s223, %s373
        %v375 = vld [vmem:[%s374] sm:$0xff]
        %v376 = vld [vmem:[%s374 + $0x8] sm:$0xff]
        %v377 = vmul.f32 %v375, %v268
        %v378 = vmul.f32 %v376, %v268
        %v379 = vadd.f32 %v377, %v288
        %v380 = vadd.f32 %v378, %v288
        %v381 = vmax.f32 %v379, 0.0
        %v382 = vmax.f32 %v380, 0.0
        %383 = vst [vmem:[#allocation2 + $0xa0] sm:$0xff] %v381
        %384 = vst [vmem:[#allocation2 + $0xa8] sm:$0xff] %v382
      $region48: #{bottleneck_forward.5} parent=31 // pred_fallthru
        _
      %v385 = vld [vmem:[#allocation2 + $0x10] sm:$0xff]
      %v386 = vld [vmem:[#allocation2 + $0x18] sm:$0xff]
      %v387 = vld [vmem:[#allocation2 + $0x20] sm:$0xff]
      %v388 = vld [vmem:[#allocation2 + $0x28] sm:$0xff]
      %v389 = vld [vmem:[#allocation2 + $0x30] sm:$0xff]
      %v390 = vld [vmem:[#allocation2 + $0x38] sm:$0xff]
      %v391 = vld [vmem:[#allocation2 + $0x40] sm:$0xff]
      %v392 = vld [vmem:[#allocation2 + $0x48] sm:$0xff]
      %v393 = vld [vmem:[#allocation2 + $0x50] sm:$0xff]
      %v394 = vld [vmem:[#allocation2 + $0x58] sm:$0xff]
      %v395 = vld [vmem:[#allocation2 + $0x60] sm:$0xff]
      %v396 = vld [vmem:[#allocation2 + $0x68] sm:$0xff]
      %v397 = vld [vmem:[#allocation2 + $0x70] sm:$0xff]
      %v398 = vld [vmem:[#allocation2 + $0x78] sm:$0xff]
      %v399 = vld [vmem:[#allocation2 + $0x80] sm:$0xff]
      %v400 = vld [vmem:[#allocation2 + $0x88] sm:$0xff]
      %v401 = vld [vmem:[#allocation2 + $0x90] sm:$0xff]
      %v402 = vld [vmem:[#allocation2 + $0x98] sm:$0xff]
      %v403 = vld [vmem:[#allocation2 + $0xa0] sm:$0xff]
      %v404 = vld [vmem:[#allocation2 + $0xa8] sm:$0xff]
      %s405 = scalar_lea.vmem %s2, 384
      %v406 = vld [vmem:[%s405] sm:$0xff]
      %v407 = vld [vmem:[%s405 + $0x8] sm:$0xff]
      %v408 = vld [vmem:[%s405 + $0x10] sm:$0xff]
      %v409 = vld [vmem:[%s405 + $0x18] sm:$0xff]
      %v410 = vld [vmem:[%s405 + $0x20] sm:$0xff]
      %v411 = vld [vmem:[%s405 + $0x28] sm:$0xff]
      %v412 = vld [vmem:[%s405 + $0x30] sm:$0xff]
      %v413 = vld [vmem:[%s405 + $0x38] sm:$0xff]
      %v414 = vld [vmem:[%s405 + $0x40] sm:$0xff]
      %v415 = vld [vmem:[%s405 + $0x48] sm:$0xff]
      %v416 = vld [vmem:[%s405 + $0x50] sm:$0xff]
      %v417 = vld [vmem:[%s405 + $0x58] sm:$0xff]
      %v418 = vld [vmem:[%s405 + $0x60] sm:$0xff]
      %v419 = vld [vmem:[%s405 + $0x68] sm:$0xff]
      %v420 = vld [vmem:[%s405 + $0x70] sm:$0xff]
      %v421 = vld [vmem:[%s405 + $0x78] sm:$0xff]
      %v422 = vld [vmem:[%s405 + $0x80] sm:$0xff]
      %v423 = vld [vmem:[%s405 + $0x88] sm:$0xff]
      %v424 = vld [vmem:[%s405 + $0x90] sm:$0xff]
      %v425 = vld [vmem:[%s405 + $0x98] sm:$0xff]
      %v426 = vld [vmem:[%s405 + $0xa0] sm:$0xff]
      %v427 = vld [vmem:[%s405 + $0xa8] sm:$0xff]
      %v428 = vld [vmem:[%s405 + $0xb0] sm:$0xff]
      %v429 = vld [vmem:[%s405 + $0xb8] sm:$0xff]
      %v430 = vld [vmem:[%s405 + $0xc0] sm:$0xff]
      %v431 = vld [vmem:[%s405 + $0xc8] sm:$0xff]
      %v432 = vld [vmem:[%s405 + $0xd0] sm:$0xff]
      %v433 = vld [vmem:[%s405 + $0xd8] sm:$0xff]
      %v434 = vld [vmem:[%s405 + $0xe0] sm:$0xff]
      %v435 = vld [vmem:[%s405 + $0xe8] sm:$0xff]
      %v436 = vld [vmem:[%s405 + $0xf0] sm:$0xff]
      %v437 = vld [vmem:[%s405 + $0xf8] sm:$0xff]
      %v438 = vld [vmem:[%s405 + $0x100] sm:$0xff]
      %v439 = vld [vmem:[%s405 + $0x108] sm:$0xff]
      %v440 = vld [vmem:[%s405 + $0x110] sm:$0xff]
      %v441 = vld [vmem:[%s405 + $0x118] sm:$0xff]
      %v442 = vld [vmem:[%s405 + $0x120] sm:$0xff]
      %v443 = vld [vmem:[%s405 + $0x128] sm:$0xff]
      %v444 = vld [vmem:[%s405 + $0x130] sm:$0xff]
      %v445 = vld [vmem:[%s405 + $0x138] sm:$0xff]
      %v446 = vld [vmem:[%s405 + $0x140] sm:$0xff]
      %v447 = vld [vmem:[%s405 + $0x148] sm:$0xff]
      %v448 = vld [vmem:[%s405 + $0x150] sm:$0xff]
      %v449 = vld [vmem:[%s405 + $0x158] sm:$0xff]
      %v450 = vld [vmem:[%s405 + $0x160] sm:$0xff]
      %v451 = vld [vmem:[%s405 + $0x168] sm:$0xff]
      %v452 = vld [vmem:[%s405 + $0x170] sm:$0xff]
      %v453 = vld [vmem:[%s405 + $0x178] sm:$0xff]
      %v454 = vld [vmem:[#allocation2 + $0xf] sm:$0xff]
      %v455 = vld [vmem:[#allocation2 + $0x17] sm:$0xff]
      %v456 = vld [vmem:[#allocation2 + $0x1f] sm:$0xff]
      %v457 = vld [vmem:[#allocation2 + $0x27] sm:$0xff]
      %v458 = vld [vmem:[#allocation2 + $0x2f] sm:$0xff]
      %v459 = vld [vmem:[#allocation2 + $0x37] sm:$0xff]
      %v460 = vld [vmem:[#allocation2 + $0x3f] sm:$0xff]
      %v461 = vld [vmem:[#allocation2 + $0x47] sm:$0xff]
      %v462 = vld [vmem:[#allocation2 + $0x4f] sm:$0xff]
      %v463 = vld [vmem:[#allocation2 + $0x57] sm:$0xff]
      %v464 = vld [vmem:[#allocation2 + $0x5f] sm:$0xff]
      %v465 = vld [vmem:[#allocation2 + $0x67] sm:$0xff]
      %v466 = vld [vmem:[#allocation2 + $0x6f] sm:$0xff]
      %v467 = vld [vmem:[#allocation2 + $0x77] sm:$0xff]
      %v468 = vld [vmem:[#allocation2 + $0x7f] sm:$0xff]
      %v469 = vld [vmem:[#allocation2 + $0x87] sm:$0xff]
      %v470 = vld [vmem:[#allocation2 + $0x8f] sm:$0xff]
      %v471 = vld [vmem:[#allocation2 + $0x97] sm:$0xff]
      %v472 = vld [vmem:[#allocation2 + $0x9f] sm:$0xff]
      %v473 = vld [vmem:[#allocation2 + $0xa7] sm:$0xff]
      %v474 = vld [vmem:[%s2] sm:$0xff]
      %v475 = vld [vmem:[%s2 + $0x8] sm:$0xff]
      %v476 = vld [vmem:[%s2 + $0x10] sm:$0xff]
      %v477 = vld [vmem:[%s2 + $0x18] sm:$0xff]
      %v478 = vld [vmem:[%s2 + $0x20] sm:$0xff]
      %v479 = vld [vmem:[%s2 + $0x28] sm:$0xff]
      %v480 = vld [vmem:[%s2 + $0x30] sm:$0xff]
      %v481 = vld [vmem:[%s2 + $0x38] sm:$0xff]
      %v482 = vld [vmem:[%s2 + $0x40] sm:$0xff]
      %v483 = vld [vmem:[%s2 + $0x48] sm:$0xff]
      %v484 = vld [vmem:[%s2 + $0x50] sm:$0xff]
      %v485 = vld [vmem:[%s2 + $0x58] sm:$0xff]
      %v486 = vld [vmem:[%s2 + $0x60] sm:$0xff]
      %v487 = vld [vmem:[%s2 + $0x68] sm:$0xff]
      %v488 = vld [vmem:[%s2 + $0x70] sm:$0xff]
      %v489 = vld [vmem:[%s2 + $0x78] sm:$0xff]
      %v490 = vld [vmem:[%s2 + $0x80] sm:$0xff]
      %v491 = vld [vmem:[%s2 + $0x88] sm:$0xff]
      %v492 = vld [vmem:[%s2 + $0x90] sm:$0xff]
      %v493 = vld [vmem:[%s2 + $0x98] sm:$0xff]
      %v494 = vld [vmem:[%s2 + $0xa0] sm:$0xff]
      %v495 = vld [vmem:[%s2 + $0xa8] sm:$0xff]
      %v496 = vld [vmem:[%s2 + $0xb0] sm:$0xff]
      %v497 = vld [vmem:[%s2 + $0xb8] sm:$0xff]
      %v498 = vld [vmem:[%s2 + $0xc0] sm:$0xff]
      %v499 = vld [vmem:[%s2 + $0xc8] sm:$0xff]
      %v500 = vld [vmem:[%s2 + $0xd0] sm:$0xff]
      %v501 = vld [vmem:[%s2 + $0xd8] sm:$0xff]
      %v502 = vld [vmem:[%s2 + $0xe0] sm:$0xff]
      %v503 = vld [vmem:[%s2 + $0xe8] sm:$0xff]
      %v504 = vld [vmem:[%s2 + $0xf0] sm:$0xff]
      %v505 = vld [vmem:[%s2 + $0xf8] sm:$0xff]
      %v506 = vld [vmem:[%s2 + $0x100] sm:$0xff]
      %v507 = vld [vmem:[%s2 + $0x108] sm:$0xff]
      %v508 = vld [vmem:[%s2 + $0x110] sm:$0xff]
      %v509 = vld [vmem:[%s2 + $0x118] sm:$0xff]
      %v510 = vld [vmem:[%s2 + $0x120] sm:$0xff]
      %v511 = vld [vmem:[%s2 + $0x128] sm:$0xff]
      %v512 = vld [vmem:[%s2 + $0x130] sm:$0xff]
      %v513 = vld [vmem:[%s2 + $0x138] sm:$0xff]
      %v514 = vld [vmem:[%s2 + $0x140] sm:$0xff]
      %v515 = vld [vmem:[%s2 + $0x148] sm:$0xff]
      %v516 = vld [vmem:[%s2 + $0x150] sm:$0xff]
      %v517 = vld [vmem:[%s2 + $0x158] sm:$0xff]
      %v518 = vld [vmem:[%s2 + $0x160] sm:$0xff]
      %v519 = vld [vmem:[%s2 + $0x168] sm:$0xff]
      %v520 = vld [vmem:[%s2 + $0x170] sm:$0xff]
      %v521 = vld [vmem:[%s2 + $0x178] sm:$0xff]
      %522 = vmatprep.subr.mxu0 0.0
      %523 = vmatpush1.msra.mxu0 %v474
      %524 = vmatprep.subr.mxu0 0.0
      %525 = vmatpush1.msra.mxu0 %v475
      %526 = vmatprep.subr.mxu0 0.0
      %527 = vmatpush1.msra.mxu0 %v476
      %528 = vmatprep.subr.mxu0 0.0
      %529 = vmatpush1.msra.mxu0 %v477
      %530 = vmatprep.subr.mxu0 0.0
      %531 = vmatpush1.msra.mxu0 %v478
      %532 = vmatprep.subr.mxu0 0.0
      %533 = vmatpush1.msra.mxu0 %v479
      %534 = vmatprep.subr.mxu0 0.0
      %535 = vmatpush1.msra.mxu0 %v480
      %536 = vmatprep.subr.mxu0 0.0
      %537 = vmatpush1.msra.mxu0 %v481
      %538 = vmatprep.subr.mxu0 0.0
      %539 = vmatpush1.msra.mxu0 %v482
      %540 = vmatprep.subr.mxu0 0.0
      %541 = vmatpush1.msra.mxu0 %v483
      %542 = vmatprep.subr.mxu0 0.0
      %543 = vmatpush1.msra.mxu0 %v484
      %544 = vmatprep.subr.mxu0 0.0
      %545 = vmatpush1.msra.mxu0 %v485
      %546 = vmatprep.subr.mxu0 0.0
      %547 = vmatpush1.msra.mxu0 %v486
      %548 = vmatprep.subr.mxu0 0.0
      %549 = vmatpush1.msra.mxu0 %v487
      %550 = vmatprep.subr.mxu0 0.0
      %551 = vmatpush1.msra.mxu0 %v488
      %552 = vmatprep.subr.mxu0 0.0
      %553 = vmatpush1.msra.mxu0 %v489
      %554 = vmatprep.subr.mxu0 0.0
      %555 = vmatpush1.msra.mxu0 %v490
      %556 = vmatprep.subr.mxu0 0.0
      %557 = vmatpush1.msra.mxu0 %v491
      %558 = vmatprep.subr.mxu0 0.0
      %559 = vmatpush1.msra.mxu0 %v492
      %560 = vmatprep.subr.mxu0 0.0
      %561 = vmatpush1.msra.mxu0 %v493
      %562 = vmatprep.subr.mxu0 0.0
      %563 = vmatpush1.msra.mxu0 %v494
      %564 = vmatprep.subr.mxu0 0.0
      %565 = vmatpush1.msra.mxu0 %v495
      %566 = vmatprep.subr.mxu0 0.0
      %567 = vmatpush1.msra.mxu0 %v496
      %568 = vmatprep.subr.mxu0 0.0
      %569 = vmatpush1.msra.mxu0 %v497
      %570 = vmatprep.subr.mxu0 0.0
      %571 = vmatpush1.msra.mxu0 %v498
      %572 = vmatprep.subr.mxu0 0.0
      %573 = vmatpush1.msra.mxu0 %v499
      %574 = vmatprep.subr.mxu0 0.0
      %575 = vmatpush1.msra.mxu0 %v500
      %576 = vmatprep.subr.mxu0 0.0
      %577 = vmatpush1.msra.mxu0 %v501
      %578 = vmatprep.subr.mxu0 0.0
      %579 = vmatpush1.msra.mxu0 %v502
      %580 = vmatprep.subr.mxu0 0.0
      %581 = vmatpush1.msra.mxu0 %v503
      %582 = vmatprep.subr.mxu0 0.0
      %583 = vmatpush1.msra.mxu0 %v504
      %584 = vmatprep.subr.mxu0 0.0
      %585 = vmatpush1.msra.mxu0 %v505
      %586 = vmatprep.mubr.f32.mxu0 %v456
      %587 = vmatmul.mubr.f32.gmra.mrb[0].mxu0 %v454
      %v588 = vpop.f32.mrb[0].mxu0
      %v589 = vadd.f32 0.0, %v588
      %v590 = vpop.f32.mrb[0].mxu0
      %591 = vmatprep.mubr.f32.mxu0 %v457
      %592 = vmatmul.mubr.f32.gmra.mrb[0].mxu0 %v455
      %v593 = vpop.f32.mrb[0].mxu0
      %v594 = vadd.f32 0.0, %v593
      %v595 = vpop.f32.mrb[0].mxu0
      %596 = vmatprep.mubr.f32.mxu0 %v458
      %597 = vmatmul.mubr.f32.gmra.mrb[0].mxu0 %v456
      %v598 = vpop.f32.mrb[0].mxu0
      %v599 = vadd.f32 0.0, %v598
      %v600 = vpop.f32.mrb[0].mxu0
      %601 = vmatprep.mubr.f32.mxu0 %v459
      %602 = vmatmul.mubr.f32.gmra.mrb[0].mxu0 %v457
      %v603 = vpop.f32.mrb[0].mxu0
      %v604 = vadd.f32 0.0, %v603
      %v605 = vpop.f32.mrb[0].mxu0
      %606 = vmatprep.mubr.f32.mxu0 %v460
      %607 = vmatmul.mubr.f32.gmra.mrb[0].mxu0 %v458
      %v608 = vpop.f32.mrb[0].mxu0
      %v609 = vadd.f32 0.0, %v608
      %v610 = vpop.f32.mrb[0].mxu0
      %611 = vmatprep.mubr.f32.mxu0 %v461
      %612 = vmatmul.mubr.f32.gmra.mrb[0].mxu0 %v459
      %v613 = vpop.f32.mrb[0].mxu0
      %v614 = vadd.f32 0.0, %v613
      %v615 = vpop.f32.mrb[0].mxu0
      %616 = vmatprep.mubr.f32.mxu0 %v462
      %617 = vmatmul.mubr.f32.gmra.mrb[0].mxu0 %v460
      %v618 = vpop.f32.mrb[0].mxu0
      %v619 = vadd.f32 0.0, %v618
      %v620 = vpop.f32.mrb[0].mxu0
      %621 = vmatprep.mubr.f32.mxu0 %v463
      %622 = vmatmul.mubr.f32.gmra.mrb[0].mxu0 %v461
      %v623 = vpop.f32.mrb[0].mxu0
      %v624 = vadd.f32 0.0, %v623
      %v625 = vpop.f32.mrb[0].mxu0
      %626 = vmatprep.mubr.f32.mxu0 %v464
      %627 = vmatmul.mubr.f32.gmra.mrb[0].mxu0 %v462
      %v628 = vpop.f32.mrb[0].mxu0
      %v629 = vadd.f32 0.0, %v628
      %v630 = vpop.f32.mrb[0].mxu0
      %631 = vmatprep.mubr.f32.mxu0 %v465
      %632 = vmatmul.mubr.f32.gmra.mrb[0].mxu0 %v463
      %v633 = vpop.f32.mrb[0].mxu0
      %v634 = vadd.f32 0.0, %v633
      %v635 = vpop.f32.mrb[0].mxu0
      %636 = vmatprep.mubr.f32.mxu0 %v466
      %637 = vmatmul.mubr.f32.gmra.mrb[0].mxu0 %v464
      %v638 = vpop.f32.mrb[0].mxu0
      %v639 = vadd.f32 0.0, %v638
      %v640 = vpop.f32.mrb[0].mxu0
      %641 = vmatprep.mubr.f32.mxu0 %v467
      %642 = vmatmul.mubr.f32.gmra.mrb[0].mxu0 %v465
      %v643 = vpop.f32.mrb[0].mxu0
      %v644 = vadd.f32 0.0, %v643
      %v645 = vpop.f32.mrb[0].mxu0
      %646 = vmatprep.mubr.f32.mxu0 %v468
      %647 = vmatmul.mubr.f32.gmra.mrb[0].mxu0 %v466
      %v648 = vpop.f32.mrb[0].mxu0
      %v649 = vadd.f32 0.0, %v648
      %v650 = vpop.f32.mrb[0].mxu0
      %651 = vmatprep.mubr.f32.mxu0 %v469
      %652 = vmatmul.mubr.f32.gmra.mrb[0].mxu0 %v467
      %v653 = vpop.f32.mrb[0].mxu0
      %v654 = vadd.f32 0.0, %v653
      %v655 = vpop.f32.mrb[0].mxu0
      %656 = vmatprep.mubr.f32.mxu0 %v470
      %657 = vmatmul.mubr.f32.gmra.mrb[0].mxu0 %v468
      %v658 = vpop.f32.mrb[0].mxu0
      %v659 = vadd.f32 0.0, %v658
      %v660 = vpop.f32.mrb[0].mxu0
      %661 = vmatprep.mubr.f32.mxu0 %v471
      %662 = vmatmul.mubr.f32.gmra.mrb[0].mxu0 %v469
      %v663 = vpop.f32.mrb[0].mxu0
      %v664 = vadd.f32 0.0, %v663
      %v665 = vpop.f32.mrb[0].mxu0
      %666 = vdwg.mxu0
      %667 = vmatprep.subr.mxu0 0.0
      %668 = vmatpush1.msra.mxu0 %v506
      %669 = vmatprep.subr.mxu0 0.0
      %670 = vmatpush1.msra.mxu0 %v507
      %671 = vmatprep.subr.mxu0 0.0
      %672 = vmatpush1.msra.mxu0 %v508
      %673 = vmatprep.subr.mxu0 0.0
      %674 = vmatpush1.msra.mxu0 %v509
      %675 = vmatprep.subr.mxu0 0.0
      %676 = vmatpush1.msra.mxu0 %v510
      %677 = vmatprep.subr.mxu0 0.0
      %678 = vmatpush1.msra.mxu0 %v511
      %679 = vmatprep.subr.mxu0 0.0
      %680 = vmatpush1.msra.mxu0 %v512
      %681 = vmatprep.subr.mxu0 0.0
      %682 = vmatpush1.msra.mxu0 %v513
      %683 = vmatprep.subr.mxu0 0.0
      %684 = vmatpush1.msra.mxu0 %v514
      %685 = vmatprep.subr.mxu0 0.0
      %686 = vmatpush1.msra.mxu0 %v515
      %687 = vmatprep.subr.mxu0 0.0
      %688 = vmatpush1.msra.mxu0 %v516
      %689 = vmatprep.subr.mxu0 0.0
      %690 = vmatpush1.msra.mxu0 %v517
      %691 = vmatprep.subr.mxu0 0.0
      %692 = vmatpush1.msra.mxu0 %v518
      %693 = vmatprep.subr.mxu0 0.0
      %694 = vmatpush1.msra.mxu0 %v519
      %695 = vmatprep.subr.mxu0 0.0
      %696 = vmatpush1.msra.mxu0 %v520
      %697 = vmatprep.subr.mxu0 0.0
      %698 = vmatpush1.msra.mxu0 %v521
      %699 = vmatprep.subr.mxu0 0.0
      %700 = vmatpush1.msra.mxu0 0.0
      %701 = vmatprep.subr.mxu0 0.0
      %702 = vmatpush1.msra.mxu0 0.0
      %703 = vmatprep.subr.mxu0 0.0
      %704 = vmatpush1.msra.mxu0 0.0
      %705 = vmatprep.subr.mxu0 0.0
      %706 = vmatpush1.msra.mxu0 0.0
      %707 = vmatprep.subr.mxu0 0.0
      %708 = vmatpush1.msra.mxu0 0.0
      %709 = vmatprep.subr.mxu0 0.0
      %710 = vmatpush1.msra.mxu0 0.0
      %711 = vmatprep.subr.mxu0 0.0
      %712 = vmatpush1.msra.mxu0 0.0
      %713 = vmatprep.subr.mxu0 0.0
      %714 = vmatpush1.msra.mxu0 0.0
      %715 = vmatprep.subr.mxu0 0.0
      %716 = vmatpush1.msra.mxu0 0.0
      %717 = vmatprep.subr.mxu0 0.0
      %718 = vmatpush1.msra.mxu0 0.0
      %719 = vmatprep.subr.mxu0 0.0
      %720 = vmatpush1.msra.mxu0 0.0
      %721 = vmatprep.subr.mxu0 0.0
      %722 = vmatpush1.msra.mxu0 0.0
      %723 = vmatprep.subr.mxu0 0.0
      %724 = vmatpush1.msra.mxu0 0.0
      %725 = vmatprep.subr.mxu0 0.0
      %726 = vmatpush1.msra.mxu0 0.0
      %727 = vmatprep.subr.mxu0 0.0
      %728 = vmatpush1.msra.mxu0 0.0
      %729 = vmatprep.subr.mxu0 0.0
      %730 = vmatpush1.msra.mxu0 0.0
      %731 = vmatprep.mubr.f32.mxu0 0.0
      %732 = vmatmul.mubr.f32.gmra.mrb[0].mxu0 %v458
      %v733 = vpop.f32.mrb[0].mxu0
      %v734 = vadd.f32 %v589, %v733
      %v735 = vpop.f32.mrb[0].mxu0
      %736 = vmatprep.mubr.f32.mxu0 0.0
      %737 = vmatmul.mubr.f32.gmra.mrb[0].mxu0 %v459
      %v738 = vpop.f32.mrb[0].mxu0
      %v739 = vadd.f32 %v594, %v738
      %v740 = vpop.f32.mrb[0].mxu0
      %741 = vmatprep.mubr.f32.mxu0 0.0
      %742 = vmatmul.mubr.f32.gmra.mrb[0].mxu0 %v460
      %v743 = vpop.f32.mrb[0].mxu0
      %v744 = vadd.f32 %v599, %v743
      %v745 = vpop.f32.mrb[0].mxu0
      %746 = vmatprep.mubr.f32.mxu0 0.0
      %747 = vmatmul.mubr.f32.gmra.mrb[0].mxu0 %v461
      %v748 = vpop.f32.mrb[0].mxu0
      %v749 = vadd.f32 %v604, %v748
      %v750 = vpop.f32.mrb[0].mxu0
      %751 = vmatprep.mubr.f32.mxu0 0.0
      %752 = vmatmul.mubr.f32.gmra.mrb[0].mxu0 %v462
      %v753 = vpop.f32.mrb[0].mxu0
      %v754 = vadd.f32 %v609, %v753
      %v755 = vpop.f32.mrb[0].mxu0
      %756 = vmatprep.mubr.f32.mxu0 0.0
      %757 = vmatmul.mubr.f32.gmra.mrb[0].mxu0 %v463
      %v758 = vpop.f32.mrb[0].mxu0
      %v759 = vadd.f32 %v614, %v758
      %v760 = vpop.f32.mrb[0].mxu0
      %761 = vmatprep.mubr.f32.mxu0 0.0
      %762 = vmatmul.mubr.f32.gmra.mrb[0].mxu0 %v464
      %v763 = vpop.f32.mrb[0].mxu0
      %v764 = vadd.f32 %v619, %v763
      %v765 = vpop.f32.mrb[0].mxu0
      %766 = vmatprep.mubr.f32.mxu0 0.0
      %767 = vmatmul.mubr.f32.gmra.mrb[0].mxu0 %v465
      %v768 = vpop.f32.mrb[0].mxu0
      %v769 = vadd.f32 %v624, %v768
      %v770 = vpop.f32.mrb[0].mxu0
      %771 = vmatprep.mubr.f32.mxu0 0.0
      %772 = vmatmul.mubr.f32.gmra.mrb[0].mxu0 %v466
      %v773 = vpop.f32.mrb[0].mxu0
      %v774 = vadd.f32 %v629, %v773
      %v775 = vpop.f32.mrb[0].mxu0
      %776 = vmatprep.mubr.f32.mxu0 0.0
      %777 = vmatmul.mubr.f32.gmra.mrb[0].mxu0 %v467
      %v778 = vpop.f32.mrb[0].mxu0
      %v779 = vadd.f32 %v634, %v778
      %v780 = vpop.f32.mrb[0].mxu0
      %781 = vmatprep.mubr.f32.mxu0 0.0
      %782 = vmatmul.mubr.f32.gmra.mrb[0].mxu0 %v468
      %v783 = vpop.f32.mrb[0].mxu0
      %v784 = vadd.f32 %v639, %v783
      %v785 = vpop.f32.mrb[0].mxu0
      %786 = vmatprep.mubr.f32.mxu0 0.0
      %787 = vmatmul.mubr.f32.gmra.mrb[0].mxu0 %v469
      %v788 = vpop.f32.mrb[0].mxu0
      %v789 = vadd.f32 %v644, %v788
      %v790 = vpop.f32.mrb[0].mxu0
      %791 = vmatprep.mubr.f32.mxu0 0.0
      %792 = vmatmul.mubr.f32.gmra.mrb[0].mxu0 %v470
      %v793 = vpop.f32.mrb[0].mxu0
      %v794 = vadd.f32 %v649, %v793
      %v795 = vpop.f32.mrb[0].mxu0
      %796 = vmatprep.mubr.f32.mxu0 0.0
      %797 = vmatmul.mubr.f32.gmra.mrb[0].mxu0 %v471
      %v798 = vpop.f32.mrb[0].mxu0
      %v799 = vadd.f32 %v654, %v798
      %v800 = vpop.f32.mrb[0].mxu0
      %801 = vmatprep.mubr.f32.mxu0 0.0
      %802 = vmatmul.mubr.f32.gmra.mrb[0].mxu0 %v472
      %v803 = vpop.f32.mrb[0].mxu0
      %v804 = vadd.f32 %v659, %v803
      %v805 = vpop.f32.mrb[0].mxu0
      %806 = vmatprep.mubr.f32.mxu0 0.0
      %807 = vmatmul.mubr.f32.gmra.mrb[0].mxu0 %v473
      %v808 = vpop.f32.mrb[0].mxu0
      %v809 = vadd.f32 %v664, %v808
      %v810 = vpop.f32.mrb[0].mxu0
      %811 = vdwg.mxu0
      %v812 = vld [vmem:[#allocation2 + $0x11] sm:$0xff]
      %v813 = vld [vmem:[#allocation2 + $0x19] sm:$0xff]
      %v814 = vld [vmem:[#allocation2 + $0x21] sm:$0xff]
      %v815 = vld [vmem:[#allocation2 + $0x29] sm:$0xff]
      %v816 = vld [vmem:[#allocation2 + $0x31] sm:$0xff]
      %v817 = vld [vmem:[#allocation2 + $0x39] sm:$0xff]
      %v818 = vld [vmem:[#allocation2 + $0x41] sm:$0xff]
      %v819 = vld [vmem:[#allocation2 + $0x49] sm:$0xff]
      %v820 = vld [vmem:[#allocation2 + $0x51] sm:$0xff]
      %v821 = vld [vmem:[#allocation2 + $0x59] sm:$0xff]
      %v822 = vld [vmem:[#allocation2 + $0x61] sm:$0xff]
      %v823 = vld [vmem:[#allocation2 + $0x69] sm:$0xff]
      %v824 = vld [vmem:[#allocation2 + $0x71] sm:$0xff]
      %v825 = vld [vmem:[#allocation2 + $0x79] sm:$0xff]
      %v826 = vld [vmem:[#allocation2 + $0x81] sm:$0xff]
      %v827 = vld [vmem:[#allocation2 + $0x89] sm:$0xff]
      %v828 = vld [vmem:[#allocation2 + $0x91] sm:$0xff]
      %v829 = vld [vmem:[#allocation2 + $0x99] sm:$0xff]
      %v830 = vld [vmem:[#allocation2 + $0xa1] sm:$0xff]
      %v831 = vld [vmem:[#allocation2 + $0xa9] sm:$0xff]
      %s832 = scalar_lea.vmem %s2, 768
      %v833 = vld [vmem:[%s832] sm:$0xff]
      %v834 = vld [vmem:[%s832 + $0x8] sm:$0xff]
      %v835 = vld [vmem:[%s832 + $0x10] sm:$0xff]
      %v836 = vld [vmem:[%s832 + $0x18] sm:$0xff]
      %v837 = vld [vmem:[%s832 + $0x20] sm:$0xff]
      %v838 = vld [vmem:[%s832 + $0x28] sm:$0xff]
      %v839 = vld [vmem:[%s832 + $0x30] sm:$0xff]
      %v840 = vld [vmem:[%s832 + $0x38] sm:$0xff]
      %v841 = vld [vmem:[%s832 + $0x40] sm:$0xff]
      %v842 = vld [vmem:[%s832 + $0x48] sm:$0xff]
      %v843 = vld [vmem:[%s832 + $0x50] sm:$0xff]
      %v844 = vld [vmem:[%s832 + $0x58] sm:$0xff]
      %v845 = vld [vmem:[%s832 + $0x60] sm:$0xff]
      %v846 = vld [vmem:[%s832 + $0x68] sm:$0xff]
      %v847 = vld [vmem:[%s832 + $0x70] sm:$0xff]
      %v848 = vld [vmem:[%s832 + $0x78] sm:$0xff]
      %v849 = vld [vmem:[%s832 + $0x80] sm:$0xff]
      %v850 = vld [vmem:[%s832 + $0x88] sm:$0xff]
      %v851 = vld [vmem:[%s832 + $0x90] sm:$0xff]
      %v852 = vld [vmem:[%s832 + $0x98] sm:$0xff]
      %v853 = vld [vmem:[%s832 + $0xa0] sm:$0xff]
      %v854 = vld [vmem:[%s832 + $0xa8] sm:$0xff]
      %v855 = vld [vmem:[%s832 + $0xb0] sm:$0xff]
      %v856 = vld [vmem:[%s832 + $0xb8] sm:$0xff]
      %v857 = vld [vmem:[%s832 + $0xc0] sm:$0xff]
      %v858 = vld [vmem:[%s832 + $0xc8] sm:$0xff]
      %v859 = vld [vmem:[%s832 + $0xd0] sm:$0xff]
      %v860 = vld [vmem:[%s832 + $0xd8] sm:$0xff]
      %v861 = vld [vmem:[%s832 + $0xe0] sm:$0xff]
      %v862 = vld [vmem:[%s832 + $0xe8] sm:$0xff]
      %v863 = vld [vmem:[%s832 + $0xf0] sm:$0xff]
      %v864 = vld [vmem:[%s832 + $0xf8] sm:$0xff]
      %v865 = vld [vmem:[%s832 + $0x100] sm:$0xff]
      %v866 = vld [vmem:[%s832 + $0x108] sm:$0xff]
      %v867 = vld [vmem:[%s832 + $0x110] sm:$0xff]
      %v868 = vld [vmem:[%s832 + $0x118] sm:$0xff]
      %v869 = vld [vmem:[%s832 + $0x120] sm:$0xff]
      %v870 = vld [vmem:[%s832 + $0x128] sm:$0xff]
      %v871 = vld [vmem:[%s832 + $0x130] sm:$0xff]
      %v872 = vld [vmem:[%s832 + $0x138] sm:$0xff]
      %v873 = vld [vmem:[%s832 + $0x140] sm:$0xff]
      %v874 = vld [vmem:[%s832 + $0x148] sm:$0xff]
      %v875 = vld [vmem:[%s832 + $0x150] sm:$0xff]
      %v876 = vld [vmem:[%s832 + $0x158] sm:$0xff]
      %v877 = vld [vmem:[%s832 + $0x160] sm:$0xff]
      %v878 = vld [vmem:[%s832 + $0x168] sm:$0xff]
      %v879 = vld [vmem:[%s832 + $0x170] sm:$0xff]
      %v880 = vld [vmem:[%s832 + $0x178] sm:$0xff]
      %881 = vmatprep.subr.mxu0 0.0
      %882 = vmatpush1.msra.mxu0 %v833
      %883 = vmatprep.subr.mxu0 0.0
      %884 = vmatpush1.msra.mxu0 %v834
      %885 = vmatprep.subr.mxu0 0.0
      %886 = vmatpush1.msra.mxu0 %v835
      %887 = vmatprep.subr.mxu0 0.0
      %888 = vmatpush1.msra.mxu0 %v836
      %889 = vmatprep.subr.mxu0 0.0
      %890 = vmatpush1.msra.mxu0 %v837
      %891 = vmatprep.subr.mxu0 0.0
      %892 = vmatpush1.msra.mxu0 %v838
      %893 = vmatprep.subr.mxu0 0.0
      %894 = vmatpush1.msra.mxu0 %v839
      %895 = vmatprep.subr.mxu0 0.0
      %896 = vmatpush1.msra.mxu0 %v840
      %897 = vmatprep.subr.mxu0 0.0
      %898 = vmatpush1.msra.mxu0 %v841
      %899 = vmatprep.subr.mxu0 0.0
      %900 = vmatpush1.msra.mxu0 %v842
      %901 = vmatprep.subr.mxu0 0.0
      %902 = vmatpush1.msra.mxu0 %v843
      %903 = vmatprep.subr.mxu0 0.0
      %904 = vmatpush1.msra.mxu0 %v844
      %905 = vmatprep.subr.mxu0 0.0
      %906 = vmatpush1.msra.mxu0 %v845
      %907 = vmatprep.subr.mxu0 0.0
      %908 = vmatpush1.msra.mxu0 %v846
      %909 = vmatprep.subr.mxu0 0.0
      %910 = vmatpush1.msra.mxu0 %v847
      %911 = vmatprep.subr.mxu0 0.0
      %912 = vmatpush1.msra.mxu0 %v848
      %913 = vmatprep.subr.mxu0 0.0
      %914 = vmatpush1.msra.mxu0 %v849
      %915 = vmatprep.subr.mxu0 0.0
      %916 = vmatpush1.msra.mxu0 %v850
      %917 = vmatprep.subr.mxu0 0.0
      %918 = vmatpush1.msra.mxu0 %v851
      %919 = vmatprep.subr.mxu0 0.0
      %920 = vmatpush1.msra.mxu0 %v852
      %921 = vmatprep.subr.mxu0 0.0
      %922 = vmatpush1.msra.mxu0 %v853
      %923 = vmatprep.subr.mxu0 0.0
      %924 = vmatpush1.msra.mxu0 %v854
      %925 = vmatprep.subr.mxu0 0.0
      %926 = vmatpush1.msra.mxu0 %v855
      %927 = vmatprep.subr.mxu0 0.0
      %928 = vmatpush1.msra.mxu0 %v856
      %929 = vmatprep.subr.mxu0 0.0
      %930 = vmatpush1.msra.mxu0 %v857
      %931 = vmatprep.subr.mxu0 0.0
      %932 = vmatpush1.msra.mxu0 %v858
      %933 = vmatprep.subr.mxu0 0.0
      %934 = vmatpush1.msra.mxu0 %v859
      %935 = vmatprep.subr.mxu0 0.0
      %936 = vmatpush1.msra.mxu0 %v860
      %937 = vmatprep.subr.mxu0 0.0
      %938 = vmatpush1.msra.mxu0 %v861
      %939 = vmatprep.subr.mxu0 0.0
      %940 = vmatpush1.msra.mxu0 %v862
      %941 = vmatprep.subr.mxu0 0.0
      %942 = vmatpush1.msra.mxu0 %v863
      %943 = vmatprep.subr.mxu0 0.0
      %944 = vmatpush1.msra.mxu0 %v864
      %945 = vmatprep.mubr.f32.mxu0 %v814
      %946 = vmatmul.mubr.f32.gmra.mrb[0].mxu0 %v812
      %v947 = vpop.f32.mrb[0].mxu0
      %v948 = vadd.f32 0.0, %v947
      %v949 = vpop.f32.mrb[0].mxu0
      %950 = vmatprep.mubr.f32.mxu0 %v815
      %951 = vmatmul.mubr.f32.gmra.mrb[0].mxu0 %v813
      %v952 = vpop.f32.mrb[0].mxu0
      %v953 = vadd.f32 0.0, %v952
      %v954 = vpop.f32.mrb[0].mxu0
      %955 = vmatprep.mubr.f32.mxu0 %v816
      %956 = vmatmul.mubr.f32.gmra.mrb[0].mxu0 %v814
      %v957 = vpop.f32.mrb[0].mxu0
      %v958 = vadd.f32 0.0, %v957
      %v959 = vpop.f32.mrb[0].mxu0
      %960 = vmatprep.mubr.f32.mxu0 %v817
      %961 = vmatmul.mubr.f32.gmra.mrb[0].mxu0 %v815
      %v962 = vpop.f32.mrb[0].mxu0
      %v963 = vadd.f32 0.0, %v962
      %v964 = vpop.f32.mrb[0].mxu0
      %965 = vmatprep.mubr.f32.mxu0 %v818
      %966 = vmatmul.mubr.f32.gmra.mrb[0].mxu0 %v816
      %v967 = vpop.f32.mrb[0].mxu0
      %v968 = vadd.f32 0.0, %v967
      %v969 = vpop.f32.mrb[0].mxu0
      %970 = vmatprep.mubr.f32.mxu0 %v819
      %971 = vmatmul.mubr.f32.gmra.mrb[0].mxu0 %v817
      %v972 = vpop.f32.mrb[0].mxu0
      %v973 = vadd.f32 0.0, %v972
      %v974 = vpop.f32.mrb[0].mxu0
      %975 = vmatprep.mubr.f32.mxu0 %v820
      %976 = vmatmul.mubr.f32.gmra.mrb[0].mxu0 %v818
      %v977 = vpop.f32.mrb[0].mxu0
      %v978 = vadd.f32 0.0, %v977
      %v979 = vpop.f32.mrb[0].mxu0
      %980 = vmatprep.mubr.f32.mxu0 %v821
      %981 = vmatmul.mubr.f32.gmra.mrb[0].mxu0 %v819
      %v982 = vpop.f32.mrb[0].mxu0
      %v983 = vadd.f32 0.0, %v982
      %v984 = vpop.f32.mrb[0].mxu0
      %985 = vmatprep.mubr.f32.mxu0 %v822
      %986 = vmatmul.mubr.f32.gmra.mrb[0].mxu0 %v820
      %v987 = vpop.f32.mrb[0].mxu0
      %v988 = vadd.f32 0.0, %v987
      %v989 = vpop.f32.mrb[0].mxu0
      %990 = vmatprep.mubr.f32.mxu0 %v823
      %991 = vmatmul.mubr.f32.gmra.mrb[0].mxu0 %v821
      %v992 = vpop.f32.mrb[0].mxu0
      %v993 = vadd.f32 0.0, %v992
      %v994 = vpop.f32.mrb[0].mxu0
      %995 = vmatprep.mubr.f32.mxu0 %v824
      %996 = vmatmul.mubr.f32.gmra.mrb[0].mxu0 %v822
      %v997 = vpop.f32.mrb[0].mxu0
      %v998 = vadd.f32 0.0, %v997
      %v999 = vpop.f32.mrb[0].mxu0
      %1000 = vmatprep.mubr.f32.mxu0 %v825
      %1001 = vmatmul.mubr.f32.gmra.mrb[0].mxu0 %v823
      %v1002 = vpop.f32.mrb[0].mxu0
      %v1003 = vadd.f32 0.0, %v1002
      %v1004 = vpop.f32.mrb[0].mxu0
      %1005 = vmatprep.mubr.f32.mxu0 %v826
      %1006 = vmatmul.mubr.f32.gmra.mrb[0].mxu0 %v824
      %v1007 = vpop.f32.mrb[0].mxu0
      %v1008 = vadd.f32 0.0, %v1007
      %v1009 = vpop.f32.mrb[0].mxu0
      %1010 = vmatprep.mubr.f32.mxu0 %v827
      %1011 = vmatmul.mubr.f32.gmra.mrb[0].mxu0 %v825
      %v1012 = vpop.f32.mrb[0].mxu0
      %v1013 = vadd.f32 0.0, %v1012
      %v1014 = vpop.f32.mrb[0].mxu0
      %1015 = vmatprep.mubr.f32.mxu0 %v828
      %1016 = vmatmul.mubr.f32.gmra.mrb[0].mxu0 %v826
      %v1017 = vpop.f32.mrb[0].mxu0
      %v1018 = vadd.f32 0.0, %v1017
      %v1019 = vpop.f32.mrb[0].mxu0
      %1020 = vmatprep.mubr.f32.mxu0 %v829
      %1021 = vmatmul.mubr.f32.gmra.mrb[0].mxu0 %v827
      %v1022 = vpop.f32.mrb[0].mxu0
      %v1023 = vadd.f32 0.0, %v1022
      %v1024 = vpop.f32.mrb[0].mxu0
      %1025 = vdwg.mxu0
      %1026 = vmatprep.subr.mxu0 0.0
      %1027 = vmatpush1.msra.mxu0 %v865
      %1028 = vmatprep.subr.mxu0 0.0
      %1029 = vmatpush1.msra.mxu0 %v866
      %1030 = vmatprep.subr.mxu0 0.0
      %1031 = vmatpush1.msra.mxu0 %v867
      %1032 = vmatprep.subr.mxu0 0.0
      %1033 = vmatpush1.msra.mxu0 %v868
      %1034 = vmatprep.subr.mxu0 0.0
      %1035 = vmatpush1.msra.mxu0 %v869
      %1036 = vmatprep.subr.mxu0 0.0
      %1037 = vmatpush1.msra.mxu0 %v870
      %1038 = vmatprep.subr.mxu0 0.0
      %1039 = vmatpush1.msra.mxu0 %v871
      %1040 = vmatprep.subr.mxu0 0.0
      %1041 = vmatpush1.msra.mxu0 %v872
      %1042 = vmatprep.subr.mxu0 0.0
      %1043 = vmatpush1.msra.mxu0 %v873
      %1044 = vmatprep.subr.mxu0 0.0
      %1045 = vmatpush1.msra.mxu0 %v874
      %1046 = vmatprep.subr.mxu0 0.0
      %1047 = vmatpush1.msra.mxu0 %v875
      %1048 = vmatprep.subr.mxu0 0.0
      %1049 = vmatpush1.msra.mxu0 %v876
      %1050 = vmatprep.subr.mxu0 0.0
      %1051 = vmatpush1.msra.mxu0 %v877
      %1052 = vmatprep.subr.mxu0 0.0
      %1053 = vmatpush1.msra.mxu0 %v878
      %1054 = vmatprep.subr.mxu0 0.0
      %1055 = vmatpush1.msra.mxu0 %v879
      %1056 = vmatprep.subr.mxu0 0.0
      %1057 = vmatpush1.msra.mxu0 %v880
      %1058 = vmatprep.subr.mxu0 0.0
      %1059 = vmatpush1.msra.mxu0 0.0
      %1060 = vmatprep.subr.mxu0 0.0
      %1061 = vmatpush1.msra.mxu0 0.0
      %1062 = vmatprep.subr.mxu0 0.0
      %1063 = vmatpush1.msra.mxu0 0.0
      %1064 = vmatprep.subr.mxu0 0.0
      %1065 = vmatpush1.msra.mxu0 0.0
      %1066 = vmatprep.subr.mxu0 0.0
      %1067 = vmatpush1.msra.mxu0 0.0
      %1068 = vmatprep.subr.mxu0 0.0
      %1069 = vmatpush1.msra.mxu0 0.0
      %1070 = vmatprep.subr.mxu0 0.0
      %1071 = vmatpush1.msra.mxu0 0.0
      %1072 = vmatprep.subr.mxu0 0.0
      %1073 = vmatpush1.msra.mxu0 0.0
      %1074 = vmatprep.subr.mxu0 0.0
      %1075 = vmatpush1.msra.mxu0 0.0
      %1076 = vmatprep.subr.mxu0 0.0
      %1077 = vmatpush1.msra.mxu0 0.0
      %1078 = vmatprep.subr.mxu0 0.0
      %1079 = vmatpush1.msra.mxu0 0.0
      %1080 = vmatprep.subr.mxu0 0.0
      %1081 = vmatpush1.msra.mxu0 0.0
      %1082 = vmatprep.subr.mxu0 0.0
      %1083 = vmatpush1.msra.mxu0 0.0
      %1084 = vmatprep.subr.mxu0 0.0
      %1085 = vmatpush1.msra.mxu0 0.0
      %1086 = vmatprep.subr.mxu0 0.0
      %1087 = vmatpush1.msra.mxu0 0.0
      %1088 = vmatprep.subr.mxu0 0.0
      %1089 = vmatpush1.msra.mxu0 0.0
      %1090 = vmatprep.mubr.f32.mxu0 0.0
      %1091 = vmatmul.mubr.f32.gmra.mrb[0].mxu0 %v816
      %v1092 = vpop.f32.mrb[0].mxu0
      %v1093 = vadd.f32 %v948, %v1092
      %v1094 = vpop.f32.mrb[0].mxu0
      %1095 = vmatprep.mubr.f32.mxu0 0.0
      %1096 = vmatmul.mubr.f32.gmra.mrb[0].mxu0 %v817
      %v1097 = vpop.f32.mrb[0].mxu0
      %v1098 = vadd.f32 %v953, %v1097
      %v1099 = vpop.f32.mrb[0].mxu0
      %1100 = vmatprep.mubr.f32.mxu0 0.0
      %1101 = vmatmul.mubr.f32.gmra.mrb[0].mxu0 %v818
      %v1102 = vpop.f32.mrb[0].mxu0
      %v1103 = vadd.f32 %v958, %v1102
      %v1104 = vpop.f32.mrb[0].mxu0
      %1105 = vmatprep.mubr.f32.mxu0 0.0
      %1106 = vmatmul.mubr.f32.gmra.mrb[0].mxu0 %v819
      %v1107 = vpop.f32.mrb[0].mxu0
      %v1108 = vadd.f32 %v963, %v1107
      %v1109 = vpop.f32.mrb[0].mxu0
      %1110 = vmatprep.mubr.f32.mxu0 0.0
      %1111 = vmatmul.mubr.f32.gmra.mrb[0].mxu0 %v820
      %v1112 = vpop.f32.mrb[0].mxu0
      %v1113 = vadd.f32 %v968, %v1112
      %v1114 = vpop.f32.mrb[0].mxu0
      %1115 = vmatprep.mubr.f32.mxu0 0.0
      %1116 = vmatmul.mubr.f32.gmra.mrb[0].mxu0 %v821
      %v1117 = vpop.f32.mrb[0].mxu0
      %v1118 = vadd.f32 %v973, %v1117
      %v1119 = vpop.f32.mrb[0].mxu0
      %1120 = vmatprep.mubr.f32.mxu0 0.0
      %1121 = vmatmul.mubr.f32.gmra.mrb[0].mxu0 %v822
      %v1122 = vpop.f32.mrb[0].mxu0
      %v1123 = vadd.f32 %v978, %v1122
      %v1124 = vpop.f32.mrb[0].mxu0
      %1125 = vmatprep.mubr.f32.mxu0 0.0
      %1126 = vmatmul.mubr.f32.gmra.mrb[0].mxu0 %v823
      %v1127 = vpop.f32.mrb[0].mxu0
      %v1128 = vadd.f32 %v983, %v1127
      %v1129 = vpop.f32.mrb[0].mxu0
      %1130 = vmatprep.mubr.f32.mxu0 0.0
      %1131 = vmatmul.mubr.f32.gmra.mrb[0].mxu0 %v824
      %v1132 = vpop.f32.mrb[0].mxu0
      %v1133 = vadd.f32 %v988, %v1132
      %v1134 = vpop.f32.mrb[0].mxu0
      %1135 = vmatprep.mubr.f32.mxu0 0.0
      %1136 = vmatmul.mubr.f32.gmra.mrb[0].mxu0 %v825
      %v1137 = vpop.f32.mrb[0].mxu0
      %v1138 = vadd.f32 %v993, %v1137
      %v1139 = vpop.f32.mrb[0].mxu0
      %1140 = vmatprep.mubr.f32.mxu0 0.0
      %1141 = vmatmul.mubr.f32.gmra.mrb[0].mxu0 %v826
      %v1142 = vpop.f32.mrb[0].mxu0
      %v1143 = vadd.f32 %v998, %v1142
      %v1144 = vpop.f32.mrb[0].mxu0
      %1145 = vmatprep.mubr.f32.mxu0 0.0
      %1146 = vmatmul.mubr.f32.gmra.mrb[0].mxu0 %v827
      %v1147 = vpop.f32.mrb[0].mxu0
      %v1148 = vadd.f32 %v1003, %v1147
      %v1149 = vpop.f32.mrb[0].mxu0
      %1150 = vmatprep.mubr.f32.mxu0 0.0
      %1151 = vmatmul.mubr.f32.gmra.mrb[0].mxu0 %v828
      %v1152 = vpop.f32.mrb[0].mxu0
      %v1153 = vadd.f32 %v1008, %v1152
      %v1154 = vpop.f32.mrb[0].mxu0
      %1155 = vmatprep.mubr.f32.mxu0 0.0
      %1156 = vmatmul.mubr.f32.gmra.mrb[0].mxu0 %v829
      %v1157 = vpop.f32.mrb[0].mxu0
      %v1158 = vadd.f32 %v1013, %v1157
      %v1159 = vpop.f32.mrb[0].mxu0
      %1160 = vmatprep.mubr.f32.mxu0 0.0
      %1161 = vmatmul.mubr.f32.gmra.mrb[0].mxu0 %v830
      %v1162 = vpop.f32.mrb[0].mxu0
      %v1163 = vadd.f32 %v1018, %v1162
      %v1164 = vpop.f32.mrb[0].mxu0
      %1165 = vmatprep.mubr.f32.mxu0 0.0
      %1166 = vmatmul.mubr.f32.gmra.mrb[0].mxu0 %v831
      %v1167 = vpop.f32.mrb[0].mxu0
      %v1168 = vadd.f32 %v1023, %v1167
      %v1169 = vpop.f32.mrb[0].mxu0
      %1170 = vdwg.mxu0
      %v1171 = vlaneseq
      %v1172 = vshrl.u32 %v1171, 7
      %v1173 = vadd.s32 %v1172, 8
      %v1174 = vadd.s32 %v1172, 16
      %v1175 = vadd.s32 %v1172, 24
      %v1176 = vadd.s32 %v1172, 32
      %v1177 = vadd.s32 %v1172, 40
      %v1178 = vadd.s32 %v1172, 48
      %v1179 = vadd.s32 %v1172, 56
      %v1180 = vadd.s32 %v1172, 64
      %v1181 = vadd.s32 %v1172, 72
      %v1182 = vadd.s32 %v1172, 80
      %v1183 = vadd.s32 %v1172, 88
      %v1184 = vadd.s32 %v1172, 96
      %v1185 = vadd.s32 %v1172, 104
      %v1186 = vadd.s32 %v1172, 112
      %v1187 = vadd.s32 %v1172, 120
      %vm1188 = vcmp.lt.s32.totalorder %v1172, 0
      %v1189 = vsub.s32 0, %v1172
      %v1190 = vsel %vm1188, %v1189, %v1172
      %v1191 = vshrl.u32 %v1190, 4
      %v1192 = vand.u32 %v1190, 15
      %v1193 = vsub.s32 0, %v1192
      %v1194 = vsel %vm1188, %v1193, %v1192
      %vm1195 = vcmp.lt.s32.totalorder %v1173, 0
      %v1196 = vsub.s32 0, %v1173
      %v1197 = vsel %vm1195, %v1196, %v1173
      %v1198 = vshrl.u32 %v1197, 4
      %v1199 = vand.u32 %v1197, 15
      %v1200 = vsub.s32 0, %v1199
      %v1201 = vsel %vm1195, %v1200, %v1199
      %vm1202 = vcmp.lt.s32.totalorder %v1174, 0
      %v1203 = vsub.s32 0, %v1174
      %v1204 = vsel %vm1202, %v1203, %v1174
      %v1205 = vshrl.u32 %v1204, 4
      %v1206 = vand.u32 %v1204, 15
      %v1207 = vsub.s32 0, %v1206
      %v1208 = vsel %vm1202, %v1207, %v1206
      %vm1209 = vcmp.lt.s32.totalorder %v1175, 0
      %v1210 = vsub.s32 0, %v1175
      %v1211 = vsel %vm1209, %v1210, %v1175
      %v1212 = vshrl.u32 %v1211, 4
      %v1213 = vand.u32 %v1211, 15
      %v1214 = vsub.s32 0, %v1213
      %v1215 = vsel %vm1209, %v1214, %v1213
      %vm1216 = vcmp.lt.s32.totalorder %v1176, 0
      %v1217 = vsub.s32 0, %v1176
      %v1218 = vsel %vm1216, %v1217, %v1176
      %v1219 = vshrl.u32 %v1218, 4
      %v1220 = vand.u32 %v1218, 15
      %v1221 = vsub.s32 0, %v1220
      %v1222 = vsel %vm1216, %v1221, %v1220
      %vm1223 = vcmp.lt.s32.totalorder %v1177, 0
      %v1224 = vsub.s32 0, %v1177
      %v1225 = vsel %vm1223, %v1224, %v1177
      %v1226 = vshrl.u32 %v1225, 4
      %v1227 = vand.u32 %v1225, 15
      %v1228 = vsub.s32 0, %v1227
      %v1229 = vsel %vm1223, %v1228, %v1227
      %vm1230 = vcmp.lt.s32.totalorder %v1178, 0
      %v1231 = vsub.s32 0, %v1178
      %v1232 = vsel %vm1230, %v1231, %v1178
      %v1233 = vshrl.u32 %v1232, 4
      %v1234 = vand.u32 %v1232, 15
      %v1235 = vsub.s32 0, %v1234
      %v1236 = vsel %vm1230, %v1235, %v1234
      %vm1237 = vcmp.lt.s32.totalorder %v1179, 0
      %v1238 = vsub.s32 0, %v1179
      %v1239 = vsel %vm1237, %v1238, %v1179
      %v1240 = vshrl.u32 %v1239, 4
      %v1241 = vand.u32 %v1239, 15
      %v1242 = vsub.s32 0, %v1241
      %v1243 = vsel %vm1237, %v1242, %v1241
      %vm1244 = vcmp.lt.s32.totalorder %v1180, 0
      %v1245 = vsub.s32 0, %v1180
      %v1246 = vsel %vm1244, %v1245, %v1180
      %v1247 = vshrl.u32 %v1246, 4
      %v1248 = vand.u32 %v1246, 15
      %v1249 = vsub.s32 0, %v1248
      %v1250 = vsel %vm1244, %v1249, %v1248
      %vm1251 = vcmp.lt.s32.totalorder %v1181, 0
      %v1252 = vsub.s32 0, %v1181
      %v1253 = vsel %vm1251, %v1252, %v1181
      %v1254 = vshrl.u32 %v1253, 4
      %v1255 = vand.u32 %v1253, 15
      %v1256 = vsub.s32 0, %v1255
      %v1257 = vsel %vm1251, %v1256, %v1255
      %vm1258 = vcmp.lt.s32.totalorder %v1182, 0
      %v1259 = vsub.s32 0, %v1182
      %v1260 = vsel %vm1258, %v1259, %v1182
      %v1261 = vshrl.u32 %v1260, 4
      %v1262 = vand.u32 %v1260, 15
      %v1263 = vsub.s32 0, %v1262
      %v1264 = vsel %vm1258, %v1263, %v1262
      %vm1265 = vcmp.lt.s32.totalorder %v1183, 0
      %v1266 = vsub.s32 0, %v1183
      %v1267 = vsel %vm1265, %v1266, %v1183
      %v1268 = vshrl.u32 %v1267, 4
      %v1269 = vand.u32 %v1267, 15
      %v1270 = vsub.s32 0, %v1269
      %v1271 = vsel %vm1265, %v1270, %v1269
      %vm1272 = vcmp.lt.s32.totalorder %v1184, 0
      %v1273 = vsub.s32 0, %v1184
      %v1274 = vsel %vm1272, %v1273, %v1184
      %v1275 = vshrl.u32 %v1274, 4
      %v1276 = vand.u32 %v1274, 15
      %v1277 = vsub.s32 0, %v1276
      %v1278 = vsel %vm1272, %v1277, %v1276
      %vm1279 = vcmp.lt.s32.totalorder %v1185, 0
      %v1280 = vsub.s32 0, %v1185
      %v1281 = vsel %vm1279, %v1280, %v1185
      %v1282 = vshrl.u32 %v1281, 4
      %v1283 = vand.u32 %v1281, 15
      %v1284 = vsub.s32 0, %v1283
      %v1285 = vsel %vm1279, %v1284, %v1283
      %vm1286 = vcmp.lt.s32.totalorder %v1186, 0
      %v1287 = vsub.s32 0, %v1186
      %v1288 = vsel %vm1286, %v1287, %v1186
      %v1289 = vshrl.u32 %v1288, 4
      %v1290 = vand.u32 %v1288, 15
      %v1291 = vsub.s32 0, %v1290
      %v1292 = vsel %vm1286, %v1291, %v1290
      %vm1293 = vcmp.lt.s32.totalorder %v1187, 0
      %v1294 = vsub.s32 0, %v1187
      %v1295 = vsel %vm1293, %v1294, %v1187
      %v1296 = vshrl.u32 %v1295, 4
      %v1297 = vand.u32 %v1295, 15
      %v1298 = vsub.s32 0, %v1297
      %v1299 = vsel %vm1293, %v1298, %v1297
      %vm1300 = vcmp.ne.s32.totalorder %v1194, 0
      %vm1301 = vcmp.ne.s32.totalorder %v1201, 0
      %vm1302 = vcmp.ne.s32.totalorder %v1208, 0
      %vm1303 = vcmp.ne.s32.totalorder %v1215, 0
      %vm1304 = vcmp.ne.s32.totalorder %v1222, 0
      %vm1305 = vcmp.ne.s32.totalorder %v1229, 0
      %vm1306 = vcmp.ne.s32.totalorder %v1236, 0
      %vm1307 = vcmp.ne.s32.totalorder %v1243, 0
      %vm1308 = vcmp.ne.s32.totalorder %v1250, 0
      %vm1309 = vcmp.ne.s32.totalorder %v1257, 0
      %vm1310 = vcmp.ne.s32.totalorder %v1264, 0
      %vm1311 = vcmp.ne.s32.totalorder %v1271, 0
      %vm1312 = vcmp.ne.s32.totalorder %v1278, 0
      %vm1313 = vcmp.ne.s32.totalorder %v1285, 0
      %vm1314 = vcmp.ne.s32.totalorder %v1292, 0
      %vm1315 = vcmp.ne.s32.totalorder %v1299, 0
      %vm1316 = vcmp.lt.s32.totalorder %v1194, 0
      %vm1317 = vcmp.lt.s32.totalorder %v1201, 0
      %vm1318 = vcmp.lt.s32.totalorder %v1208, 0
      %vm1319 = vcmp.lt.s32.totalorder %v1215, 0
      %vm1320 = vcmp.lt.s32.totalorder %v1222, 0
      %vm1321 = vcmp.lt.s32.totalorder %v1229, 0
      %vm1322 = vcmp.lt.s32.totalorder %v1236, 0
      %vm1323 = vcmp.lt.s32.totalorder %v1243, 0
      %vm1324 = vcmp.lt.s32.totalorder %v1250, 0
      %vm1325 = vcmp.lt.s32.totalorder %v1257, 0
      %vm1326 = vcmp.lt.s32.totalorder %v1264, 0
      %vm1327 = vcmp.lt.s32.totalorder %v1271, 0
      %vm1328 = vcmp.lt.s32.totalorder %v1278, 0
      %vm1329 = vcmp.lt.s32.totalorder %v1285, 0
      %vm1330 = vcmp.lt.s32.totalorder %v1292, 0
      %vm1331 = vcmp.lt.s32.totalorder %v1299, 0
      %vm1332 = vmand %vm1316, %vm1300
      %vm1333 = vmand %vm1317, %vm1301
      %vm1334 = vmand %vm1318, %vm1302
      %vm1335 = vmand %vm1319, %vm1303
      %vm1336 = vmand %vm1320, %vm1304
      %vm1337 = vmand %vm1321, %vm1305
      %vm1338 = vmand %vm1322, %vm1306
      %vm1339 = vmand %vm1323, %vm1307
      %vm1340 = vmand %vm1324, %vm1308
      %vm1341 = vmand %vm1325, %vm1309
      %vm1342 = vmand %vm1326, %vm1310
      %vm1343 = vmand %vm1327, %vm1311
      %vm1344 = vmand %vm1328, %vm1312
      %vm1345 = vmand %vm1329, %vm1313
      %vm1346 = vmand %vm1330, %vm1314
      %vm1347 = vmand %vm1331, %vm1315
      %v1348 = vadd.s32 %v1194, 16
      %v1349 = vadd.s32 %v1201, 16
      %v1350 = vadd.s32 %v1208, 16
      %v1351 = vadd.s32 %v1215, 16
      %v1352 = vadd.s32 %v1222, 16
      %v1353 = vadd.s32 %v1229, 16
      %v1354 = vadd.s32 %v1236, 16
      %v1355 = vadd.s32 %v1243, 16
      %v1356 = vadd.s32 %v1250, 16
      %v1357 = vadd.s32 %v1257, 16
      %v1358 = vadd.s32 %v1264, 16
      %v1359 = vadd.s32 %v1271, 16
      %v1360 = vadd.s32 %v1278, 16
      %v1361 = vadd.s32 %v1285, 16
      %v1362 = vadd.s32 %v1292, 16
      %v1363 = vadd.s32 %v1299, 16
      %v1364 = vsel %vm1332, %v1348, %v1194
      %v1365 = vsel %vm1333, %v1349, %v1201
      %v1366 = vsel %vm1334, %v1350, %v1208
      %v1367 = vsel %vm1335, %v1351, %v1215
      %v1368 = vsel %vm1336, %v1352, %v1222
      %v1369 = vsel %vm1337, %v1353, %v1229
      %v1370 = vsel %vm1338, %v1354, %v1236
      %v1371 = vsel %vm1339, %v1355, %v1243
      %v1372 = vsel %vm1340, %v1356, %v1250
      %v1373 = vsel %vm1341, %v1357, %v1257
      %v1374 = vsel %vm1342, %v1358, %v1264
      %v1375 = vsel %vm1343, %v1359, %v1271
      %v1376 = vsel %vm1344, %v1360, %v1278
      %v1377 = vsel %vm1345, %v1361, %v1285
      %v1378 = vsel %vm1346, %v1362, %v1292
      %v1379 = vsel %vm1347, %v1363, %v1299
      %vm1380 = vcmp.ge.s32.totalorder %v1364, 1
      %vm1381 = vcmp.ge.s32.totalorder %v1365, 1
      %vm1382 = vcmp.ge.s32.totalorder %v1366, 1
      %vm1383 = vcmp.ge.s32.totalorder %v1367, 1
      %vm1384 = vcmp.ge.s32.totalorder %v1368, 1
      %vm1385 = vcmp.ge.s32.totalorder %v1369, 1
      %vm1386 = vcmp.ge.s32.totalorder %v1370, 1
      %vm1387 = vcmp.ge.s32.totalorder %v1371, 1
      %vm1388 = vcmp.ge.s32.totalorder %v1372, 1
      %vm1389 = vcmp.ge.s32.totalorder %v1373, 1
      %vm1390 = vcmp.ge.s32.totalorder %v1374, 1
      %vm1391 = vcmp.ge.s32.totalorder %v1375, 1
      %vm1392 = vcmp.ge.s32.totalorder %v1376, 1
      %vm1393 = vcmp.ge.s32.totalorder %v1377, 1
      %vm1394 = vcmp.ge.s32.totalorder %v1378, 1
      %vm1395 = vcmp.ge.s32.totalorder %v1379, 1
      %v1396 = vsel %vm1380, %v734, 0.0
      %v1397 = vsel %vm1381, %v739, 0.0
      %v1398 = vsel %vm1382, %v744, 0.0
      %v1399 = vsel %vm1383, %v749, 0.0
      %v1400 = vsel %vm1384, %v754, 0.0
      %v1401 = vsel %vm1385, %v759, 0.0
      %v1402 = vsel %vm1386, %v764, 0.0
      %v1403 = vsel %vm1387, %v769, 0.0
      %v1404 = vsel %vm1388, %v774, 0.0
      %v1405 = vsel %vm1389, %v779, 0.0
      %v1406 = vsel %vm1390, %v784, 0.0
      %v1407 = vsel %vm1391, %v789, 0.0
      %v1408 = vsel %vm1392, %v794, 0.0
      %v1409 = vsel %vm1393, %v799, 0.0
      %v1410 = vsel %vm1394, %v804, 0.0
      %v1411 = vsel %vm1395, %v809, 0.0
      %1412 = vmatprep.subr.mxu0 0.0
      %1413 = vmatpush1.msra.mxu0 %v406
      %1414 = vmatprep.subr.mxu0 0.0
      %1415 = vmatpush1.msra.mxu0 %v407
      %1416 = vmatprep.subr.mxu0 0.0
      %1417 = vmatpush1.msra.mxu0 %v408
      %1418 = vmatprep.subr.mxu0 0.0
      %1419 = vmatpush1.msra.mxu0 %v409
      %1420 = vmatprep.subr.mxu0 0.0
      %1421 = vmatpush1.msra.mxu0 %v410
      %1422 = vmatprep.subr.mxu0 0.0
      %1423 = vmatpush1.msra.mxu0 %v411
      %1424 = vmatprep.subr.mxu0 0.0
      %1425 = vmatpush1.msra.mxu0 %v412
      %1426 = vmatprep.subr.mxu0 0.0
      %1427 = vmatpush1.msra.mxu0 %v413
      %1428 = vmatprep.subr.mxu0 0.0
      %1429 = vmatpush1.msra.mxu0 %v414
      %1430 = vmatprep.subr.mxu0 0.0
      %1431 = vmatpush1.msra.mxu0 %v415
      %1432 = vmatprep.subr.mxu0 0.0
      %1433 = vmatpush1.msra.mxu0 %v416
      %1434 = vmatprep.subr.mxu0 0.0
      %1435 = vmatpush1.msra.mxu0 %v417
      %1436 = vmatprep.subr.mxu0 0.0
      %1437 = vmatpush1.msra.mxu0 %v418
      %1438 = vmatprep.subr.mxu0 0.0
      %1439 = vmatpush1.msra.mxu0 %v419
      %1440 = vmatprep.subr.mxu0 0.0
      %1441 = vmatpush1.msra.mxu0 %v420
      %1442 = vmatprep.subr.mxu0 0.0
      %1443 = vmatpush1.msra.mxu0 %v421
      %1444 = vmatprep.subr.mxu0 0.0
      %1445 = vmatpush1.msra.mxu0 %v422
      %1446 = vmatprep.subr.mxu0 0.0
      %1447 = vmatpush1.msra.mxu0 %v423
      %1448 = vmatprep.subr.mxu0 0.0
      %1449 = vmatpush1.msra.mxu0 %v424
      %1450 = vmatprep.subr.mxu0 0.0
      %1451 = vmatpush1.msra.mxu0 %v425
      %1452 = vmatprep.subr.mxu0 0.0
      %1453 = vmatpush1.msra.mxu0 %v426
      %1454 = vmatprep.subr.mxu0 0.0
      %1455 = vmatpush1.msra.mxu0 %v427
      %1456 = vmatprep.subr.mxu0 0.0
      %1457 = vmatpush1.msra.mxu0 %v428
      %1458 = vmatprep.subr.mxu0 0.0
      %1459 = vmatpush1.msra.mxu0 %v429
      %1460 = vmatprep.subr.mxu0 0.0
      %1461 = vmatpush1.msra.mxu0 %v430
      %1462 = vmatprep.subr.mxu0 0.0
      %1463 = vmatpush1.msra.mxu0 %v431
      %1464 = vmatprep.subr.mxu0 0.0
      %1465 = vmatpush1.msra.mxu0 %v432
      %1466 = vmatprep.subr.mxu0 0.0
      %1467 = vmatpush1.msra.mxu0 %v433
      %1468 = vmatprep.subr.mxu0 0.0
      %1469 = vmatpush1.msra.mxu0 %v434
      %1470 = vmatprep.subr.mxu0 0.0
      %1471 = vmatpush1.msra.mxu0 %v435
      %1472 = vmatprep.subr.mxu0 0.0
      %1473 = vmatpush1.msra.mxu0 %v436
      %1474 = vmatprep.subr.mxu0 0.0
      %1475 = vmatpush1.msra.mxu0 %v437
      %1476 = vmatprep.mubr.f32.mxu0 %v387
      %1477 = vmatmul.mubr.f32.gmra.mrb[0].mxu0 %v385
      %v1478 = vpop.f32.mrb[0].mxu0
      %v1479 = vadd.f32 %v1396, %v1478
      %v1480 = vpop.f32.mrb[0].mxu0
      %1481 = vmatprep.mubr.f32.mxu0 %v388
      %1482 = vmatmul.mubr.f32.gmra.mrb[0].mxu0 %v386
      %v1483 = vpop.f32.mrb[0].mxu0
      %v1484 = vadd.f32 %v1397, %v1483
      %v1485 = vpop.f32.mrb[0].mxu0
      %1486 = vmatprep.mubr.f32.mxu0 %v389
      %1487 = vmatmul.mubr.f32.gmra.mrb[0].mxu0 %v387
      %v1488 = vpop.f32.mrb[0].mxu0
      %v1489 = vadd.f32 %v1398, %v1488
      %v1490 = vpop.f32.mrb[0].mxu0
      %1491 = vmatprep.mubr.f32.mxu0 %v390
      %1492 = vmatmul.mubr.f32.gmra.mrb[0].mxu0 %v388
      %v1493 = vpop.f32.mrb[0].mxu0
      %v1494 = vadd.f32 %v1399, %v1493
      %v1495 = vpop.f32.mrb[0].mxu0
      %1496 = vmatprep.mubr.f32.mxu0 %v391
      %1497 = vmatmul.mubr.f32.gmra.mrb[0].mxu0 %v389
      %v1498 = vpop.f32.mrb[0].mxu0
      %v1499 = vadd.f32 %v1400, %v1498
      %v1500 = vpop.f32.mrb[0].mxu0
      %1501 = vmatprep.mubr.f32.mxu0 %v392
      %1502 = vmatmul.mubr.f32.gmra.mrb[0].mxu0 %v390
      %v1503 = vpop.f32.mrb[0].mxu0
      %v1504 = vadd.f32 %v1401, %v1503
      %v1505 = vpop.f32.mrb[0].mxu0
      %1506 = vmatprep.mubr.f32.mxu0 %v393
      %1507 = vmatmul.mubr.f32.gmra.mrb[0].mxu0 %v391
      %v1508 = vpop.f32.mrb[0].mxu0
      %v1509 = vadd.f32 %v1402, %v1508
      %v1510 = vpop.f32.mrb[0].mxu0
      %1511 = vmatprep.mubr.f32.mxu0 %v394
      %1512 = vmatmul.mubr.f32.gmra.mrb[0].mxu0 %v392
      %v1513 = vpop.f32.mrb[0].mxu0
      %v1514 = vadd.f32 %v1403, %v1513
      %v1515 = vpop.f32.mrb[0].mxu0
      %1516 = vmatprep.mubr.f32.mxu0 %v395
      %1517 = vmatmul.mubr.f32.gmra.mrb[0].mxu0 %v393
      %v1518 = vpop.f32.mrb[0].mxu0
      %v1519 = vadd.f32 %v1404, %v1518
      %v1520 = vpop.f32.mrb[0].mxu0
      %1521 = vmatprep.mubr.f32.mxu0 %v396
      %1522 = vmatmul.mubr.f32.gmra.mrb[0].mxu0 %v394
      %v1523 = vpop.f32.mrb[0].mxu0
      %v1524 = vadd.f32 %v1405, %v1523
      %v1525 = vpop.f32.mrb[0].mxu0
      %1526 = vmatprep.mubr.f32.mxu0 %v397
      %1527 = vmatmul.mubr.f32.gmra.mrb[0].mxu0 %v395
      %v1528 = vpop.f32.mrb[0].mxu0
      %v1529 = vadd.f32 %v1406, %v1528
      %v1530 = vpop.f32.mrb[0].mxu0
      %1531 = vmatprep.mubr.f32.mxu0 %v398
      %1532 = vmatmul.mubr.f32.gmra.mrb[0].mxu0 %v396
      %v1533 = vpop.f32.mrb[0].mxu0
      %v1534 = vadd.f32 %v1407, %v1533
      %v1535 = vpop.f32.mrb[0].mxu0
      %1536 = vmatprep.mubr.f32.mxu0 %v399
      %1537 = vmatmul.mubr.f32.gmra.mrb[0].mxu0 %v397
      %v1538 = vpop.f32.mrb[0].mxu0
      %v1539 = vadd.f32 %v1408, %v1538
      %v1540 = vpop.f32.mrb[0].mxu0
      %1541 = vmatprep.mubr.f32.mxu0 %v400
      %1542 = vmatmul.mubr.f32.gmra.mrb[0].mxu0 %v398
      %v1543 = vpop.f32.mrb[0].mxu0
      %v1544 = vadd.f32 %v1409, %v1543
      %v1545 = vpop.f32.mrb[0].mxu0
      %1546 = vmatprep.mubr.f32.mxu0 %v401
      %1547 = vmatmul.mubr.f32.gmra.mrb[0].mxu0 %v399
      %v1548 = vpop.f32.mrb[0].mxu0
      %v1549 = vadd.f32 %v1410, %v1548
      %v1550 = vpop.f32.mrb[0].mxu0
      %1551 = vmatprep.mubr.f32.mxu0 %v402
      %1552 = vmatmul.mubr.f32.gmra.mrb[0].mxu0 %v400
      %v1553 = vpop.f32.mrb[0].mxu0
      %v1554 = vadd.f32 %v1411, %v1553
      %v1555 = vpop.f32.mrb[0].mxu0
      %1556 = vdwg.mxu0
      %1557 = vmatprep.subr.mxu0 0.0
      %1558 = vmatpush1.msra.mxu0 %v438
      %1559 = vmatprep.subr.mxu0 0.0
      %1560 = vmatpush1.msra.mxu0 %v439
      %1561 = vmatprep.subr.mxu0 0.0
      %1562 = vmatpush1.msra.mxu0 %v440
      %1563 = vmatprep.subr.mxu0 0.0
      %1564 = vmatpush1.msra.mxu0 %v441
      %1565 = vmatprep.subr.mxu0 0.0
      %1566 = vmatpush1.msra.mxu0 %v442
      %1567 = vmatprep.subr.mxu0 0.0
      %1568 = vmatpush1.msra.mxu0 %v443
      %1569 = vmatprep.subr.mxu0 0.0
      %1570 = vmatpush1.msra.mxu0 %v444
      %1571 = vmatprep.subr.mxu0 0.0
      %1572 = vmatpush1.msra.mxu0 %v445
      %1573 = vmatprep.subr.mxu0 0.0
      %1574 = vmatpush1.msra.mxu0 %v446
      %1575 = vmatprep.subr.mxu0 0.0
      %1576 = vmatpush1.msra.mxu0 %v447
      %1577 = vmatprep.subr.mxu0 0.0
      %1578 = vmatpush1.msra.mxu0 %v448
      %1579 = vmatprep.subr.mxu0 0.0
      %1580 = vmatpush1.msra.mxu0 %v449
      %1581 = vmatprep.subr.mxu0 0.0
      %1582 = vmatpush1.msra.mxu0 %v450
      %1583 = vmatprep.subr.mxu0 0.0
      %1584 = vmatpush1.msra.mxu0 %v451
      %1585 = vmatprep.subr.mxu0 0.0
      %1586 = vmatpush1.msra.mxu0 %v452
      %1587 = vmatprep.subr.mxu0 0.0
      %1588 = vmatpush1.msra.mxu0 %v453
      %1589 = vmatprep.subr.mxu0 0.0
      %1590 = vmatpush1.msra.mxu0 0.0
      %1591 = vmatprep.subr.mxu0 0.0
      %1592 = vmatpush1.msra.mxu0 0.0
      %1593 = vmatprep.subr.mxu0 0.0
      %1594 = vmatpush1.msra.mxu0 0.0
      %1595 = vmatprep.subr.mxu0 0.0
      %1596 = vmatpush1.msra.mxu0 0.0
      %1597 = vmatprep.subr.mxu0 0.0
      %1598 = vmatpush1.msra.mxu0 0.0
      %1599 = vmatprep.subr.mxu0 0.0
      %1600 = vmatpush1.msra.mxu0 0.0
      %1601 = vmatprep.subr.mxu0 0.0
      %1602 = vmatpush1.msra.mxu0 0.0
      %1603 = vmatprep.subr.mxu0 0.0
      %1604 = vmatpush1.msra.mxu0 0.0
      %1605 = vmatprep.subr.mxu0 0.0
      %1606 = vmatpush1.msra.mxu0 0.0
      %1607 = vmatprep.subr.mxu0 0.0
      %1608 = vmatpush1.msra.mxu0 0.0
      %1609 = vmatprep.subr.mxu0 0.0
      %1610 = vmatpush1.msra.mxu0 0.0
      %1611 = vmatprep.subr.mxu0 0.0
      %1612 = vmatpush1.msra.mxu0 0.0
      %1613 = vmatprep.subr.mxu0 0.0
      %1614 = vmatpush1.msra.mxu0 0.0
      %1615 = vmatprep.subr.mxu0 0.0
      %1616 = vmatpush1.msra.mxu0 0.0
      %1617 = vmatprep.subr.mxu0 0.0
      %1618 = vmatpush1.msra.mxu0 0.0
      %1619 = vmatprep.subr.mxu0 0.0
      %1620 = vmatpush1.msra.mxu0 0.0
      %1621 = vmatprep.mubr.f32.mxu0 0.0
      %1622 = vmatmul.mubr.f32.gmra.mrb[0].mxu0 %v389
      %v1623 = vpop.f32.mrb[0].mxu0
      %v1624 = vadd.f32 %v1479, %v1623
      %v1625 = vpop.f32.mrb[0].mxu0
      %1626 = vmatprep.mubr.f32.mxu0 0.0
      %1627 = vmatmul.mubr.f32.gmra.mrb[0].mxu0 %v390
      %v1628 = vpop.f32.mrb[0].mxu0
      %v1629 = vadd.f32 %v1484, %v1628
      %v1630 = vpop.f32.mrb[0].mxu0
      %1631 = vmatprep.mubr.f32.mxu0 0.0
      %1632 = vmatmul.mubr.f32.gmra.mrb[0].mxu0 %v391
      %v1633 = vpop.f32.mrb[0].mxu0
      %v1634 = vadd.f32 %v1489, %v1633
      %v1635 = vpop.f32.mrb[0].mxu0
      %1636 = vmatprep.mubr.f32.mxu0 0.0
      %1637 = vmatmul.mubr.f32.gmra.mrb[0].mxu0 %v392
      %v1638 = vpop.f32.mrb[0].mxu0
      %v1639 = vadd.f32 %v1494, %v1638
      %v1640 = vpop.f32.mrb[0].mxu0
      %1641 = vmatprep.mubr.f32.mxu0 0.0
      %1642 = vmatmul.mubr.f32.gmra.mrb[0].mxu0 %v393
      %v1643 = vpop.f32.mrb[0].mxu0
      %v1644 = vadd.f32 %v1499, %v1643
      %v1645 = vpop.f32.mrb[0].mxu0
      %1646 = vmatprep.mubr.f32.mxu0 0.0
      %1647 = vmatmul.mubr.f32.gmra.mrb[0].mxu0 %v394
      %v1648 = vpop.f32.mrb[0].mxu0
      %v1649 = vadd.f32 %v1504, %v1648
      %v1650 = vpop.f32.mrb[0].mxu0
      %1651 = vmatprep.mubr.f32.mxu0 0.0
      %1652 = vmatmul.mubr.f32.gmra.mrb[0].mxu0 %v395
      %v1653 = vpop.f32.mrb[0].mxu0
      %v1654 = vadd.f32 %v1509, %v1653
      %v1655 = vpop.f32.mrb[0].mxu0
      %1656 = vmatprep.mubr.f32.mxu0 0.0
      %1657 = vmatmul.mubr.f32.gmra.mrb[0].mxu0 %v396
      %v1658 = vpop.f32.mrb[0].mxu0
      %v1659 = vadd.f32 %v1514, %v1658
      %v1660 = vpop.f32.mrb[0].mxu0
      %1661 = vmatprep.mubr.f32.mxu0 0.0
      %1662 = vmatmul.mubr.f32.gmra.mrb[0].mxu0 %v397
      %v1663 = vpop.f32.mrb[0].mxu0
      %v1664 = vadd.f32 %v1519, %v1663
      %v1665 = vpop.f32.mrb[0].mxu0
      %1666 = vmatprep.mubr.f32.mxu0 0.0
      %1667 = vmatmul.mubr.f32.gmra.mrb[0].mxu0 %v398
      %v1668 = vpop.f32.mrb[0].mxu0
      %v1669 = vadd.f32 %v1524, %v1668
      %v1670 = vpop.f32.mrb[0].mxu0
      %1671 = vmatprep.mubr.f32.mxu0 0.0
      %1672 = vmatmul.mubr.f32.gmra.mrb[0].mxu0 %v399
      %v1673 = vpop.f32.mrb[0].mxu0
      %v1674 = vadd.f32 %v1529, %v1673
      %v1675 = vpop.f32.mrb[0].mxu0
      %1676 = vmatprep.mubr.f32.mxu0 0.0
      %1677 = vmatmul.mubr.f32.gmra.mrb[0].mxu0 %v400
      %v1678 = vpop.f32.mrb[0].mxu0
      %v1679 = vadd.f32 %v1534, %v1678
      %v1680 = vpop.f32.mrb[0].mxu0
      %1681 = vmatprep.mubr.f32.mxu0 0.0
      %1682 = vmatmul.mubr.f32.gmra.mrb[0].mxu0 %v401
      %v1683 = vpop.f32.mrb[0].mxu0
      %v1684 = vadd.f32 %v1539, %v1683
      %v1685 = vpop.f32.mrb[0].mxu0
      %1686 = vmatprep.mubr.f32.mxu0 0.0
      %1687 = vmatmul.mubr.f32.gmra.mrb[0].mxu0 %v402
      %v1688 = vpop.f32.mrb[0].mxu0
      %v1689 = vadd.f32 %v1544, %v1688
      %v1690 = vpop.f32.mrb[0].mxu0
      %1691 = vmatprep.mubr.f32.mxu0 0.0
      %1692 = vmatmul.mubr.f32.gmra.mrb[0].mxu0 %v403
      %v1693 = vpop.f32.mrb[0].mxu0
      %v1694 = vadd.f32 %v1549, %v1693
      %v1695 = vpop.f32.mrb[0].mxu0
      %1696 = vmatprep.mubr.f32.mxu0 0.0
      %1697 = vmatmul.mubr.f32.gmra.mrb[0].mxu0 %v404
      %v1698 = vpop.f32.mrb[0].mxu0
      %v1699 = vadd.f32 %v1554, %v1698
      %v1700 = vpop.f32.mrb[0].mxu0
      %1701 = vdwg.mxu0
      %vm1702 = vcmp.le.s32.totalorder %v1364, 14
      %vm1703 = vcmp.le.s32.totalorder %v1365, 14
      %vm1704 = vcmp.le.s32.totalorder %v1366, 14
      %vm1705 = vcmp.le.s32.totalorder %v1367, 14
      %vm1706 = vcmp.le.s32.totalorder %v1368, 14
      %vm1707 = vcmp.le.s32.totalorder %v1369, 14
      %vm1708 = vcmp.le.s32.totalorder %v1370, 14
      %vm1709 = vcmp.le.s32.totalorder %v1371, 14
      %vm1710 = vcmp.le.s32.totalorder %v1372, 14
      %vm1711 = vcmp.le.s32.totalorder %v1373, 14
      %vm1712 = vcmp.le.s32.totalorder %v1374, 14
      %vm1713 = vcmp.le.s32.totalorder %v1375, 14
      %vm1714 = vcmp.le.s32.totalorder %v1376, 14
      %vm1715 = vcmp.le.s32.totalorder %v1377, 14
      %vm1716 = vcmp.le.s32.totalorder %v1378, 14
      %vm1717 = vcmp.le.s32.totalorder %v1379, 14
      %v1718 = vsel %vm1702, %v1093, 0.0
      %v1719 = vsel %vm1703, %v1098, 0.0
      %v1720 = vsel %vm1704, %v1103, 0.0
      %v1721 = vsel %vm1705, %v1108, 0.0
      %v1722 = vsel %vm1706, %v1113, 0.0
      %v1723 = vsel %vm1707, %v1118, 0.0
      %v1724 = vsel %vm1708, %v1123, 0.0
      %v1725 = vsel %vm1709, %v1128, 0.0
      %v1726 = vsel %vm1710, %v1133, 0.0
      %v1727 = vsel %vm1711, %v1138, 0.0
      %v1728 = vsel %vm1712, %v1143, 0.0
      %v1729 = vsel %vm1713, %v1148, 0.0
      %v1730 = vsel %vm1714, %v1153, 0.0
      %v1731 = vsel %vm1715, %v1158, 0.0
      %v1732 = vsel %vm1716, %v1163, 0.0
      %v1733 = vsel %vm1717, %v1168, 0.0
      %v1734 = vadd.f32 %v1624, %v1718
      %v1735 = vadd.f32 %v1629, %v1719
      %v1736 = vadd.f32 %v1634, %v1720
      %v1737 = vadd.f32 %v1639, %v1721
      %v1738 = vadd.f32 %v1644, %v1722
      %v1739 = vadd.f32 %v1649, %v1723
      %v1740 = vadd.f32 %v1654, %v1724
      %v1741 = vadd.f32 %v1659, %v1725
      %v1742 = vadd.f32 %v1664, %v1726
      %v1743 = vadd.f32 %v1669, %v1727
      %v1744 = vadd.f32 %v1674, %v1728
      %v1745 = vadd.f32 %v1679, %v1729
      %v1746 = vadd.f32 %v1684, %v1730
      %v1747 = vadd.f32 %v1689, %v1731
      %v1748 = vadd.f32 %v1694, %v1732
      %v1749 = vadd.f32 %v1699, %v1733
      %1750 = vst [vmem:[%s232] sm:$0xff] %v1734
      %1751 = vst [vmem:[%s232 + $0x8] sm:$0xff] %v1735
      %1752 = vst [vmem:[%s232 + $0x10] sm:$0xff] %v1736
      %1753 = vst [vmem:[%s232 + $0x18] sm:$0xff] %v1737
      %1754 = vst [vmem:[%s232 + $0x20] sm:$0xff] %v1738
      %1755 = vst [vmem:[%s232 + $0x28] sm:$0xff] %v1739
      %1756 = vst [vmem:[%s232 + $0x30] sm:$0xff] %v1740
      %1757 = vst [vmem:[%s232 + $0x38] sm:$0xff] %v1741
      %1758 = vst [vmem:[%s232 + $0x40] sm:$0xff] %v1742
      %1759 = vst [vmem:[%s232 + $0x48] sm:$0xff] %v1743
      %1760 = vst [vmem:[%s232 + $0x50] sm:$0xff] %v1744
      %1761 = vst [vmem:[%s232 + $0x58] sm:$0xff] %v1745
      %1762 = vst [vmem:[%s232 + $0x60] sm:$0xff] %v1746
      %1763 = vst [vmem:[%s232 + $0x68] sm:$0xff] %v1747
      %1764 = vst [vmem:[%s232 + $0x70] sm:$0xff] %v1748
      %1765 = vst [vmem:[%s232 + $0x78] sm:$0xff] %v1749
      %v1766 = vadd.f32 %v1734, %v1735
      %v1767 = vadd.f32 %v1766, %v1736
      %v1768 = vadd.f32 %v1767, %v1737
      %v1769 = vadd.f32 %v1768, %v1738
      %v1770 = vadd.f32 %v1769, %v1739
      %v1771 = vadd.f32 %v1770, %v1740
      %v1772 = vadd.f32 %v1771, %v1741
      %v1773 = vadd.f32 %v1772, %v1742
      %v1774 = vadd.f32 %v1773, %v1743
      %v1775 = vadd.f32 %v1774, %v1744
      %v1776 = vadd.f32 %v1775, %v1745
      %v1777 = vadd.f32 %v1776, %v1746
      %v1778 = vadd.f32 %v1777, %v1747
      %v1779 = vadd.f32 %v1778, %v1748
      %v1780 = vadd.f32 %v1779, %v1749
      %v1781 = vrot.slane %v1780, 4
      %v1782 = vadd.f32 %v1780, %v1781
      %v1783 = vrot.slane %v1782, 2
      %v1784 = vadd.f32 %v1782, %v1783
      %v1785 = vrot.slane %v1784, 1
      %v1786 = vadd.f32 %v1784, %v1785
      %v1787 = vmul.f32 %v1734, %v1734
      %v1788 = vmul.f32 %v1735, %v1735
      %v1789 = vmul.f32 %v1736, %v1736
      %v1790 = vmul.f32 %v1737, %v1737
      %v1791 = vmul.f32 %v1738, %v1738
      %v1792 = vmul.f32 %v1739, %v1739
      %v1793 = vmul.f32 %v1740, %v1740
      %v1794 = vmul.f32 %v1741, %v1741
      %v1795 = vmul.f32 %v1742, %v1742
      %v1796 = vmul.f32 %v1743, %v1743
      %v1797 = vmul.f32 %v1744, %v1744
      %v1798 = vmul.f32 %v1745, %v1745
      %v1799 = vmul.f32 %v1746, %v1746
      %v1800 = vmul.f32 %v1747, %v1747
      %v1801 = vmul.f32 %v1748, %v1748
      %v1802 = vmul.f32 %v1749, %v1749
      %v1803 = vadd.f32 %v1787, %v1788
      %v1804 = vadd.f32 %v1803, %v1789
      %v1805 = vadd.f32 %v1804, %v1790
      %v1806 = vadd.f32 %v1805, %v1791
      %v1807 = vadd.f32 %v1806, %v1792
      %v1808 = vadd.f32 %v1807, %v1793
      %v1809 = vadd.f32 %v1808, %v1794
      %v1810 = vadd.f32 %v1809, %v1795
      %v1811 = vadd.f32 %v1810, %v1796
      %v1812 = vadd.f32 %v1811, %v1797
      %v1813 = vadd.f32 %v1812, %v1798
      %v1814 = vadd.f32 %v1813, %v1799
      %v1815 = vadd.f32 %v1814, %v1800
      %v1816 = vadd.f32 %v1815, %v1801
      %v1817 = vadd.f32 %v1816, %v1802
      %v1818 = vrot.slane %v1817, 4
      %v1819 = vadd.f32 %v1817, %v1818
      %v1820 = vrot.slane %v1819, 2
      %v1821 = vadd.f32 %v1819, %v1820
      %v1822 = vrot.slane %v1821, 1
      %v1823 = vadd.f32 %v1821, %v1822
      %vm1824 = vcmask 1040384
      %v1825 = vsel %vm1824, %v1786, %v1823
      %1826 = vst [vmem:[%s241] sm:$0x3] %v1825
      %s1827 = smul.u32 16, %s21
      %p1828 = scmp.lt.s32.totalorder %s20, 1
      %s1829 = scalar_select %p1828, %s20, 1
      %p1830 = scmp.lt.s32.totalorder %s1827, 31
      %s1831 = scalar_select %p1830, %s1827, 31
      %s1832 = smul.addr %s1829, 32
      %s1833 = sadd.s32 %s1831, %s1832
      %s1834 = smul.addr %s1833, 8
      %s1835 = scalar_lea.vmem %s3, %s1834
      %p1836 = scmp.lt.s32.totalorder %s20, 1
      %s1837 = scalar_select %p1836, %s20, 1
      %p1838 = scmp.lt.s32.totalorder %s21, 1
      %s1839 = scalar_select %p1838, %s21, 1
      %s1840 = smul.addr %s1837, 2
      %s1841 = sadd.s32 %s1839, %s1840
      %s1842 = smul.addr %s1841, 2
      %s1843 = scalar_lea.vmem %s4, %s1842
      // Predicated region
      $region49: #{bottleneck_forward.5} parent=31 // pred_check
        %p1844 = pneg %p116
      $region50: #{bottleneck_forward.5} parent=31 // pred_check_branch
        %1846 = sbr.rel (%p1844) target = $region52
      $region51: #{bottleneck_forward.5} parent=31 // pred_region
        %s1847 = smul.u32 16, %s21
      $region52: #{bottleneck_forward.5} parent=31 // pred_fallthru
        _
      // Predicated region
      $region53: #{bottleneck_forward.5} parent=31 // pred_check
        %p1848 = pneg %p144
      $region54: #{bottleneck_forward.5} parent=31 // pred_check_branch
        %1850 = sbr.rel (%p1848) target = $region56
      $region55: #{bottleneck_forward.5} parent=31 // pred_region
        _
      $region56: #{bottleneck_forward.5} parent=31 // pred_fallthru
        _
    $region32: #{bottleneck_forward.5} parent=5 // pred_fallthru
      _
    %p1851 = scmp.le.s32.totalorder 2, %s11
    // Predicated region
    $region57: #{bottleneck_forward.5} parent=5 // pred_check
      %p1852 = pneg %p1851
    $region58: #{bottleneck_forward.5} parent=5 // pred_check_branch
      %1854 = sbr.rel (%p1852) target = $region60
    $region59: #{bottleneck_forward.5} parent=5 // pred_region
      %s1855 = ssub.s32 %s11, 2
      // Predicated region
      $region61: #{bottleneck_forward.5} parent=59 // pred_check
        %p1856 = pneg %p122
      $region62: #{bottleneck_forward.5} parent=59 // pred_check_branch
        %1858 = sbr.rel (%p1856) target = $region64
      $region63: #{bottleneck_forward.5} parent=59 // pred_region
        %s1859 = smul.u32 16, %s23
        %p1860 = scmp.lt.s32.totalorder %s22, 1
        %s1861 = scalar_select %p1860, %s22, 1
        %p1862 = scmp.lt.s32.totalorder %s1859, 31
        %s1863 = scalar_select %p1862, %s1859, 31
        %s1864 = smul.addr %s1861, 32
        %s1865 = sadd.s32 %s1863, %s1864
        %s1866 = smul.addr %s1865, 8
        %s1867 = scalar_lea.vmem %s3, %s1866
      $region64: #{bottleneck_forward.5} parent=59 // pred_fallthru
        _
      // Predicated region
      $region65: #{bottleneck_forward.5} parent=59 // pred_check
        %p1868 = pneg %p150
      $region66: #{bottleneck_forward.5} parent=59 // pred_check_branch
        %1870 = sbr.rel (%p1868) target = $region68
      $region67: #{bottleneck_forward.5} parent=59 // pred_region
        %p1871 = scmp.lt.s32.totalorder %s22, 1
        %s1872 = scalar_select %p1871, %s22, 1
        %p1873 = scmp.lt.s32.totalorder %s23, 1
        %s1874 = scalar_select %p1873, %s23, 1
        %s1875 = smul.addr %s1872, 2
        %s1876 = sadd.s32 %s1874, %s1875
        %s1877 = smul.addr %s1876, 2
        %s1878 = scalar_lea.vmem %s4, %s1877
      $region68: #{bottleneck_forward.5} parent=59 // pred_fallthru
        _
    $region60: #{bottleneck_forward.5} parent=5 // pred_fallthru
      _
  $region6: #{bottleneck_forward.5} parent=0 // loop_footer
    %s15 = sadd.s32 1, %s11
  $region7: #{bottleneck_forward.5} parent=0 // loop_footer_branch
    %10 = sbr.rel target = $region3
  $region8: #{bottleneck_forward.5} parent=0 // loop_exit
    _

</llo_original>
